<compile_context>
chip_gen: v7x
topology: tpu7x:2x2x1
jax: 0.10.0
libtpu: 0.0.40
codegen_flags: <defaults>
</compile_context>

<pallas_src>
import jax
import jax.numpy as jnp
from jax import lax
from jax.experimental import pallas as pl
from jax.experimental.pallas import tpu as pltpu

# ----------------------------- small config ---------------------------------
N_PAWNS = 5                       # -> n_pieces = 10, input length d_s = 11
N_PIECES = 2 * N_PAWNS
D_S = 2 * N_PAWNS + 1
D_EMB = 32                        # d_emb (small, stands in for 256)
N_HEADS = 4                       # n_attn_head (d_emb % n_heads == 0)
HEAD_DIM = D_EMB // N_HEADS
D_FF = 4 * D_EMB                  # dim_feedforward = 4 * d_emb (= 128 lanes)
N_LAYERS = 2                      # n_attn_layers (small, stands in for 4)
LN_EPS = 1e-5

PIECE_VOCAB = 2 * (N_PAWNS + 1) + 1       # 13
PIECE_VOCAB_PAD = 16                      # padded to sublane multiple (zeros)
MOVE_VOCAB = 3
MOVE_VOCAB_PAD = 8                        # padded to sublane multiple (zeros)

# ------------------- row layout of the packed "vecs" slab --------------------
# vecs has shape (N_ROWS, D_FF); every D_EMB-wide entry lives in lanes [0:D_EMB].
ROW_PIECE = 0                                     # 16 rows: piece_emb table
ROW_MOVE = ROW_PIECE + PIECE_VOCAB_PAD            # 8 rows:  movement_emb table
ROW_PLAYER = ROW_MOVE + MOVE_VOCAB_PAD            # 2 rows:  player_emb table
ROW_POS = ROW_PLAYER + 2                          # 10 rows: position_emb table
ROW_LN_G = ROW_POS + N_PIECES                     # input LayerNorm gamma
ROW_LN_B = ROW_LN_G + 1                           # input LayerNorm beta
ROW_LAYER = ROW_LN_B + 1                          # per-layer rows start here
ROWS_PER_LAYER = 10                               # bq,bk,bv,bo,g1,be1,b1(ff),b2,g2,be2
ROW_HEAD = ROW_LAYER + ROWS_PER_LAYER * N_LAYERS  # bp1,gp,bep,wp2,wva,bv1,gv,bev,wvo
ROW_SCAL = ROW_HEAD + 9                           # scalars: [bp2, bva, bvo, 0, ...]
N_ROWS = ROW_SCAL + 1                             # = 68


# ------------------------------ helpers -------------------------------------
def _layer_norm(x, g, b, eps=LN_EPS):
    mu = jnp.mean(x, axis=-1, keepdims=True)
    var = jnp.mean((x - mu) ** 2, axis=-1, keepdims=True)
    return (x - mu) * lax.rsqrt(var + eps) * g + b


# --------------------------- fused Pallas kernel ------------------------------
def fused_forward_kernel(ints_ref, vecs_ref, wqkv_ref, wo_ref, w1_ref, w2_ref,
                         wpv_ref, out_ref):
    f32 = jnp.float32
    bf16 = jnp.bfloat16
    D = D_EMB

    def vrow(r, n=1, w=D):
        return vecs_ref[r:r + n, 0:w]

    # ---- integer inputs (packed into one small int32 array) -----------------
    ints = ints_ref[...]                              # (N_PIECES, 4) int32
    adv = ints[:, 0:1]                                # (S, 1) advancement
    mov = ints[:, 1:2]                                # (S, 1) move ids
    pid = ints[0:1, 2:3]                              # (1, 1) player id

    # ---- embedding gathers as one-hot matmuls (tables live in the vecs slab)
    piece_oh = (lax.broadcasted_iota(jnp.int32, (N_PIECES, PIECE_VOCAB_PAD), 1)
                == adv).astype(f32)
    move_oh = (lax.broadcasted_iota(jnp.int32, (N_PIECES, MOVE_VOCAB_PAD), 1)
               == mov).astype(f32)
    piece_e = jnp.dot(piece_oh, vrow(ROW_PIECE, PIECE_VOCAB_PAD),
                      preferred_element_type=f32)
    move_e = jnp.dot(move_oh, vrow(ROW_MOVE, MOVE_VOCAB_PAD),
                     preferred_element_type=f32)
    player_tab = vrow(ROW_PLAYER, 2)                  # (2, D)
    player_e = jnp.where(pid == 1, player_tab[1:2, :], player_tab[0:1, :])
    feats = piece_e + move_e + player_e + vrow(ROW_POS, N_PIECES)      # (S, D)
    x = _layer_norm(feats, vrow(ROW_LN_G), vrow(ROW_LN_B))

    # ---- transformer encoder layers (post-norm, ReLU FFN, eval mode) --------
    scale = 1.0 / (HEAD_DIM ** 0.5)
    for l in range(N_LAYERS):                         # static unroll (small L)
        base = ROW_LAYER + l * ROWS_PER_LAYER
        xb = x.astype(bf16)
        # fused QKV projection: one (S,D)@(D,3D) matmul
        qkv = jnp.dot(xb, wqkv_ref[l], preferred_element_type=f32)     # (S, 3D)
        q = qkv[:, 0:D] + vrow(base + 0)
        k = qkv[:, D:2 * D] + vrow(base + 1)
        v = qkv[:, 2 * D:3 * D] + vrow(base + 2)

        attn = jnp.zeros((N_PIECES, D), f32)
        for h in range(N_HEADS):                      # static unroll over heads
            sl = slice(h * HEAD_DIM, (h + 1) * HEAD_DIM)   # 8-lane head slice
            qh, kh, vh = q[:, sl], k[:, sl], v[:, sl]
            s = lax.dot_general(qh, kh, (((1,), (1,)), ((), ())),
                                preferred_element_type=f32) * scale
            s = s - jnp.max(s, axis=-1, keepdims=True)
            e = jnp.exp(s)
            p_h = e * pl.reciprocal(jnp.sum(e, axis=-1, keepdims=True),
                                    approx=True)
            oh = jnp.dot(p_h, vh, preferred_element_type=f32)          # (S, HD)
            # concat(heads) @ Wo  ==  sum_h head_h @ Wo[h]
            attn = attn + jnp.dot(oh.astype(bf16), wo_ref[l, h],
                                  preferred_element_type=f32)
        attn = attn + vrow(base + 3)

        x = _layer_norm(x + attn, vrow(base + 4), vrow(base + 5))

        h1 = jnp.dot(x.astype(bf16), w1_ref[l],
                     preferred_element_type=f32) + vrow(base + 6, 1, D_FF)
        h1 = jnp.maximum(h1, 0.0)
        ff = jnp.dot(h1.astype(bf16), w2_ref[l],
                     preferred_element_type=f32) + vrow(base + 7)

        x = _layer_norm(x + ff, vrow(base + 8), vrow(base + 9))

    # ---- policy head: Linear -> LN -> ReLU -> row-dot -> exact softmax ------
    hp = jnp.dot(x.astype(bf16), wpv_ref[0],
                 preferred_element_type=f32) + vrow(ROW_HEAD + 0)
    hp = _layer_norm(hp, vrow(ROW_HEAD + 1), vrow(ROW_HEAD + 2))
    hp = jnp.maximum(hp, 0.0)
    bp2 = vecs_ref[ROW_SCAL:ROW_SCAL + 1, 0:1]
    logits = jnp.sum(hp * vrow(ROW_HEAD + 3), axis=-1, keepdims=True) + bp2  # (S,1)
    # player_id == 1 -> pieces [0, n_pawns); else pieces [n_pawns, 2*n_pawns)
    logits5 = jnp.where(pid == 1, logits[:N_PAWNS, :], logits[N_PAWNS:, :])  # (5,1)
    m = jnp.max(logits5, axis=0, keepdims=True)
    e = jnp.exp(logits5 - m)
    p5 = e / jnp.sum(e, axis=0, keepdims=True)        # exact divide (sums to 1)

    # ---- value head: attention pooling -> Linear -> LN -> ReLU -> dot -> Tanh
    bva = vecs_ref[ROW_SCAL:ROW_SCAL + 1, 1:2]
    s = jnp.sum(x * vrow(ROW_HEAD + 4), axis=-1, keepdims=True) + bva        # (S,1)
    sm = jnp.max(s, axis=0, keepdims=True)
    se = jnp.exp(s - sm)
    w = se * pl.reciprocal(jnp.sum(se, axis=0, keepdims=True), approx=True)
    ws = jnp.sum(x * w, axis=0, keepdims=True)                               # (1,D)
    hv = jnp.dot(ws.astype(bf16), wpv_ref[1],
                 preferred_element_type=f32) + vrow(ROW_HEAD + 5)
    hv = _layer_norm(hv, vrow(ROW_HEAD + 6), vrow(ROW_HEAD + 7))
    hv = jnp.maximum(hv, 0.0)
    bvo = vecs_ref[ROW_SCAL:ROW_SCAL + 1, 2:3]
    value = jnp.tanh(jnp.sum(hv * vrow(ROW_HEAD + 8), axis=-1, keepdims=True)
                     + bvo)                                                  # (1,1)

    # ---- single lane-padded output tile (one writeback DMA) -----------------
    out_ref[...] = jnp.zeros((8, 128), f32)
    out_ref[0:N_PAWNS, 0:1] = p5
    out_ref[N_PAWNS:N_PAWNS + 1, 0:1] = value


# ------------------------------ parameters -----------------------------------
def init_params(key):
    """Returns [vecs, wqkv, wo, w1, w2, wpv] in the kernel's argument order."""
    def nrm(k, shape, scale=0.05):
        return (scale * jax.random.normal(k, shape)).astype(jnp.float32)

    ks = iter(jax.random.split(key, 16))

    vecs = jnp.zeros((N_ROWS, D_FF), jnp.float32)
    # embedding tables (lanes 0:D_EMB)
    vecs = vecs.at[ROW_PIECE:ROW_PIECE + PIECE_VOCAB, :D_EMB].set(
        nrm(next(ks), (PIECE_VOCAB, D_EMB)))
    vecs = vecs.at[ROW_MOVE:ROW_MOVE + MOVE_VOCAB, :D_EMB].set(
        nrm(next(ks), (MOVE_VOCAB, D_EMB)))
    vecs = vecs.at[ROW_PLAYER:ROW_PLAYER + 2, :D_EMB].set(
        nrm(next(ks), (2, D_EMB)))
    vecs = vecs.at[ROW_POS:ROW_POS + N_PIECES, :D_EMB].set(
        nrm(next(ks), (N_PIECES, D_EMB)))
    # input LayerNorm (gamma = 1, beta = 0)
    vecs = vecs.at[ROW_LN_G, :D_EMB].set(1.0)
    # per-layer LayerNorm gammas (all biases stay zero)
    for l in range(N_LAYERS):
        base = ROW_LAYER + l * ROWS_PER_LAYER
        vecs = vecs.at[base + 4, :D_EMB].set(1.0)     # norm1 gamma
        vecs = vecs.at[base + 8, :D_EMB].set(1.0)     # norm2 gamma
    # policy / value head rows
    vecs = vecs.at[ROW_HEAD + 1, :D_EMB].set(1.0)                       # policy LN gamma
    vecs = vecs.at[ROW_HEAD + 3, :D_EMB].set(nrm(next(ks), (D_EMB,)))   # wp2 row
    vecs = vecs.at[ROW_HEAD + 4, :D_EMB].set(nrm(next(ks), (D_EMB,)))   # wva row
    vecs = vecs.at[ROW_HEAD + 6, :D_EMB].set(1.0)                       # value LN gamma
    vecs = vecs.at[ROW_HEAD + 8, :D_EMB].set(nrm(next(ks), (D_EMB,)))   # wvo row
    # ROW_SCAL (bp2, bva, bvo) stays zero.

    wqkv = nrm(next(ks), (N_LAYERS, D_EMB, 3 * D_EMB)).astype(jnp.bfloat16)
    wo = nrm(next(ks), (N_LAYERS, N_HEADS, HEAD_DIM, D_EMB)).astype(jnp.bfloat16)
    w1 = nrm(next(ks), (N_LAYERS, D_EMB, D_FF)).astype(jnp.bfloat16)
    w2 = nrm(next(ks), (N_LAYERS, D_FF, D_EMB)).astype(jnp.bfloat16)
    wpv = nrm(next(ks), (2, D_EMB, D_EMB)).astype(jnp.bfloat16)     # [wp1, wv1]
    return [vecs, wqkv, wo, w1, w2, wpv]


# ------------------------------- forward -------------------------------------
def _forward_impl(x, params):
    """x: int32 vector of length d_s = 2*n_pawns + 1. Returns (p, value)."""
    advancement = x[:-1].astype(jnp.int32)            # (2*n_pawns,)
    player_id = x[-1].astype(jnp.int32)               # scalar in {0, 1}

    # TODO(synk): get_moves_from_advancement is external to the module; use the
    # deterministic proxy move_id = advancement % 3  (== (adv % 3 + 1) - 1).
    move_ids = advancement % 3

    ints = jnp.stack(
        [advancement, move_ids,
         jnp.broadcast_to(player_id, (N_PIECES,)),
         jnp.zeros((N_PIECES,), jnp.int32)], axis=1)  # (N_PIECES, 4) int32

    vmem = pl.BlockSpec(memory_space=pltpu.MemorySpace.VMEM)
    ins = [ints] + list(params)

    out = pl.pallas_call(
        fused_forward_kernel,
        in_specs=[vmem] * len(ins),
        out_specs=vmem,
        out_shape=jax.ShapeDtypeStruct((8, 128), jnp.float32),
        compiler_params=pltpu.CompilerParams(vmem_limit_bytes=32 * 1024 * 1024),
    )(*ins)

    p = out[0:N_PAWNS, 0]                             # (n_pawns,)
    value = out[N_PAWNS, 0:1]                         # (1,)
    return p, value


forward = jax.jit(_forward_impl)


# --------------------------------- main ---------------------------------------
if __name__ == "__main__":
    root = jax.random.PRNGKey(0)
    k_par, k_adv, k_ply = jax.random.split(root, 3)

    params = init_params(k_par)

    advancement = jax.random.randint(
        k_adv, (N_PIECES,), 0, PIECE_VOCAB, dtype=jnp.int32)
    player_id = jax.random.randint(k_ply, (1,), 0, 2, dtype=jnp.int32)
    x = jnp.concatenate([advancement, player_id], axis=0)        # (d_s,) = (11,)

    p, value = forward(x, params)
    p, value = jax.block_until_ready((p, value))

    assert p.shape == (N_PAWNS,) and value.shape == (1,)
    assert jnp.isfinite(p).all() and jnp.isfinite(value).all()
    assert abs(float(p.sum()) - 1.0) < 1e-4          # exact softmax division
    assert -1.0 <= float(value[0]) <= 1.0            # tanh range
    print("KERNEL_OK")
</pallas_src>

<mosaic_0001>
module attributes {stable_mosaic.version = 11 : i64} {
  func.func @fused_forward_kernel(%arg0: memref<10x4xi32, #tpu.memory_space<vmem>>, %arg1: memref<68x128xf32, #tpu.memory_space<vmem>>, %arg2: memref<2x32x96xbf16, #tpu.memory_space<vmem>>, %arg3: memref<2x4x8x32xbf16, #tpu.memory_space<vmem>>, %arg4: memref<2x32x128xbf16, #tpu.memory_space<vmem>>, %arg5: memref<2x128x32xbf16, #tpu.memory_space<vmem>>, %arg6: memref<2x32x32xbf16, #tpu.memory_space<vmem>>, %arg7: memref<8x128xf32, #tpu.memory_space<vmem>>) attributes {dimension_semantics = [], scalar_prefetch = 0 : i64, scratch_operands = 0 : i64, tpu.core_type = #tpu.core_type<tc>} {
    %c0 = arith.constant 0 : index
    %c0_0 = arith.constant 0 : index
    %0 = vector.load %arg0[%c0, %c0_0] : memref<10x4xi32, #tpu.memory_space<vmem>>, vector<10x4xi32>
    %1 = vector.extract_strided_slice %0 {offsets = [0, 0], sizes = [10, 1], strides = [1, 1]} : vector<10x4xi32> to vector<10x1xi32>
    %2 = vector.extract_strided_slice %0 {offsets = [0, 1], sizes = [10, 1], strides = [1, 1]} : vector<10x4xi32> to vector<10x1xi32>
    %3 = vector.extract_strided_slice %0 {offsets = [0, 2], sizes = [1, 1], strides = [1, 1]} : vector<10x4xi32> to vector<1x1xi32>
    %4 = tpu.iota {dimensions = array<i32: 1>} : vector<10x16xi32>
    %5 = vector.broadcast %1 : vector<10x1xi32> to vector<10x16xi32>
    %6 = arith.cmpi eq, %4, %5 : vector<10x16xi32>
    %7 = arith.extui %6 : vector<10x16xi1> to vector<10x16xi32>
    %8 = arith.sitofp %7 : vector<10x16xi32> to vector<10x16xf32>
    %9 = tpu.iota {dimensions = array<i32: 1>} : vector<10x8xi32>
    %10 = vector.broadcast %2 : vector<10x1xi32> to vector<10x8xi32>
    %11 = arith.cmpi eq, %9, %10 : vector<10x8xi32>
    %12 = arith.extui %11 : vector<10x8xi1> to vector<10x8xi32>
    %13 = arith.sitofp %12 : vector<10x8xi32> to vector<10x8xf32>
    %c0_1 = arith.constant 0 : index
    %c0_2 = arith.constant 0 : index
    %14 = vector.load %arg1[%c0_1, %c0_2] : memref<68x128xf32, #tpu.memory_space<vmem>>, vector<16x32xf32>
    %cst = arith.constant dense<0.000000e+00> : vector<10x32xf32>
    %15 = tpu.matmul %8, %14, %cst {dimension_numbers = #tpu.dot_dimension_numbers<[1], [0], [0], [1], [0, 0, 1, 1], [], []>} : vector<10x16xf32>, vector<16x32xf32>, vector<10x32xf32> -> vector<10x32xf32>
    %c16 = arith.constant 16 : index
    %c0_3 = arith.constant 0 : index
    %16 = vector.load %arg1[%c16, %c0_3] : memref<68x128xf32, #tpu.memory_space<vmem>>, vector<8x32xf32>
    %cst_4 = arith.constant dense<0.000000e+00> : vector<10x32xf32>
    %17 = tpu.matmul %13, %16, %cst_4 {dimension_numbers = #tpu.dot_dimension_numbers<[1], [0], [0], [1], [0, 0, 1, 1], [], []>} : vector<10x8xf32>, vector<8x32xf32>, vector<10x32xf32> -> vector<10x32xf32>
    %c24 = arith.constant 24 : index
    %c0_5 = arith.constant 0 : index
    %18 = vector.load %arg1[%c24, %c0_5] : memref<68x128xf32, #tpu.memory_space<vmem>>, vector<2x32xf32>
    %c1_i32 = arith.constant 1 : i32
    %19 = vector.broadcast %c1_i32 : i32 to vector<1x1xi32>
    %20 = arith.cmpi eq, %3, %19 : vector<1x1xi32>
    %21 = vector.extract_strided_slice %18 {offsets = [1, 0], sizes = [1, 32], strides = [1, 1]} : vector<2x32xf32> to vector<1x32xf32>
    %22 = vector.extract_strided_slice %18 {offsets = [0, 0], sizes = [1, 32], strides = [1, 1]} : vector<2x32xf32> to vector<1x32xf32>
    %23 = vector.shape_cast %20 : vector<1x1xi1> to vector<1x1xi1>
    %24 = vector.broadcast %23 : vector<1x1xi1> to vector<1x32xi1>
    %25 = arith.select %24, %21, %22 : vector<1x32xi1>, vector<1x32xf32>
    %26 = arith.addf %15, %17 : vector<10x32xf32>
    %27 = vector.broadcast %25 : vector<1x32xf32> to vector<10x32xf32>
    %28 = arith.addf %26, %27 : vector<10x32xf32>
    %c26 = arith.constant 26 : index
    %c0_6 = arith.constant 0 : index
    %29 = vector.load %arg1[%c26, %c0_6] : memref<68x128xf32, #tpu.memory_space<vmem>>, vector<10x32xf32>
    %30 = arith.addf %28, %29 : vector<10x32xf32>
    %c36 = arith.constant 36 : index
    %c0_7 = arith.constant 0 : index
    %31 = vector.load %arg1[%c36, %c0_7] : memref<68x128xf32, #tpu.memory_space<vmem>>, vector<1x32xf32>
    %c37 = arith.constant 37 : index
    %c0_8 = arith.constant 0 : index
    %32 = vector.load %arg1[%c37, %c0_8] : memref<68x128xf32, #tpu.memory_space<vmem>>, vector<1x32xf32>
    %cst_9 = arith.constant dense<0.000000e+00> : vector<10xf32>
    %33 = vector.multi_reduction <add>, %30, %cst_9 [1] : vector<10x32xf32> to vector<10xf32>
    %34 = vector.shape_cast %33 : vector<10xf32> to vector<10x1xf32>
    %cst_10 = arith.constant 3.200000e+01 : f32
    %35 = vector.broadcast %cst_10 : f32 to vector<10x1xf32>
    %36 = arith.divf %34, %35 : vector<10x1xf32>
    %37 = vector.broadcast %36 : vector<10x1xf32> to vector<10x32xf32>
    %38 = arith.subf %30, %37 : vector<10x32xf32>
    %39 = arith.mulf %38, %38 : vector<10x32xf32>
    %cst_11 = arith.constant dense<0.000000e+00> : vector<10xf32>
    %40 = vector.multi_reduction <add>, %39, %cst_11 [1] : vector<10x32xf32> to vector<10xf32>
    %41 = vector.shape_cast %40 : vector<10xf32> to vector<10x1xf32>
    %cst_12 = arith.constant 3.200000e+01 : f32
    %42 = vector.broadcast %cst_12 : f32 to vector<10x1xf32>
    %43 = arith.divf %41, %42 : vector<10x1xf32>
    %44 = vector.broadcast %36 : vector<10x1xf32> to vector<10x32xf32>
    %45 = arith.subf %30, %44 : vector<10x32xf32>
    %cst_13 = arith.constant 9.99999974E-6 : f32
    %46 = vector.broadcast %cst_13 : f32 to vector<10x1xf32>
    %47 = arith.addf %43, %46 : vector<10x1xf32>
    %48 = math.rsqrt %47 : vector<10x1xf32>
    %49 = vector.broadcast %48 : vector<10x1xf32> to vector<10x32xf32>
    %50 = arith.mulf %45, %49 : vector<10x32xf32>
    %51 = vector.broadcast %31 : vector<1x32xf32> to vector<10x32xf32>
    %52 = arith.mulf %50, %51 : vector<10x32xf32>
    %53 = vector.broadcast %32 : vector<1x32xf32> to vector<10x32xf32>
    %54 = arith.addf %52, %53 : vector<10x32xf32>
    %55 = arith.truncf %54 : vector<10x32xf32> to vector<10x32xbf16>
    %c0_14 = arith.constant 0 : index
    %c0_15 = arith.constant 0 : index
    %c0_16 = arith.constant 0 : index
    %56 = vector.load %arg2[%c0_14, %c0_15, %c0_16] : memref<2x32x96xbf16, #tpu.memory_space<vmem>>, vector<1x32x96xbf16>
    %57 = vector.shape_cast %56 : vector<1x32x96xbf16> to vector<32x96xbf16>
    %cst_17 = arith.constant dense<0.000000e+00> : vector<10x96xf32>
    %58 = tpu.matmul %55, %57, %cst_17 {dimension_numbers = #tpu.dot_dimension_numbers<[1], [0], [0], [1], [0, 0, 1, 1], [], []>} : vector<10x32xbf16>, vector<32x96xbf16>, vector<10x96xf32> -> vector<10x96xf32>
    %59 = vector.extract_strided_slice %58 {offsets = [0, 0], sizes = [10, 32], strides = [1, 1]} : vector<10x96xf32> to vector<10x32xf32>
    %c38 = arith.constant 38 : index
    %c0_18 = arith.constant 0 : index
    %60 = vector.load %arg1[%c38, %c0_18] : memref<68x128xf32, #tpu.memory_space<vmem>>, vector<1x32xf32>
    %61 = vector.broadcast %60 : vector<1x32xf32> to vector<10x32xf32>
    %62 = arith.addf %59, %61 : vector<10x32xf32>
    %63 = vector.extract_strided_slice %58 {offsets = [0, 32], sizes = [10, 32], strides = [1, 1]} : vector<10x96xf32> to vector<10x32xf32>
    %c39 = arith.constant 39 : index
    %c0_19 = arith.constant 0 : index
    %64 = vector.load %arg1[%c39, %c0_19] : memref<68x128xf32, #tpu.memory_space<vmem>>, vector<1x32xf32>
    %65 = vector.broadcast %64 : vector<1x32xf32> to vector<10x32xf32>
    %66 = arith.addf %63, %65 : vector<10x32xf32>
    %67 = vector.extract_strided_slice %58 {offsets = [0, 64], sizes = [10, 32], strides = [1, 1]} : vector<10x96xf32> to vector<10x32xf32>
    %c40 = arith.constant 40 : index
    %c0_20 = arith.constant 0 : index
    %68 = vector.load %arg1[%c40, %c0_20] : memref<68x128xf32, #tpu.memory_space<vmem>>, vector<1x32xf32>
    %69 = vector.broadcast %68 : vector<1x32xf32> to vector<10x32xf32>
    %70 = arith.addf %67, %69 : vector<10x32xf32>
    %cst_21 = arith.constant 0.000000e+00 : f32
    %71 = vector.broadcast %cst_21 : f32 to vector<10x32xf32>
    %72 = vector.extract_strided_slice %62 {offsets = [0, 0], sizes = [10, 8], strides = [1, 1]} : vector<10x32xf32> to vector<10x8xf32>
    %73 = vector.extract_strided_slice %66 {offsets = [0, 0], sizes = [10, 8], strides = [1, 1]} : vector<10x32xf32> to vector<10x8xf32>
    %74 = vector.extract_strided_slice %70 {offsets = [0, 0], sizes = [10, 8], strides = [1, 1]} : vector<10x32xf32> to vector<10x8xf32>
    %cst_22 = arith.constant dense<0.000000e+00> : vector<10x10xf32>
    %75 = tpu.matmul %72, %73, %cst_22 {dimension_numbers = #tpu.dot_dimension_numbers<[1], [1], [0], [0], [0, 0, 1, 0], [], []>} : vector<10x8xf32>, vector<10x8xf32>, vector<10x10xf32> -> vector<10x10xf32>
    %cst_23 = arith.constant 0.353553385 : f32
    %76 = vector.broadcast %cst_23 : f32 to vector<10x10xf32>
    %77 = arith.mulf %75, %76 : vector<10x10xf32>
    %cst_24 = arith.constant dense<0xFF800000> : vector<10xf32>
    %78 = vector.multi_reduction <maximumf>, %77, %cst_24 [1] : vector<10x10xf32> to vector<10xf32>
    %79 = vector.shape_cast %78 : vector<10xf32> to vector<10x1xf32>
    %80 = vector.broadcast %79 : vector<10x1xf32> to vector<10x10xf32>
    %81 = arith.subf %77, %80 : vector<10x10xf32>
    %82 = math.exp %81 : vector<10x10xf32>
    %cst_25 = arith.constant dense<0.000000e+00> : vector<10xf32>
    %83 = vector.multi_reduction <add>, %82, %cst_25 [1] : vector<10x10xf32> to vector<10xf32>
    %84 = vector.shape_cast %83 : vector<10xf32> to vector<10x1xf32>
    %85 = tpu.reciprocal %84 {approx = true} : vector<10x1xf32> -> vector<10x1xf32>
    %86 = vector.broadcast %85 : vector<10x1xf32> to vector<10x10xf32>
    %87 = arith.mulf %82, %86 : vector<10x10xf32>
    %cst_26 = arith.constant dense<0.000000e+00> : vector<10x8xf32>
    %88 = tpu.matmul %87, %74, %cst_26 {dimension_numbers = #tpu.dot_dimension_numbers<[1], [0], [0], [1], [0, 0, 1, 1], [], []>} : vector<10x10xf32>, vector<10x8xf32>, vector<10x8xf32> -> vector<10x8xf32>
    %89 = arith.truncf %88 : vector<10x8xf32> to vector<10x8xbf16>
    %c0_27 = arith.constant 0 : index
    %c0_28 = arith.constant 0 : index
    %c0_29 = arith.constant 0 : index
    %c0_30 = arith.constant 0 : index
    %90 = vector.load %arg3[%c0_27, %c0_28, %c0_29, %c0_30] : memref<2x4x8x32xbf16, #tpu.memory_space<vmem>>, vector<1x1x8x32xbf16>
    %91 = vector.shape_cast %90 : vector<1x1x8x32xbf16> to vector<8x32xbf16>
    %cst_31 = arith.constant dense<0.000000e+00> : vector<10x32xf32>
    %92 = tpu.matmul %89, %91, %cst_31 {dimension_numbers = #tpu.dot_dimension_numbers<[1], [0], [0], [1], [0, 0, 1, 1], [], []>} : vector<10x8xbf16>, vector<8x32xbf16>, vector<10x32xf32> -> vector<10x32xf32>
    %93 = arith.addf %71, %92 : vector<10x32xf32>
    %94 = vector.extract_strided_slice %62 {offsets = [0, 8], sizes = [10, 8], strides = [1, 1]} : vector<10x32xf32> to vector<10x8xf32>
    %95 = vector.extract_strided_slice %66 {offsets = [0, 8], sizes = [10, 8], strides = [1, 1]} : vector<10x32xf32> to vector<10x8xf32>
    %96 = vector.extract_strided_slice %70 {offsets = [0, 8], sizes = [10, 8], strides = [1, 1]} : vector<10x32xf32> to vector<10x8xf32>
    %cst_32 = arith.constant dense<0.000000e+00> : vector<10x10xf32>
    %97 = tpu.matmul %94, %95, %cst_32 {dimension_numbers = #tpu.dot_dimension_numbers<[1], [1], [0], [0], [0, 0, 1, 0], [], []>} : vector<10x8xf32>, vector<10x8xf32>, vector<10x10xf32> -> vector<10x10xf32>
    %cst_33 = arith.constant 0.353553385 : f32
    %98 = vector.broadcast %cst_33 : f32 to vector<10x10xf32>
    %99 = arith.mulf %97, %98 : vector<10x10xf32>
    %cst_34 = arith.constant dense<0xFF800000> : vector<10xf32>
    %100 = vector.multi_reduction <maximumf>, %99, %cst_34 [1] : vector<10x10xf32> to vector<10xf32>
    %101 = vector.shape_cast %100 : vector<10xf32> to vector<10x1xf32>
    %102 = vector.broadcast %101 : vector<10x1xf32> to vector<10x10xf32>
    %103 = arith.subf %99, %102 : vector<10x10xf32>
    %104 = math.exp %103 : vector<10x10xf32>
    %cst_35 = arith.constant dense<0.000000e+00> : vector<10xf32>
    %105 = vector.multi_reduction <add>, %104, %cst_35 [1] : vector<10x10xf32> to vector<10xf32>
    %106 = vector.shape_cast %105 : vector<10xf32> to vector<10x1xf32>
    %107 = tpu.reciprocal %106 {approx = true} : vector<10x1xf32> -> vector<10x1xf32>
    %108 = vector.broadcast %107 : vector<10x1xf32> to vector<10x10xf32>
    %109 = arith.mulf %104, %108 : vector<10x10xf32>
    %cst_36 = arith.constant dense<0.000000e+00> : vector<10x8xf32>
    %110 = tpu.matmul %109, %96, %cst_36 {dimension_numbers = #tpu.dot_dimension_numbers<[1], [0], [0], [1], [0, 0, 1, 1], [], []>} : vector<10x10xf32>, vector<10x8xf32>, vector<10x8xf32> -> vector<10x8xf32>
    %111 = arith.truncf %110 : vector<10x8xf32> to vector<10x8xbf16>
    %c0_37 = arith.constant 0 : index
    %c1 = arith.constant 1 : index
    %c0_38 = arith.constant 0 : index
    %c0_39 = arith.constant 0 : index
    %112 = vector.load %arg3[%c0_37, %c1, %c0_38, %c0_39] : memref<2x4x8x32xbf16, #tpu.memory_space<vmem>>, vector<1x1x8x32xbf16>
    %113 = vector.shape_cast %112 : vector<1x1x8x32xbf16> to vector<8x32xbf16>
    %cst_40 = arith.constant dense<0.000000e+00> : vector<10x32xf32>
    %114 = tpu.matmul %111, %113, %cst_40 {dimension_numbers = #tpu.dot_dimension_numbers<[1], [0], [0], [1], [0, 0, 1, 1], [], []>} : vector<10x8xbf16>, vector<8x32xbf16>, vector<10x32xf32> -> vector<10x32xf32>
    %115 = arith.addf %93, %114 : vector<10x32xf32>
    %116 = vector.extract_strided_slice %62 {offsets = [0, 16], sizes = [10, 8], strides = [1, 1]} : vector<10x32xf32> to vector<10x8xf32>
    %117 = vector.extract_strided_slice %66 {offsets = [0, 16], sizes = [10, 8], strides = [1, 1]} : vector<10x32xf32> to vector<10x8xf32>
    %118 = vector.extract_strided_slice %70 {offsets = [0, 16], sizes = [10, 8], strides = [1, 1]} : vector<10x32xf32> to vector<10x8xf32>
    %cst_41 = arith.constant dense<0.000000e+00> : vector<10x10xf32>
    %119 = tpu.matmul %116, %117, %cst_41 {dimension_numbers = #tpu.dot_dimension_numbers<[1], [1], [0], [0], [0, 0, 1, 0], [], []>} : vector<10x8xf32>, vector<10x8xf32>, vector<10x10xf32> -> vector<10x10xf32>
    %cst_42 = arith.constant 0.353553385 : f32
    %120 = vector.broadcast %cst_42 : f32 to vector<10x10xf32>
    %121 = arith.mulf %119, %120 : vector<10x10xf32>
    %cst_43 = arith.constant dense<0xFF800000> : vector<10xf32>
    %122 = vector.multi_reduction <maximumf>, %121, %cst_43 [1] : vector<10x10xf32> to vector<10xf32>
    %123 = vector.shape_cast %122 : vector<10xf32> to vector<10x1xf32>
    %124 = vector.broadcast %123 : vector<10x1xf32> to vector<10x10xf32>
    %125 = arith.subf %121, %124 : vector<10x10xf32>
    %126 = math.exp %125 : vector<10x10xf32>
    %cst_44 = arith.constant dense<0.000000e+00> : vector<10xf32>
    %127 = vector.multi_reduction <add>, %126, %cst_44 [1] : vector<10x10xf32> to vector<10xf32>
    %128 = vector.shape_cast %127 : vector<10xf32> to vector<10x1xf32>
    %129 = tpu.reciprocal %128 {approx = true} : vector<10x1xf32> -> vector<10x1xf32>
    %130 = vector.broadcast %129 : vector<10x1xf32> to vector<10x10xf32>
    %131 = arith.mulf %126, %130 : vector<10x10xf32>
    %cst_45 = arith.constant dense<0.000000e+00> : vector<10x8xf32>
    %132 = tpu.matmul %131, %118, %cst_45 {dimension_numbers = #tpu.dot_dimension_numbers<[1], [0], [0], [1], [0, 0, 1, 1], [], []>} : vector<10x10xf32>, vector<10x8xf32>, vector<10x8xf32> -> vector<10x8xf32>
    %133 = arith.truncf %132 : vector<10x8xf32> to vector<10x8xbf16>
    %c0_46 = arith.constant 0 : index
    %c2 = arith.constant 2 : index
    %c0_47 = arith.constant 0 : index
    %c0_48 = arith.constant 0 : index
    %134 = vector.load %arg3[%c0_46, %c2, %c0_47, %c0_48] : memref<2x4x8x32xbf16, #tpu.memory_space<vmem>>, vector<1x1x8x32xbf16>
    %135 = vector.shape_cast %134 : vector<1x1x8x32xbf16> to vector<8x32xbf16>
    %cst_49 = arith.constant dense<0.000000e+00> : vector<10x32xf32>
    %136 = tpu.matmul %133, %135, %cst_49 {dimension_numbers = #tpu.dot_dimension_numbers<[1], [0], [0], [1], [0, 0, 1, 1], [], []>} : vector<10x8xbf16>, vector<8x32xbf16>, vector<10x32xf32> -> vector<10x32xf32>
    %137 = arith.addf %115, %136 : vector<10x32xf32>
    %138 = vector.extract_strided_slice %62 {offsets = [0, 24], sizes = [10, 8], strides = [1, 1]} : vector<10x32xf32> to vector<10x8xf32>
    %139 = vector.extract_strided_slice %66 {offsets = [0, 24], sizes = [10, 8], strides = [1, 1]} : vector<10x32xf32> to vector<10x8xf32>
    %140 = vector.extract_strided_slice %70 {offsets = [0, 24], sizes = [10, 8], strides = [1, 1]} : vector<10x32xf32> to vector<10x8xf32>
    %cst_50 = arith.constant dense<0.000000e+00> : vector<10x10xf32>
    %141 = tpu.matmul %138, %139, %cst_50 {dimension_numbers = #tpu.dot_dimension_numbers<[1], [1], [0], [0], [0, 0, 1, 0], [], []>} : vector<10x8xf32>, vector<10x8xf32>, vector<10x10xf32> -> vector<10x10xf32>
    %cst_51 = arith.constant 0.353553385 : f32
    %142 = vector.broadcast %cst_51 : f32 to vector<10x10xf32>
    %143 = arith.mulf %141, %142 : vector<10x10xf32>
    %cst_52 = arith.constant dense<0xFF800000> : vector<10xf32>
    %144 = vector.multi_reduction <maximumf>, %143, %cst_52 [1] : vector<10x10xf32> to vector<10xf32>
    %145 = vector.shape_cast %144 : vector<10xf32> to vector<10x1xf32>
    %146 = vector.broadcast %145 : vector<10x1xf32> to vector<10x10xf32>
    %147 = arith.subf %143, %146 : vector<10x10xf32>
    %148 = math.exp %147 : vector<10x10xf32>
    %cst_53 = arith.constant dense<0.000000e+00> : vector<10xf32>
    %149 = vector.multi_reduction <add>, %148, %cst_53 [1] : vector<10x10xf32> to vector<10xf32>
    %150 = vector.shape_cast %149 : vector<10xf32> to vector<10x1xf32>
    %151 = tpu.reciprocal %150 {approx = true} : vector<10x1xf32> -> vector<10x1xf32>
    %152 = vector.broadcast %151 : vector<10x1xf32> to vector<10x10xf32>
    %153 = arith.mulf %148, %152 : vector<10x10xf32>
    %cst_54 = arith.constant dense<0.000000e+00> : vector<10x8xf32>
    %154 = tpu.matmul %153, %140, %cst_54 {dimension_numbers = #tpu.dot_dimension_numbers<[1], [0], [0], [1], [0, 0, 1, 1], [], []>} : vector<10x10xf32>, vector<10x8xf32>, vector<10x8xf32> -> vector<10x8xf32>
    %155 = arith.truncf %154 : vector<10x8xf32> to vector<10x8xbf16>
    %c0_55 = arith.constant 0 : index
    %c3 = arith.constant 3 : index
    %c0_56 = arith.constant 0 : index
    %c0_57 = arith.constant 0 : index
    %156 = vector.load %arg3[%c0_55, %c3, %c0_56, %c0_57] : memref<2x4x8x32xbf16, #tpu.memory_space<vmem>>, vector<1x1x8x32xbf16>
    %157 = vector.shape_cast %156 : vector<1x1x8x32xbf16> to vector<8x32xbf16>
    %cst_58 = arith.constant dense<0.000000e+00> : vector<10x32xf32>
    %158 = tpu.matmul %155, %157, %cst_58 {dimension_numbers = #tpu.dot_dimension_numbers<[1], [0], [0], [1], [0, 0, 1, 1], [], []>} : vector<10x8xbf16>, vector<8x32xbf16>, vector<10x32xf32> -> vector<10x32xf32>
    %159 = arith.addf %137, %158 : vector<10x32xf32>
    %c41 = arith.constant 41 : index
    %c0_59 = arith.constant 0 : index
    %160 = vector.load %arg1[%c41, %c0_59] : memref<68x128xf32, #tpu.memory_space<vmem>>, vector<1x32xf32>
    %161 = vector.broadcast %160 : vector<1x32xf32> to vector<10x32xf32>
    %162 = arith.addf %159, %161 : vector<10x32xf32>
    %163 = arith.addf %54, %162 : vector<10x32xf32>
    %c42 = arith.constant 42 : index
    %c0_60 = arith.constant 0 : index
    %164 = vector.load %arg1[%c42, %c0_60] : memref<68x128xf32, #tpu.memory_space<vmem>>, vector<1x32xf32>
    %c43 = arith.constant 43 : index
    %c0_61 = arith.constant 0 : index
    %165 = vector.load %arg1[%c43, %c0_61] : memref<68x128xf32, #tpu.memory_space<vmem>>, vector<1x32xf32>
    %cst_62 = arith.constant dense<0.000000e+00> : vector<10xf32>
    %166 = vector.multi_reduction <add>, %163, %cst_62 [1] : vector<10x32xf32> to vector<10xf32>
    %167 = vector.shape_cast %166 : vector<10xf32> to vector<10x1xf32>
    %cst_63 = arith.constant 3.200000e+01 : f32
    %168 = vector.broadcast %cst_63 : f32 to vector<10x1xf32>
    %169 = arith.divf %167, %168 : vector<10x1xf32>
    %170 = vector.broadcast %169 : vector<10x1xf32> to vector<10x32xf32>
    %171 = arith.subf %163, %170 : vector<10x32xf32>
    %172 = arith.mulf %171, %171 : vector<10x32xf32>
    %cst_64 = arith.constant dense<0.000000e+00> : vector<10xf32>
    %173 = vector.multi_reduction <add>, %172, %cst_64 [1] : vector<10x32xf32> to vector<10xf32>
    %174 = vector.shape_cast %173 : vector<10xf32> to vector<10x1xf32>
    %cst_65 = arith.constant 3.200000e+01 : f32
    %175 = vector.broadcast %cst_65 : f32 to vector<10x1xf32>
    %176 = arith.divf %174, %175 : vector<10x1xf32>
    %177 = vector.broadcast %169 : vector<10x1xf32> to vector<10x32xf32>
    %178 = arith.subf %163, %177 : vector<10x32xf32>
    %cst_66 = arith.constant 9.99999974E-6 : f32
    %179 = vector.broadcast %cst_66 : f32 to vector<10x1xf32>
    %180 = arith.addf %176, %179 : vector<10x1xf32>
    %181 = math.rsqrt %180 : vector<10x1xf32>
    %182 = vector.broadcast %181 : vector<10x1xf32> to vector<10x32xf32>
    %183 = arith.mulf %178, %182 : vector<10x32xf32>
    %184 = vector.broadcast %164 : vector<1x32xf32> to vector<10x32xf32>
    %185 = arith.mulf %183, %184 : vector<10x32xf32>
    %186 = vector.broadcast %165 : vector<1x32xf32> to vector<10x32xf32>
    %187 = arith.addf %185, %186 : vector<10x32xf32>
    %188 = arith.truncf %187 : vector<10x32xf32> to vector<10x32xbf16>
    %c0_67 = arith.constant 0 : index
    %c0_68 = arith.constant 0 : index
    %c0_69 = arith.constant 0 : index
    %189 = vector.load %arg4[%c0_67, %c0_68, %c0_69] : memref<2x32x128xbf16, #tpu.memory_space<vmem>>, vector<1x32x128xbf16>
    %190 = vector.shape_cast %189 : vector<1x32x128xbf16> to vector<32x128xbf16>
    %cst_70 = arith.constant dense<0.000000e+00> : vector<10x128xf32>
    %191 = tpu.matmul %188, %190, %cst_70 {dimension_numbers = #tpu.dot_dimension_numbers<[1], [0], [0], [1], [0, 0, 1, 1], [], []>} : vector<10x32xbf16>, vector<32x128xbf16>, vector<10x128xf32> -> vector<10x128xf32>
    %c44 = arith.constant 44 : index
    %c0_71 = arith.constant 0 : index
    %192 = vector.load %arg1[%c44, %c0_71] : memref<68x128xf32, #tpu.memory_space<vmem>>, vector<1x128xf32>
    %193 = vector.broadcast %192 : vector<1x128xf32> to vector<10x128xf32>
    %194 = arith.addf %191, %193 : vector<10x128xf32>
    %cst_72 = arith.constant 0.000000e+00 : f32
    %195 = vector.broadcast %cst_72 : f32 to vector<10x128xf32>
    %196 = arith.maximumf %194, %195 : vector<10x128xf32>
    %197 = arith.truncf %196 : vector<10x128xf32> to vector<10x128xbf16>
    %c0_73 = arith.constant 0 : index
    %c0_74 = arith.constant 0 : index
    %c0_75 = arith.constant 0 : index
    %198 = vector.load %arg5[%c0_73, %c0_74, %c0_75] : memref<2x128x32xbf16, #tpu.memory_space<vmem>>, vector<1x128x32xbf16>
    %199 = vector.shape_cast %198 : vector<1x128x32xbf16> to vector<128x32xbf16>
    %cst_76 = arith.constant dense<0.000000e+00> : vector<10x32xf32>
    %200 = tpu.matmul %197, %199, %cst_76 {dimension_numbers = #tpu.dot_dimension_numbers<[1], [0], [0], [1], [0, 0, 1, 1], [], []>} : vector<10x128xbf16>, vector<128x32xbf16>, vector<10x32xf32> -> vector<10x32xf32>
    %c45 = arith.constant 45 : index
    %c0_77 = arith.constant 0 : index
    %201 = vector.load %arg1[%c45, %c0_77] : memref<68x128xf32, #tpu.memory_space<vmem>>, vector<1x32xf32>
    %202 = vector.broadcast %201 : vector<1x32xf32> to vector<10x32xf32>
    %203 = arith.addf %200, %202 : vector<10x32xf32>
    %204 = arith.addf %187, %203 : vector<10x32xf32>
    %c46 = arith.constant 46 : index
    %c0_78 = arith.constant 0 : index
    %205 = vector.load %arg1[%c46, %c0_78] : memref<68x128xf32, #tpu.memory_space<vmem>>, vector<1x32xf32>
    %c47 = arith.constant 47 : index
    %c0_79 = arith.constant 0 : index
    %206 = vector.load %arg1[%c47, %c0_79] : memref<68x128xf32, #tpu.memory_space<vmem>>, vector<1x32xf32>
    %cst_80 = arith.constant dense<0.000000e+00> : vector<10xf32>
    %207 = vector.multi_reduction <add>, %204, %cst_80 [1] : vector<10x32xf32> to vector<10xf32>
    %208 = vector.shape_cast %207 : vector<10xf32> to vector<10x1xf32>
    %cst_81 = arith.constant 3.200000e+01 : f32
    %209 = vector.broadcast %cst_81 : f32 to vector<10x1xf32>
    %210 = arith.divf %208, %209 : vector<10x1xf32>
    %211 = vector.broadcast %210 : vector<10x1xf32> to vector<10x32xf32>
    %212 = arith.subf %204, %211 : vector<10x32xf32>
    %213 = arith.mulf %212, %212 : vector<10x32xf32>
    %cst_82 = arith.constant dense<0.000000e+00> : vector<10xf32>
    %214 = vector.multi_reduction <add>, %213, %cst_82 [1] : vector<10x32xf32> to vector<10xf32>
    %215 = vector.shape_cast %214 : vector<10xf32> to vector<10x1xf32>
    %cst_83 = arith.constant 3.200000e+01 : f32
    %216 = vector.broadcast %cst_83 : f32 to vector<10x1xf32>
    %217 = arith.divf %215, %216 : vector<10x1xf32>
    %218 = vector.broadcast %210 : vector<10x1xf32> to vector<10x32xf32>
    %219 = arith.subf %204, %218 : vector<10x32xf32>
    %cst_84 = arith.constant 9.99999974E-6 : f32
    %220 = vector.broadcast %cst_84 : f32 to vector<10x1xf32>
    %221 = arith.addf %217, %220 : vector<10x1xf32>
    %222 = math.rsqrt %221 : vector<10x1xf32>
    %223 = vector.broadcast %222 : vector<10x1xf32> to vector<10x32xf32>
    %224 = arith.mulf %219, %223 : vector<10x32xf32>
    %225 = vector.broadcast %205 : vector<1x32xf32> to vector<10x32xf32>
    %226 = arith.mulf %224, %225 : vector<10x32xf32>
    %227 = vector.broadcast %206 : vector<1x32xf32> to vector<10x32xf32>
    %228 = arith.addf %226, %227 : vector<10x32xf32>
    %229 = arith.truncf %228 : vector<10x32xf32> to vector<10x32xbf16>
    %c1_85 = arith.constant 1 : index
    %c0_86 = arith.constant 0 : index
    %c0_87 = arith.constant 0 : index
    %230 = vector.load %arg2[%c1_85, %c0_86, %c0_87] : memref<2x32x96xbf16, #tpu.memory_space<vmem>>, vector<1x32x96xbf16>
    %231 = vector.shape_cast %230 : vector<1x32x96xbf16> to vector<32x96xbf16>
    %cst_88 = arith.constant dense<0.000000e+00> : vector<10x96xf32>
    %232 = tpu.matmul %229, %231, %cst_88 {dimension_numbers = #tpu.dot_dimension_numbers<[1], [0], [0], [1], [0, 0, 1, 1], [], []>} : vector<10x32xbf16>, vector<32x96xbf16>, vector<10x96xf32> -> vector<10x96xf32>
    %233 = vector.extract_strided_slice %232 {offsets = [0, 0], sizes = [10, 32], strides = [1, 1]} : vector<10x96xf32> to vector<10x32xf32>
    %c48 = arith.constant 48 : index
    %c0_89 = arith.constant 0 : index
    %234 = vector.load %arg1[%c48, %c0_89] : memref<68x128xf32, #tpu.memory_space<vmem>>, vector<1x32xf32>
    %235 = vector.broadcast %234 : vector<1x32xf32> to vector<10x32xf32>
    %236 = arith.addf %233, %235 : vector<10x32xf32>
    %237 = vector.extract_strided_slice %232 {offsets = [0, 32], sizes = [10, 32], strides = [1, 1]} : vector<10x96xf32> to vector<10x32xf32>
    %c49 = arith.constant 49 : index
    %c0_90 = arith.constant 0 : index
    %238 = vector.load %arg1[%c49, %c0_90] : memref<68x128xf32, #tpu.memory_space<vmem>>, vector<1x32xf32>
    %239 = vector.broadcast %238 : vector<1x32xf32> to vector<10x32xf32>
    %240 = arith.addf %237, %239 : vector<10x32xf32>
    %241 = vector.extract_strided_slice %232 {offsets = [0, 64], sizes = [10, 32], strides = [1, 1]} : vector<10x96xf32> to vector<10x32xf32>
    %c50 = arith.constant 50 : index
    %c0_91 = arith.constant 0 : index
    %242 = vector.load %arg1[%c50, %c0_91] : memref<68x128xf32, #tpu.memory_space<vmem>>, vector<1x32xf32>
    %243 = vector.broadcast %242 : vector<1x32xf32> to vector<10x32xf32>
    %244 = arith.addf %241, %243 : vector<10x32xf32>
    %cst_92 = arith.constant 0.000000e+00 : f32
    %245 = vector.broadcast %cst_92 : f32 to vector<10x32xf32>
    %246 = vector.extract_strided_slice %236 {offsets = [0, 0], sizes = [10, 8], strides = [1, 1]} : vector<10x32xf32> to vector<10x8xf32>
    %247 = vector.extract_strided_slice %240 {offsets = [0, 0], sizes = [10, 8], strides = [1, 1]} : vector<10x32xf32> to vector<10x8xf32>
    %248 = vector.extract_strided_slice %244 {offsets = [0, 0], sizes = [10, 8], strides = [1, 1]} : vector<10x32xf32> to vector<10x8xf32>
    %cst_93 = arith.constant dense<0.000000e+00> : vector<10x10xf32>
    %249 = tpu.matmul %246, %247, %cst_93 {dimension_numbers = #tpu.dot_dimension_numbers<[1], [1], [0], [0], [0, 0, 1, 0], [], []>} : vector<10x8xf32>, vector<10x8xf32>, vector<10x10xf32> -> vector<10x10xf32>
    %cst_94 = arith.constant 0.353553385 : f32
    %250 = vector.broadcast %cst_94 : f32 to vector<10x10xf32>
    %251 = arith.mulf %249, %250 : vector<10x10xf32>
    %cst_95 = arith.constant dense<0xFF800000> : vector<10xf32>
    %252 = vector.multi_reduction <maximumf>, %251, %cst_95 [1] : vector<10x10xf32> to vector<10xf32>
    %253 = vector.shape_cast %252 : vector<10xf32> to vector<10x1xf32>
    %254 = vector.broadcast %253 : vector<10x1xf32> to vector<10x10xf32>
    %255 = arith.subf %251, %254 : vector<10x10xf32>
    %256 = math.exp %255 : vector<10x10xf32>
    %cst_96 = arith.constant dense<0.000000e+00> : vector<10xf32>
    %257 = vector.multi_reduction <add>, %256, %cst_96 [1] : vector<10x10xf32> to vector<10xf32>
    %258 = vector.shape_cast %257 : vector<10xf32> to vector<10x1xf32>
    %259 = tpu.reciprocal %258 {approx = true} : vector<10x1xf32> -> vector<10x1xf32>
    %260 = vector.broadcast %259 : vector<10x1xf32> to vector<10x10xf32>
    %261 = arith.mulf %256, %260 : vector<10x10xf32>
    %cst_97 = arith.constant dense<0.000000e+00> : vector<10x8xf32>
    %262 = tpu.matmul %261, %248, %cst_97 {dimension_numbers = #tpu.dot_dimension_numbers<[1], [0], [0], [1], [0, 0, 1, 1], [], []>} : vector<10x10xf32>, vector<10x8xf32>, vector<10x8xf32> -> vector<10x8xf32>
    %263 = arith.truncf %262 : vector<10x8xf32> to vector<10x8xbf16>
    %c1_98 = arith.constant 1 : index
    %c0_99 = arith.constant 0 : index
    %c0_100 = arith.constant 0 : index
    %c0_101 = arith.constant 0 : index
    %264 = vector.load %arg3[%c1_98, %c0_99, %c0_100, %c0_101] : memref<2x4x8x32xbf16, #tpu.memory_space<vmem>>, vector<1x1x8x32xbf16>
    %265 = vector.shape_cast %264 : vector<1x1x8x32xbf16> to vector<8x32xbf16>
    %cst_102 = arith.constant dense<0.000000e+00> : vector<10x32xf32>
    %266 = tpu.matmul %263, %265, %cst_102 {dimension_numbers = #tpu.dot_dimension_numbers<[1], [0], [0], [1], [0, 0, 1, 1], [], []>} : vector<10x8xbf16>, vector<8x32xbf16>, vector<10x32xf32> -> vector<10x32xf32>
    %267 = arith.addf %245, %266 : vector<10x32xf32>
    %268 = vector.extract_strided_slice %236 {offsets = [0, 8], sizes = [10, 8], strides = [1, 1]} : vector<10x32xf32> to vector<10x8xf32>
    %269 = vector.extract_strided_slice %240 {offsets = [0, 8], sizes = [10, 8], strides = [1, 1]} : vector<10x32xf32> to vector<10x8xf32>
    %270 = vector.extract_strided_slice %244 {offsets = [0, 8], sizes = [10, 8], strides = [1, 1]} : vector<10x32xf32> to vector<10x8xf32>
    %cst_103 = arith.constant dense<0.000000e+00> : vector<10x10xf32>
    %271 = tpu.matmul %268, %269, %cst_103 {dimension_numbers = #tpu.dot_dimension_numbers<[1], [1], [0], [0], [0, 0, 1, 0], [], []>} : vector<10x8xf32>, vector<10x8xf32>, vector<10x10xf32> -> vector<10x10xf32>
    %cst_104 = arith.constant 0.353553385 : f32
    %272 = vector.broadcast %cst_104 : f32 to vector<10x10xf32>
    %273 = arith.mulf %271, %272 : vector<10x10xf32>
    %cst_105 = arith.constant dense<0xFF800000> : vector<10xf32>
    %274 = vector.multi_reduction <maximumf>, %273, %cst_105 [1] : vector<10x10xf32> to vector<10xf32>
    %275 = vector.shape_cast %274 : vector<10xf32> to vector<10x1xf32>
    %276 = vector.broadcast %275 : vector<10x1xf32> to vector<10x10xf32>
    %277 = arith.subf %273, %276 : vector<10x10xf32>
    %278 = math.exp %277 : vector<10x10xf32>
    %cst_106 = arith.constant dense<0.000000e+00> : vector<10xf32>
    %279 = vector.multi_reduction <add>, %278, %cst_106 [1] : vector<10x10xf32> to vector<10xf32>
    %280 = vector.shape_cast %279 : vector<10xf32> to vector<10x1xf32>
    %281 = tpu.reciprocal %280 {approx = true} : vector<10x1xf32> -> vector<10x1xf32>
    %282 = vector.broadcast %281 : vector<10x1xf32> to vector<10x10xf32>
    %283 = arith.mulf %278, %282 : vector<10x10xf32>
    %cst_107 = arith.constant dense<0.000000e+00> : vector<10x8xf32>
    %284 = tpu.matmul %283, %270, %cst_107 {dimension_numbers = #tpu.dot_dimension_numbers<[1], [0], [0], [1], [0, 0, 1, 1], [], []>} : vector<10x10xf32>, vector<10x8xf32>, vector<10x8xf32> -> vector<10x8xf32>
    %285 = arith.truncf %284 : vector<10x8xf32> to vector<10x8xbf16>
    %c1_108 = arith.constant 1 : index
    %c1_109 = arith.constant 1 : index
    %c0_110 = arith.constant 0 : index
    %c0_111 = arith.constant 0 : index
    %286 = vector.load %arg3[%c1_108, %c1_109, %c0_110, %c0_111] : memref<2x4x8x32xbf16, #tpu.memory_space<vmem>>, vector<1x1x8x32xbf16>
    %287 = vector.shape_cast %286 : vector<1x1x8x32xbf16> to vector<8x32xbf16>
    %cst_112 = arith.constant dense<0.000000e+00> : vector<10x32xf32>
    %288 = tpu.matmul %285, %287, %cst_112 {dimension_numbers = #tpu.dot_dimension_numbers<[1], [0], [0], [1], [0, 0, 1, 1], [], []>} : vector<10x8xbf16>, vector<8x32xbf16>, vector<10x32xf32> -> vector<10x32xf32>
    %289 = arith.addf %267, %288 : vector<10x32xf32>
    %290 = vector.extract_strided_slice %236 {offsets = [0, 16], sizes = [10, 8], strides = [1, 1]} : vector<10x32xf32> to vector<10x8xf32>
    %291 = vector.extract_strided_slice %240 {offsets = [0, 16], sizes = [10, 8], strides = [1, 1]} : vector<10x32xf32> to vector<10x8xf32>
    %292 = vector.extract_strided_slice %244 {offsets = [0, 16], sizes = [10, 8], strides = [1, 1]} : vector<10x32xf32> to vector<10x8xf32>
    %cst_113 = arith.constant dense<0.000000e+00> : vector<10x10xf32>
    %293 = tpu.matmul %290, %291, %cst_113 {dimension_numbers = #tpu.dot_dimension_numbers<[1], [1], [0], [0], [0, 0, 1, 0], [], []>} : vector<10x8xf32>, vector<10x8xf32>, vector<10x10xf32> -> vector<10x10xf32>
    %cst_114 = arith.constant 0.353553385 : f32
    %294 = vector.broadcast %cst_114 : f32 to vector<10x10xf32>
    %295 = arith.mulf %293, %294 : vector<10x10xf32>
    %cst_115 = arith.constant dense<0xFF800000> : vector<10xf32>
    %296 = vector.multi_reduction <maximumf>, %295, %cst_115 [1] : vector<10x10xf32> to vector<10xf32>
    %297 = vector.shape_cast %296 : vector<10xf32> to vector<10x1xf32>
    %298 = vector.broadcast %297 : vector<10x1xf32> to vector<10x10xf32>
    %299 = arith.subf %295, %298 : vector<10x10xf32>
    %300 = math.exp %299 : vector<10x10xf32>
    %cst_116 = arith.constant dense<0.000000e+00> : vector<10xf32>
    %301 = vector.multi_reduction <add>, %300, %cst_116 [1] : vector<10x10xf32> to vector<10xf32>
    %302 = vector.shape_cast %301 : vector<10xf32> to vector<10x1xf32>
    %303 = tpu.reciprocal %302 {approx = true} : vector<10x1xf32> -> vector<10x1xf32>
    %304 = vector.broadcast %303 : vector<10x1xf32> to vector<10x10xf32>
    %305 = arith.mulf %300, %304 : vector<10x10xf32>
    %cst_117 = arith.constant dense<0.000000e+00> : vector<10x8xf32>
    %306 = tpu.matmul %305, %292, %cst_117 {dimension_numbers = #tpu.dot_dimension_numbers<[1], [0], [0], [1], [0, 0, 1, 1], [], []>} : vector<10x10xf32>, vector<10x8xf32>, vector<10x8xf32> -> vector<10x8xf32>
    %307 = arith.truncf %306 : vector<10x8xf32> to vector<10x8xbf16>
    %c1_118 = arith.constant 1 : index
    %c2_119 = arith.constant 2 : index
    %c0_120 = arith.constant 0 : index
    %c0_121 = arith.constant 0 : index
    %308 = vector.load %arg3[%c1_118, %c2_119, %c0_120, %c0_121] : memref<2x4x8x32xbf16, #tpu.memory_space<vmem>>, vector<1x1x8x32xbf16>
    %309 = vector.shape_cast %308 : vector<1x1x8x32xbf16> to vector<8x32xbf16>
    %cst_122 = arith.constant dense<0.000000e+00> : vector<10x32xf32>
    %310 = tpu.matmul %307, %309, %cst_122 {dimension_numbers = #tpu.dot_dimension_numbers<[1], [0], [0], [1], [0, 0, 1, 1], [], []>} : vector<10x8xbf16>, vector<8x32xbf16>, vector<10x32xf32> -> vector<10x32xf32>
    %311 = arith.addf %289, %310 : vector<10x32xf32>
    %312 = vector.extract_strided_slice %236 {offsets = [0, 24], sizes = [10, 8], strides = [1, 1]} : vector<10x32xf32> to vector<10x8xf32>
    %313 = vector.extract_strided_slice %240 {offsets = [0, 24], sizes = [10, 8], strides = [1, 1]} : vector<10x32xf32> to vector<10x8xf32>
    %314 = vector.extract_strided_slice %244 {offsets = [0, 24], sizes = [10, 8], strides = [1, 1]} : vector<10x32xf32> to vector<10x8xf32>
    %cst_123 = arith.constant dense<0.000000e+00> : vector<10x10xf32>
    %315 = tpu.matmul %312, %313, %cst_123 {dimension_numbers = #tpu.dot_dimension_numbers<[1], [1], [0], [0], [0, 0, 1, 0], [], []>} : vector<10x8xf32>, vector<10x8xf32>, vector<10x10xf32> -> vector<10x10xf32>
    %cst_124 = arith.constant 0.353553385 : f32
    %316 = vector.broadcast %cst_124 : f32 to vector<10x10xf32>
    %317 = arith.mulf %315, %316 : vector<10x10xf32>
    %cst_125 = arith.constant dense<0xFF800000> : vector<10xf32>
    %318 = vector.multi_reduction <maximumf>, %317, %cst_125 [1] : vector<10x10xf32> to vector<10xf32>
    %319 = vector.shape_cast %318 : vector<10xf32> to vector<10x1xf32>
    %320 = vector.broadcast %319 : vector<10x1xf32> to vector<10x10xf32>
    %321 = arith.subf %317, %320 : vector<10x10xf32>
    %322 = math.exp %321 : vector<10x10xf32>
    %cst_126 = arith.constant dense<0.000000e+00> : vector<10xf32>
    %323 = vector.multi_reduction <add>, %322, %cst_126 [1] : vector<10x10xf32> to vector<10xf32>
    %324 = vector.shape_cast %323 : vector<10xf32> to vector<10x1xf32>
    %325 = tpu.reciprocal %324 {approx = true} : vector<10x1xf32> -> vector<10x1xf32>
    %326 = vector.broadcast %325 : vector<10x1xf32> to vector<10x10xf32>
    %327 = arith.mulf %322, %326 : vector<10x10xf32>
    %cst_127 = arith.constant dense<0.000000e+00> : vector<10x8xf32>
    %328 = tpu.matmul %327, %314, %cst_127 {dimension_numbers = #tpu.dot_dimension_numbers<[1], [0], [0], [1], [0, 0, 1, 1], [], []>} : vector<10x10xf32>, vector<10x8xf32>, vector<10x8xf32> -> vector<10x8xf32>
    %329 = arith.truncf %328 : vector<10x8xf32> to vector<10x8xbf16>
    %c1_128 = arith.constant 1 : index
    %c3_129 = arith.constant 3 : index
    %c0_130 = arith.constant 0 : index
    %c0_131 = arith.constant 0 : index
    %330 = vector.load %arg3[%c1_128, %c3_129, %c0_130, %c0_131] : memref<2x4x8x32xbf16, #tpu.memory_space<vmem>>, vector<1x1x8x32xbf16>
    %331 = vector.shape_cast %330 : vector<1x1x8x32xbf16> to vector<8x32xbf16>
    %cst_132 = arith.constant dense<0.000000e+00> : vector<10x32xf32>
    %332 = tpu.matmul %329, %331, %cst_132 {dimension_numbers = #tpu.dot_dimension_numbers<[1], [0], [0], [1], [0, 0, 1, 1], [], []>} : vector<10x8xbf16>, vector<8x32xbf16>, vector<10x32xf32> -> vector<10x32xf32>
    %333 = arith.addf %311, %332 : vector<10x32xf32>
    %c51 = arith.constant 51 : index
    %c0_133 = arith.constant 0 : index
    %334 = vector.load %arg1[%c51, %c0_133] : memref<68x128xf32, #tpu.memory_space<vmem>>, vector<1x32xf32>
    %335 = vector.broadcast %334 : vector<1x32xf32> to vector<10x32xf32>
    %336 = arith.addf %333, %335 : vector<10x32xf32>
    %337 = arith.addf %228, %336 : vector<10x32xf32>
    %c52 = arith.constant 52 : index
    %c0_134 = arith.constant 0 : index
    %338 = vector.load %arg1[%c52, %c0_134] : memref<68x128xf32, #tpu.memory_space<vmem>>, vector<1x32xf32>
    %c53 = arith.constant 53 : index
    %c0_135 = arith.constant 0 : index
    %339 = vector.load %arg1[%c53, %c0_135] : memref<68x128xf32, #tpu.memory_space<vmem>>, vector<1x32xf32>
    %cst_136 = arith.constant dense<0.000000e+00> : vector<10xf32>
    %340 = vector.multi_reduction <add>, %337, %cst_136 [1] : vector<10x32xf32> to vector<10xf32>
    %341 = vector.shape_cast %340 : vector<10xf32> to vector<10x1xf32>
    %cst_137 = arith.constant 3.200000e+01 : f32
    %342 = vector.broadcast %cst_137 : f32 to vector<10x1xf32>
    %343 = arith.divf %341, %342 : vector<10x1xf32>
    %344 = vector.broadcast %343 : vector<10x1xf32> to vector<10x32xf32>
    %345 = arith.subf %337, %344 : vector<10x32xf32>
    %346 = arith.mulf %345, %345 : vector<10x32xf32>
    %cst_138 = arith.constant dense<0.000000e+00> : vector<10xf32>
    %347 = vector.multi_reduction <add>, %346, %cst_138 [1] : vector<10x32xf32> to vector<10xf32>
    %348 = vector.shape_cast %347 : vector<10xf32> to vector<10x1xf32>
    %cst_139 = arith.constant 3.200000e+01 : f32
    %349 = vector.broadcast %cst_139 : f32 to vector<10x1xf32>
    %350 = arith.divf %348, %349 : vector<10x1xf32>
    %351 = vector.broadcast %343 : vector<10x1xf32> to vector<10x32xf32>
    %352 = arith.subf %337, %351 : vector<10x32xf32>
    %cst_140 = arith.constant 9.99999974E-6 : f32
    %353 = vector.broadcast %cst_140 : f32 to vector<10x1xf32>
    %354 = arith.addf %350, %353 : vector<10x1xf32>
    %355 = math.rsqrt %354 : vector<10x1xf32>
    %356 = vector.broadcast %355 : vector<10x1xf32> to vector<10x32xf32>
    %357 = arith.mulf %352, %356 : vector<10x32xf32>
    %358 = vector.broadcast %338 : vector<1x32xf32> to vector<10x32xf32>
    %359 = arith.mulf %357, %358 : vector<10x32xf32>
    %360 = vector.broadcast %339 : vector<1x32xf32> to vector<10x32xf32>
    %361 = arith.addf %359, %360 : vector<10x32xf32>
    %362 = arith.truncf %361 : vector<10x32xf32> to vector<10x32xbf16>
    %c1_141 = arith.constant 1 : index
    %c0_142 = arith.constant 0 : index
    %c0_143 = arith.constant 0 : index
    %363 = vector.load %arg4[%c1_141, %c0_142, %c0_143] : memref<2x32x128xbf16, #tpu.memory_space<vmem>>, vector<1x32x128xbf16>
    %364 = vector.shape_cast %363 : vector<1x32x128xbf16> to vector<32x128xbf16>
    %cst_144 = arith.constant dense<0.000000e+00> : vector<10x128xf32>
    %365 = tpu.matmul %362, %364, %cst_144 {dimension_numbers = #tpu.dot_dimension_numbers<[1], [0], [0], [1], [0, 0, 1, 1], [], []>} : vector<10x32xbf16>, vector<32x128xbf16>, vector<10x128xf32> -> vector<10x128xf32>
    %c54 = arith.constant 54 : index
    %c0_145 = arith.constant 0 : index
    %366 = vector.load %arg1[%c54, %c0_145] : memref<68x128xf32, #tpu.memory_space<vmem>>, vector<1x128xf32>
    %367 = vector.broadcast %366 : vector<1x128xf32> to vector<10x128xf32>
    %368 = arith.addf %365, %367 : vector<10x128xf32>
    %cst_146 = arith.constant 0.000000e+00 : f32
    %369 = vector.broadcast %cst_146 : f32 to vector<10x128xf32>
    %370 = arith.maximumf %368, %369 : vector<10x128xf32>
    %371 = arith.truncf %370 : vector<10x128xf32> to vector<10x128xbf16>
    %c1_147 = arith.constant 1 : index
    %c0_148 = arith.constant 0 : index
    %c0_149 = arith.constant 0 : index
    %372 = vector.load %arg5[%c1_147, %c0_148, %c0_149] : memref<2x128x32xbf16, #tpu.memory_space<vmem>>, vector<1x128x32xbf16>
    %373 = vector.shape_cast %372 : vector<1x128x32xbf16> to vector<128x32xbf16>
    %cst_150 = arith.constant dense<0.000000e+00> : vector<10x32xf32>
    %374 = tpu.matmul %371, %373, %cst_150 {dimension_numbers = #tpu.dot_dimension_numbers<[1], [0], [0], [1], [0, 0, 1, 1], [], []>} : vector<10x128xbf16>, vector<128x32xbf16>, vector<10x32xf32> -> vector<10x32xf32>
    %c55 = arith.constant 55 : index
    %c0_151 = arith.constant 0 : index
    %375 = vector.load %arg1[%c55, %c0_151] : memref<68x128xf32, #tpu.memory_space<vmem>>, vector<1x32xf32>
    %376 = vector.broadcast %375 : vector<1x32xf32> to vector<10x32xf32>
    %377 = arith.addf %374, %376 : vector<10x32xf32>
    %378 = arith.addf %361, %377 : vector<10x32xf32>
    %c56 = arith.constant 56 : index
    %c0_152 = arith.constant 0 : index
    %379 = vector.load %arg1[%c56, %c0_152] : memref<68x128xf32, #tpu.memory_space<vmem>>, vector<1x32xf32>
    %c57 = arith.constant 57 : index
    %c0_153 = arith.constant 0 : index
    %380 = vector.load %arg1[%c57, %c0_153] : memref<68x128xf32, #tpu.memory_space<vmem>>, vector<1x32xf32>
    %cst_154 = arith.constant dense<0.000000e+00> : vector<10xf32>
    %381 = vector.multi_reduction <add>, %378, %cst_154 [1] : vector<10x32xf32> to vector<10xf32>
    %382 = vector.shape_cast %381 : vector<10xf32> to vector<10x1xf32>
    %cst_155 = arith.constant 3.200000e+01 : f32
    %383 = vector.broadcast %cst_155 : f32 to vector<10x1xf32>
    %384 = arith.divf %382, %383 : vector<10x1xf32>
    %385 = vector.broadcast %384 : vector<10x1xf32> to vector<10x32xf32>
    %386 = arith.subf %378, %385 : vector<10x32xf32>
    %387 = arith.mulf %386, %386 : vector<10x32xf32>
    %cst_156 = arith.constant dense<0.000000e+00> : vector<10xf32>
    %388 = vector.multi_reduction <add>, %387, %cst_156 [1] : vector<10x32xf32> to vector<10xf32>
    %389 = vector.shape_cast %388 : vector<10xf32> to vector<10x1xf32>
    %cst_157 = arith.constant 3.200000e+01 : f32
    %390 = vector.broadcast %cst_157 : f32 to vector<10x1xf32>
    %391 = arith.divf %389, %390 : vector<10x1xf32>
    %392 = vector.broadcast %384 : vector<10x1xf32> to vector<10x32xf32>
    %393 = arith.subf %378, %392 : vector<10x32xf32>
    %cst_158 = arith.constant 9.99999974E-6 : f32
    %394 = vector.broadcast %cst_158 : f32 to vector<10x1xf32>
    %395 = arith.addf %391, %394 : vector<10x1xf32>
    %396 = math.rsqrt %395 : vector<10x1xf32>
    %397 = vector.broadcast %396 : vector<10x1xf32> to vector<10x32xf32>
    %398 = arith.mulf %393, %397 : vector<10x32xf32>
    %399 = vector.broadcast %379 : vector<1x32xf32> to vector<10x32xf32>
    %400 = arith.mulf %398, %399 : vector<10x32xf32>
    %401 = vector.broadcast %380 : vector<1x32xf32> to vector<10x32xf32>
    %402 = arith.addf %400, %401 : vector<10x32xf32>
    %403 = arith.truncf %402 : vector<10x32xf32> to vector<10x32xbf16>
    %c0_159 = arith.constant 0 : index
    %c0_160 = arith.constant 0 : index
    %c0_161 = arith.constant 0 : index
    %404 = vector.load %arg6[%c0_159, %c0_160, %c0_161] : memref<2x32x32xbf16, #tpu.memory_space<vmem>>, vector<1x32x32xbf16>
    %405 = vector.shape_cast %404 : vector<1x32x32xbf16> to vector<32x32xbf16>
    %cst_162 = arith.constant dense<0.000000e+00> : vector<10x32xf32>
    %406 = tpu.matmul %403, %405, %cst_162 {dimension_numbers = #tpu.dot_dimension_numbers<[1], [0], [0], [1], [0, 0, 1, 1], [], []>} : vector<10x32xbf16>, vector<32x32xbf16>, vector<10x32xf32> -> vector<10x32xf32>
    %c58 = arith.constant 58 : index
    %c0_163 = arith.constant 0 : index
    %407 = vector.load %arg1[%c58, %c0_163] : memref<68x128xf32, #tpu.memory_space<vmem>>, vector<1x32xf32>
    %408 = vector.broadcast %407 : vector<1x32xf32> to vector<10x32xf32>
    %409 = arith.addf %406, %408 : vector<10x32xf32>
    %c59 = arith.constant 59 : index
    %c0_164 = arith.constant 0 : index
    %410 = vector.load %arg1[%c59, %c0_164] : memref<68x128xf32, #tpu.memory_space<vmem>>, vector<1x32xf32>
    %c60 = arith.constant 60 : index
    %c0_165 = arith.constant 0 : index
    %411 = vector.load %arg1[%c60, %c0_165] : memref<68x128xf32, #tpu.memory_space<vmem>>, vector<1x32xf32>
    %cst_166 = arith.constant dense<0.000000e+00> : vector<10xf32>
    %412 = vector.multi_reduction <add>, %409, %cst_166 [1] : vector<10x32xf32> to vector<10xf32>
    %413 = vector.shape_cast %412 : vector<10xf32> to vector<10x1xf32>
    %cst_167 = arith.constant 3.200000e+01 : f32
    %414 = vector.broadcast %cst_167 : f32 to vector<10x1xf32>
    %415 = arith.divf %413, %414 : vector<10x1xf32>
    %416 = vector.broadcast %415 : vector<10x1xf32> to vector<10x32xf32>
    %417 = arith.subf %409, %416 : vector<10x32xf32>
    %418 = arith.mulf %417, %417 : vector<10x32xf32>
    %cst_168 = arith.constant dense<0.000000e+00> : vector<10xf32>
    %419 = vector.multi_reduction <add>, %418, %cst_168 [1] : vector<10x32xf32> to vector<10xf32>
    %420 = vector.shape_cast %419 : vector<10xf32> to vector<10x1xf32>
    %cst_169 = arith.constant 3.200000e+01 : f32
    %421 = vector.broadcast %cst_169 : f32 to vector<10x1xf32>
    %422 = arith.divf %420, %421 : vector<10x1xf32>
    %423 = vector.broadcast %415 : vector<10x1xf32> to vector<10x32xf32>
    %424 = arith.subf %409, %423 : vector<10x32xf32>
    %cst_170 = arith.constant 9.99999974E-6 : f32
    %425 = vector.broadcast %cst_170 : f32 to vector<10x1xf32>
    %426 = arith.addf %422, %425 : vector<10x1xf32>
    %427 = math.rsqrt %426 : vector<10x1xf32>
    %428 = vector.broadcast %427 : vector<10x1xf32> to vector<10x32xf32>
    %429 = arith.mulf %424, %428 : vector<10x32xf32>
    %430 = vector.broadcast %410 : vector<1x32xf32> to vector<10x32xf32>
    %431 = arith.mulf %429, %430 : vector<10x32xf32>
    %432 = vector.broadcast %411 : vector<1x32xf32> to vector<10x32xf32>
    %433 = arith.addf %431, %432 : vector<10x32xf32>
    %cst_171 = arith.constant 0.000000e+00 : f32
    %434 = vector.broadcast %cst_171 : f32 to vector<10x32xf32>
    %435 = arith.maximumf %433, %434 : vector<10x32xf32>
    %c67 = arith.constant 67 : index
    %c0_172 = arith.constant 0 : index
    %436 = vector.load %arg1[%c67, %c0_172] : memref<68x128xf32, #tpu.memory_space<vmem>>, vector<1x1xf32>
    %c61 = arith.constant 61 : index
    %c0_173 = arith.constant 0 : index
    %437 = vector.load %arg1[%c61, %c0_173] : memref<68x128xf32, #tpu.memory_space<vmem>>, vector<1x32xf32>
    %438 = vector.broadcast %437 : vector<1x32xf32> to vector<10x32xf32>
    %439 = arith.mulf %435, %438 : vector<10x32xf32>
    %cst_174 = arith.constant dense<0.000000e+00> : vector<10xf32>
    %440 = vector.multi_reduction <add>, %439, %cst_174 [1] : vector<10x32xf32> to vector<10xf32>
    %441 = vector.shape_cast %440 : vector<10xf32> to vector<10x1xf32>
    %442 = vector.broadcast %436 : vector<1x1xf32> to vector<10x1xf32>
    %443 = arith.addf %441, %442 : vector<10x1xf32>
    %c1_i32_175 = arith.constant 1 : i32
    %444 = vector.broadcast %c1_i32_175 : i32 to vector<1x1xi32>
    %445 = arith.cmpi eq, %3, %444 : vector<1x1xi32>
    %446 = vector.extract_strided_slice %443 {offsets = [0, 0], sizes = [5, 1], strides = [1, 1]} : vector<10x1xf32> to vector<5x1xf32>
    %447 = vector.extract_strided_slice %443 {offsets = [5, 0], sizes = [5, 1], strides = [1, 1]} : vector<10x1xf32> to vector<5x1xf32>
    %448 = vector.shape_cast %445 : vector<1x1xi1> to vector<1x1xi1>
    %449 = vector.broadcast %448 : vector<1x1xi1> to vector<5x1xi1>
    %450 = arith.select %449, %446, %447 : vector<5x1xi1>, vector<5x1xf32>
    %cst_176 = arith.constant dense<0xFF800000> : vector<1xf32>
    %451 = vector.multi_reduction <maximumf>, %450, %cst_176 [0] : vector<5x1xf32> to vector<1xf32>
    %452 = vector.shape_cast %451 : vector<1xf32> to vector<1x1xf32>
    %453 = vector.broadcast %452 : vector<1x1xf32> to vector<5x1xf32>
    %454 = arith.subf %450, %453 : vector<5x1xf32>
    %455 = math.exp %454 : vector<5x1xf32>
    %cst_177 = arith.constant dense<0.000000e+00> : vector<1xf32>
    %456 = vector.multi_reduction <add>, %455, %cst_177 [0] : vector<5x1xf32> to vector<1xf32>
    %457 = vector.shape_cast %456 : vector<1xf32> to vector<1x1xf32>
    %458 = vector.broadcast %457 : vector<1x1xf32> to vector<5x1xf32>
    %459 = arith.divf %455, %458 : vector<5x1xf32>
    %c67_178 = arith.constant 67 : index
    %c1_179 = arith.constant 1 : index
    %460 = vector.load %arg1[%c67_178, %c1_179] : memref<68x128xf32, #tpu.memory_space<vmem>>, vector<1x1xf32>
    %c62 = arith.constant 62 : index
    %c0_180 = arith.constant 0 : index
    %461 = vector.load %arg1[%c62, %c0_180] : memref<68x128xf32, #tpu.memory_space<vmem>>, vector<1x32xf32>
    %462 = vector.broadcast %461 : vector<1x32xf32> to vector<10x32xf32>
    %463 = arith.mulf %402, %462 : vector<10x32xf32>
    %cst_181 = arith.constant dense<0.000000e+00> : vector<10xf32>
    %464 = vector.multi_reduction <add>, %463, %cst_181 [1] : vector<10x32xf32> to vector<10xf32>
    %465 = vector.shape_cast %464 : vector<10xf32> to vector<10x1xf32>
    %466 = vector.broadcast %460 : vector<1x1xf32> to vector<10x1xf32>
    %467 = arith.addf %465, %466 : vector<10x1xf32>
    %cst_182 = arith.constant dense<0xFF800000> : vector<1xf32>
    %468 = vector.multi_reduction <maximumf>, %467, %cst_182 [0] : vector<10x1xf32> to vector<1xf32>
    %469 = vector.shape_cast %468 : vector<1xf32> to vector<1x1xf32>
    %470 = vector.broadcast %469 : vector<1x1xf32> to vector<10x1xf32>
    %471 = arith.subf %467, %470 : vector<10x1xf32>
    %472 = math.exp %471 : vector<10x1xf32>
    %cst_183 = arith.constant dense<0.000000e+00> : vector<1xf32>
    %473 = vector.multi_reduction <add>, %472, %cst_183 [0] : vector<10x1xf32> to vector<1xf32>
    %474 = vector.shape_cast %473 : vector<1xf32> to vector<1x1xf32>
    %475 = tpu.reciprocal %474 {approx = true} : vector<1x1xf32> -> vector<1x1xf32>
    %476 = vector.broadcast %475 : vector<1x1xf32> to vector<10x1xf32>
    %477 = arith.mulf %472, %476 : vector<10x1xf32>
    %478 = vector.broadcast %477 : vector<10x1xf32> to vector<10x32xf32>
    %479 = arith.mulf %402, %478 : vector<10x32xf32>
    %cst_184 = arith.constant dense<0.000000e+00> : vector<32xf32>
    %480 = vector.multi_reduction <add>, %479, %cst_184 [0] : vector<10x32xf32> to vector<32xf32>
    %481 = vector.shape_cast %480 : vector<32xf32> to vector<1x32xf32>
    %482 = arith.truncf %481 : vector<1x32xf32> to vector<1x32xbf16>
    %c1_185 = arith.constant 1 : index
    %c0_186 = arith.constant 0 : index
    %c0_187 = arith.constant 0 : index
    %483 = vector.load %arg6[%c1_185, %c0_186, %c0_187] : memref<2x32x32xbf16, #tpu.memory_space<vmem>>, vector<1x32x32xbf16>
    %484 = vector.shape_cast %483 : vector<1x32x32xbf16> to vector<32x32xbf16>
    %cst_188 = arith.constant dense<0.000000e+00> : vector<1x32xf32>
    %485 = tpu.matmul %482, %484, %cst_188 {dimension_numbers = #tpu.dot_dimension_numbers<[1], [0], [0], [1], [0, 0, 1, 1], [], []>} : vector<1x32xbf16>, vector<32x32xbf16>, vector<1x32xf32> -> vector<1x32xf32>
    %c63 = arith.constant 63 : index
    %c0_189 = arith.constant 0 : index
    %486 = vector.load %arg1[%c63, %c0_189] : memref<68x128xf32, #tpu.memory_space<vmem>>, vector<1x32xf32>
    %487 = arith.addf %485, %486 : vector<1x32xf32>
    %c64 = arith.constant 64 : index
    %c0_190 = arith.constant 0 : index
    %488 = vector.load %arg1[%c64, %c0_190] : memref<68x128xf32, #tpu.memory_space<vmem>>, vector<1x32xf32>
    %c65 = arith.constant 65 : index
    %c0_191 = arith.constant 0 : index
    %489 = vector.load %arg1[%c65, %c0_191] : memref<68x128xf32, #tpu.memory_space<vmem>>, vector<1x32xf32>
    %cst_192 = arith.constant dense<0.000000e+00> : vector<1xf32>
    %490 = vector.multi_reduction <add>, %487, %cst_192 [1] : vector<1x32xf32> to vector<1xf32>
    %491 = vector.shape_cast %490 : vector<1xf32> to vector<1x1xf32>
    %cst_193 = arith.constant 3.200000e+01 : f32
    %492 = vector.broadcast %cst_193 : f32 to vector<1x1xf32>
    %493 = arith.divf %491, %492 : vector<1x1xf32>
    %494 = vector.broadcast %493 : vector<1x1xf32> to vector<1x32xf32>
    %495 = arith.subf %487, %494 : vector<1x32xf32>
    %496 = arith.mulf %495, %495 : vector<1x32xf32>
    %cst_194 = arith.constant dense<0.000000e+00> : vector<1xf32>
    %497 = vector.multi_reduction <add>, %496, %cst_194 [1] : vector<1x32xf32> to vector<1xf32>
    %498 = vector.shape_cast %497 : vector<1xf32> to vector<1x1xf32>
    %cst_195 = arith.constant 3.200000e+01 : f32
    %499 = vector.broadcast %cst_195 : f32 to vector<1x1xf32>
    %500 = arith.divf %498, %499 : vector<1x1xf32>
    %501 = vector.broadcast %493 : vector<1x1xf32> to vector<1x32xf32>
    %502 = arith.subf %487, %501 : vector<1x32xf32>
    %cst_196 = arith.constant 9.99999974E-6 : f32
    %503 = vector.broadcast %cst_196 : f32 to vector<1x1xf32>
    %504 = arith.addf %500, %503 : vector<1x1xf32>
    %505 = math.rsqrt %504 : vector<1x1xf32>
    %506 = vector.broadcast %505 : vector<1x1xf32> to vector<1x32xf32>
    %507 = arith.mulf %502, %506 : vector<1x32xf32>
    %508 = arith.mulf %507, %488 : vector<1x32xf32>
    %509 = arith.addf %508, %489 : vector<1x32xf32>
    %cst_197 = arith.constant 0.000000e+00 : f32
    %510 = vector.broadcast %cst_197 : f32 to vector<1x32xf32>
    %511 = arith.maximumf %509, %510 : vector<1x32xf32>
    %c67_198 = arith.constant 67 : index
    %c2_199 = arith.constant 2 : index
    %512 = vector.load %arg1[%c67_198, %c2_199] : memref<68x128xf32, #tpu.memory_space<vmem>>, vector<1x1xf32>
    %c66 = arith.constant 66 : index
    %c0_200 = arith.constant 0 : index
    %513 = vector.load %arg1[%c66, %c0_200] : memref<68x128xf32, #tpu.memory_space<vmem>>, vector<1x32xf32>
    %514 = arith.mulf %511, %513 : vector<1x32xf32>
    %cst_201 = arith.constant dense<0.000000e+00> : vector<1xf32>
    %515 = vector.multi_reduction <add>, %514, %cst_201 [1] : vector<1x32xf32> to vector<1xf32>
    %516 = vector.shape_cast %515 : vector<1xf32> to vector<1x1xf32>
    %517 = arith.addf %516, %512 : vector<1x1xf32>
    %518 = math.tanh %517 : vector<1x1xf32>
    %cst_202 = arith.constant 0.000000e+00 : f32
    %519 = vector.broadcast %cst_202 : f32 to vector<8x128xf32>
    %c0_203 = arith.constant 0 : index
    %c0_204 = arith.constant 0 : index
    %520 = vector.load %arg7[%c0_203, %c0_204] : memref<8x128xf32, #tpu.memory_space<vmem>>, vector<8x128xf32>
    tpu.vector_store %arg7[%c0_203, %c0_204], %519 {strides = array<i32>} : memref<8x128xf32, #tpu.memory_space<vmem>>, vector<8x128xf32>,
    %c0_205 = arith.constant 0 : index
    %c0_206 = arith.constant 0 : index
    %521 = vector.load %arg7[%c0_205, %c0_206] : memref<8x128xf32, #tpu.memory_space<vmem>>, vector<5x1xf32>
    tpu.vector_store %arg7[%c0_205, %c0_206], %459 {strides = array<i32>} : memref<8x128xf32, #tpu.memory_space<vmem>>, vector<5x1xf32>,
    %c5 = arith.constant 5 : index
    %c0_207 = arith.constant 0 : index
    %522 = vector.load %arg7[%c5, %c0_207] : memref<8x128xf32, #tpu.memory_space<vmem>>, vector<1x1xf32>
    tpu.vector_store %arg7[%c5, %c0_207], %518 {strides = array<i32>} : memref<8x128xf32, #tpu.memory_space<vmem>>, vector<1x1xf32>,
    return
  }
}

</mosaic_0001>

<llo_original>
// kernel: _forward_impl.1
$region0: #{_forward_impl.1}
  #allocation0 [shape = 'u32[]', space=smem, size = 0x4, offset = 0x4, fixed_abs, tag = 'smem constant byte address 0x4 - core index']
  #allocation1 [shape = 'u32[144,128]{1,0:T(1,128)}', space=vmem, size = 0x12000, scoped, tag = 'internal scratch']
  %s0 = inlined_call_operand.vmem [shape: s32[10,4], index: 0, kind: input, shape index: {}]
  %s1 = inlined_call_operand.vmem [shape: f32[68,128], index: 1, kind: input, shape index: {}]
  %s2 = inlined_call_operand.vmem [shape: bf16[2,32,96], index: 2, kind: input, shape index: {}]
  %s3 = inlined_call_operand.vmem [shape: bf16[2,4,8,32], index: 3, kind: input, shape index: {}]
  %s4 = inlined_call_operand.vmem [shape: bf16[2,32,128], index: 4, kind: input, shape index: {}]
  %s5 = inlined_call_operand.vmem [shape: bf16[2,128,32], index: 5, kind: input, shape index: {}]
  %s6 = inlined_call_operand.vmem [shape: bf16[2,32,32], index: 6, kind: input, shape index: {}]
  %s7 = inlined_call_operand.vmem [shape: f32[8,128], index: 7, kind: output, shape index: {}]
  %s8 = sld [smem:[#allocation0]]
  $region38: #{_forward_impl.1} parent=0
    _
  %s10 = ssub.s32 1, %s8
  %s11 = scalar_select 0, %s10, %s8
  // Predicated region
  $region2: #{_forward_impl.1} parent=0 // pred_check
    _
  $region3: #{_forward_impl.1} parent=0 // pred_check_branch
    %13 = sbr.rel (0) target = $region5
  $region4: #{_forward_impl.1} parent=0 // pred_region
    _
  $region5: #{_forward_impl.1} parent=0 // pred_fallthru
    _
  // Predicated region
  $region6: #{_forward_impl.1} parent=0 // pred_check
    _
  $region7: #{_forward_impl.1} parent=0 // pred_check_branch
    %15 = sbr.rel (0) target = $region9
  $region8: #{_forward_impl.1} parent=0 // pred_region
    _
  $region9: #{_forward_impl.1} parent=0 // pred_fallthru
    _
  // Predicated region
  $region10: #{_forward_impl.1} parent=0 // pred_check
    _
  $region11: #{_forward_impl.1} parent=0 // pred_check_branch
    %17 = sbr.rel (0) target = $region13
  $region12: #{_forward_impl.1} parent=0 // pred_region
    _
  $region13: #{_forward_impl.1} parent=0 // pred_fallthru
    _
  // Predicated region
  $region14: #{_forward_impl.1} parent=0 // pred_check
    _
  $region15: #{_forward_impl.1} parent=0 // pred_check_branch
    %19 = sbr.rel (0) target = $region17
  $region16: #{_forward_impl.1} parent=0 // pred_region
    _
  $region17: #{_forward_impl.1} parent=0 // pred_fallthru
    _
  // Predicated region
  $region18: #{_forward_impl.1} parent=0 // pred_check
    _
  $region19: #{_forward_impl.1} parent=0 // pred_check_branch
    %21 = sbr.rel (0) target = $region21
  $region20: #{_forward_impl.1} parent=0 // pred_region
    _
  $region21: #{_forward_impl.1} parent=0 // pred_fallthru
    _
  // Predicated region
  $region22: #{_forward_impl.1} parent=0 // pred_check
    _
  $region23: #{_forward_impl.1} parent=0 // pred_check_branch
    %23 = sbr.rel (0) target = $region25
  $region24: #{_forward_impl.1} parent=0 // pred_region
    _
  $region25: #{_forward_impl.1} parent=0 // pred_fallthru
    _
  // Predicated region
  $region26: #{_forward_impl.1} parent=0 // pred_check
    _
  $region27: #{_forward_impl.1} parent=0 // pred_check_branch
    %25 = sbr.rel (0) target = $region29
  $region28: #{_forward_impl.1} parent=0 // pred_region
    _
  $region29: #{_forward_impl.1} parent=0 // pred_fallthru
    _
  %v27 = vld [vmem:[%s0] sm:$0xff]
  %v28 = vld [vmem:[%s0 + $0x8] sm:$0x3]
  %v29 = vlaneseq
  %v30 = vand.u32 %v29, 127
  %31 = vset.pattern.permute.xlu0 0
  %32 = vperm.xlu0 %31, %v27
  %v33 = vpop.permute.xlu0 %32
  %34 = vset.pattern.permute.xlu0 0
  %35 = vperm.xlu0 %34, %v28
  %v36 = vpop.permute.xlu0 %35
  %vm37 = vcmp.eq.s32.totalorder %v30, %v33
  %vm38 = vcmp.eq.s32.totalorder %v30, %v36
  %v39 = vsel %vm37, 1, 0
  %v40 = vsel %vm38, 1, 0
  %v41 = vcvt.s32.f32 %v39
  %v42 = vcvt.s32.f32 %v40
  %43 = vset.pattern.permute.xlu0 1
  %44 = vperm.xlu0 %43, %v27
  %v45 = vpop.permute.xlu0 %44
  %46 = vset.pattern.permute.xlu0 1
  %47 = vperm.xlu0 %46, %v28
  %v48 = vpop.permute.xlu0 %47
  %vm49 = vcmp.eq.s32.totalorder %v30, %v45
  %vm50 = vcmp.eq.s32.totalorder %v30, %v48
  %v51 = vsel %vm49, 1, 0
  %v52 = vsel %vm50, 1, 0
  %v53 = vcvt.s32.f32 %v51
  %v54 = vcvt.s32.f32 %v52
  %v55 = vld [vmem:[%s1] sm:$0xff]
  %v56 = vld [vmem:[%s1 + $0x8] sm:$0xff]
  %v57 = vld [vmem:[%s1 + $0x10] sm:$0xff]
  %vm58 = vcmask 64512
  %v60 = vsel %vm58, %v53, 0
  %v63 = vsel %vm58, %v54, 0
  %65 = vmatprep.subr.mxu0 0.0
  %66 = vmatpush1.msra.mxu0 %v57
  %67 = vmatprep.subr.mxu0 0.0
  %68 = vmatpush1.msra.mxu0 0.0
  %69 = vmatprep.subr.mxu0 0.0
  %70 = vmatpush1.msra.mxu0 0.0
  %71 = vmatprep.subr.mxu0 0.0
  %72 = vmatpush1.msra.mxu0 0.0
  %73 = vmatprep.subr.mxu0 0.0
  %74 = vmatpush1.msra.mxu0 0.0
  %75 = vmatprep.subr.mxu0 0.0
  %76 = vmatpush1.msra.mxu0 0.0
  %77 = vmatprep.subr.mxu0 0.0
  %78 = vmatpush1.msra.mxu0 0.0
  %79 = vmatprep.subr.mxu0 0.0
  %80 = vmatpush1.msra.mxu0 0.0
  %81 = vmatprep.subr.mxu0 0.0
  %82 = vmatpush1.msra.mxu0 0.0
  %83 = vmatprep.subr.mxu0 0.0
  %84 = vmatpush1.msra.mxu0 0.0
  %85 = vmatprep.subr.mxu0 0.0
  %86 = vmatpush1.msra.mxu0 0.0
  %87 = vmatprep.subr.mxu0 0.0
  %88 = vmatpush1.msra.mxu0 0.0
  %89 = vmatprep.subr.mxu0 0.0
  %90 = vmatpush1.msra.mxu0 0.0
  %91 = vmatprep.subr.mxu0 0.0
  %92 = vmatpush1.msra.mxu0 0.0
  %93 = vmatprep.subr.mxu0 0.0
  %94 = vmatpush1.msra.mxu0 0.0
  %95 = vmatprep.subr.mxu0 0.0
  %96 = vmatpush1.msra.mxu0 0.0
  %97 = vmatprep.subr.mxu0 0.0
  %98 = vmatpush1.msra.mxu0 0.0
  %99 = vmatprep.subr.mxu0 0.0
  %100 = vmatpush1.msra.mxu0 0.0
  %101 = vmatprep.subr.mxu0 0.0
  %102 = vmatpush1.msra.mxu0 0.0
  %103 = vmatprep.subr.mxu0 0.0
  %104 = vmatpush1.msra.mxu0 0.0
  %105 = vmatprep.subr.mxu0 0.0
  %106 = vmatpush1.msra.mxu0 0.0
  %107 = vmatprep.subr.mxu0 0.0
  %108 = vmatpush1.msra.mxu0 0.0
  %109 = vmatprep.subr.mxu0 0.0
  %110 = vmatpush1.msra.mxu0 0.0
  %111 = vmatprep.subr.mxu0 0.0
  %112 = vmatpush1.msra.mxu0 0.0
  %113 = vmatprep.subr.mxu0 0.0
  %114 = vmatpush1.msra.mxu0 0.0
  %115 = vmatprep.subr.mxu0 0.0
  %116 = vmatpush1.msra.mxu0 0.0
  %117 = vmatprep.subr.mxu0 0.0
  %118 = vmatpush1.msra.mxu0 0.0
  %119 = vmatprep.subr.mxu0 0.0
  %120 = vmatpush1.msra.mxu0 0.0
  %121 = vmatprep.subr.mxu0 0.0
  %122 = vmatpush1.msra.mxu0 0.0
  %123 = vmatprep.subr.mxu0 0.0
  %124 = vmatpush1.msra.mxu0 0.0
  %125 = vmatprep.subr.mxu0 0.0
  %126 = vmatpush1.msra.mxu0 0.0
  %127 = vmatprep.subr.mxu0 0.0
  %128 = vmatpush1.msra.mxu0 0.0
  %129 = vmatprep.mubr.f32.mxu0 0.0
  %130 = vmatmul.mubr.f32.gmra.mrb[0].mxu0 %v60
  %v131 = vpop.f32.mrb[0].mxu0
  %v132 = vadd.f32 0.0, %v131
  %v133 = vpop.f32.mrb[0].mxu0
  %134 = vmatprep.mubr.f32.mxu0 0.0
  %135 = vmatmul.mubr.f32.gmra.mrb[0].mxu0 %v63
  %v136 = vpop.f32.mrb[0].mxu0
  %v137 = vadd.f32 0.0, %v136
  %v138 = vpop.f32.mrb[0].mxu0
  %139 = vdwg.mxu0
  %v140 = vld [vmem:[%s1 + $0x18] sm:$0x3]
  %vm141 = vcmp.eq.s32.totalorder %v27, 1
  %v142 = vsel %vm141, 1, 0
  %143 = vset.pattern.permute.xlu0 2
  %144 = vperm.xlu0 %143, %v142
  %v145 = vpop.permute.xlu0 %144
  %vm146 = vcmp.eq.s32.totalorder %v145, 1
  %v148 = vrot.slane %v140, 1
  %v150 = vsel %vm146, %v148, %v140
  %vm151 = vcmask 130048
  %v153 = vsel %vm151, %v41, 0
  %v156 = vsel %vm151, %v42, 0
  %158 = vmatprep.subr.mxu0 0.0
  %159 = vmatpush1.msra.mxu0 %v55
  %160 = vmatprep.subr.mxu0 0.0
  %161 = vmatpush1.msra.mxu0 %v56
  %162 = vmatprep.subr.mxu0 0.0
  %163 = vmatpush1.msra.mxu0 0.0
  %164 = vmatprep.subr.mxu0 0.0
  %165 = vmatpush1.msra.mxu0 0.0
  %166 = vmatprep.subr.mxu0 0.0
  %167 = vmatpush1.msra.mxu0 0.0
  %168 = vmatprep.subr.mxu0 0.0
  %169 = vmatpush1.msra.mxu0 0.0
  %170 = vmatprep.subr.mxu0 0.0
  %171 = vmatpush1.msra.mxu0 0.0
  %172 = vmatprep.subr.mxu0 0.0
  %173 = vmatpush1.msra.mxu0 0.0
  %174 = vmatprep.subr.mxu0 0.0
  %175 = vmatpush1.msra.mxu0 0.0
  %176 = vmatprep.subr.mxu0 0.0
  %177 = vmatpush1.msra.mxu0 0.0
  %178 = vmatprep.subr.mxu0 0.0
  %179 = vmatpush1.msra.mxu0 0.0
  %180 = vmatprep.subr.mxu0 0.0
  %181 = vmatpush1.msra.mxu0 0.0
  %182 = vmatprep.subr.mxu0 0.0
  %183 = vmatpush1.msra.mxu0 0.0
  %184 = vmatprep.subr.mxu0 0.0
  %185 = vmatpush1.msra.mxu0 0.0
  %186 = vmatprep.subr.mxu0 0.0
  %187 = vmatpush1.msra.mxu0 0.0
  %188 = vmatprep.subr.mxu0 0.0
  %189 = vmatpush1.msra.mxu0 0.0
  %190 = vmatprep.subr.mxu0 0.0
  %191 = vmatpush1.msra.mxu0 0.0
  %192 = vmatprep.subr.mxu0 0.0
  %193 = vmatpush1.msra.mxu0 0.0
  %194 = vmatprep.subr.mxu0 0.0
  %195 = vmatpush1.msra.mxu0 0.0
  %196 = vmatprep.subr.mxu0 0.0
  %197 = vmatpush1.msra.mxu0 0.0
  %198 = vmatprep.subr.mxu0 0.0
  %199 = vmatpush1.msra.mxu0 0.0
  %200 = vmatprep.subr.mxu0 0.0
  %201 = vmatpush1.msra.mxu0 0.0
  %202 = vmatprep.subr.mxu0 0.0
  %203 = vmatpush1.msra.mxu0 0.0
  %204 = vmatprep.subr.mxu0 0.0
  %205 = vmatpush1.msra.mxu0 0.0
  %206 = vmatprep.subr.mxu0 0.0
  %207 = vmatpush1.msra.mxu0 0.0
  %208 = vmatprep.subr.mxu0 0.0
  %209 = vmatpush1.msra.mxu0 0.0
  %210 = vmatprep.subr.mxu0 0.0
  %211 = vmatpush1.msra.mxu0 0.0
  %212 = vmatprep.subr.mxu0 0.0
  %213 = vmatpush1.msra.mxu0 0.0
  %214 = vmatprep.subr.mxu0 0.0
  %215 = vmatpush1.msra.mxu0 0.0
  %216 = vmatprep.subr.mxu0 0.0
  %217 = vmatpush1.msra.mxu0 0.0
  %218 = vmatprep.subr.mxu0 0.0
  %219 = vmatpush1.msra.mxu0 0.0
  %220 = vmatprep.subr.mxu0 0.0
  %221 = vmatpush1.msra.mxu0 0.0
  %222 = vmatprep.mubr.f32.mxu0 0.0
  %223 = vmatmul.mubr.f32.gmra.mrb[0].mxu0 %v153
  %v224 = vpop.f32.mrb[0].mxu0
  %v225 = vadd.f32 %v132, %v224
  %v226 = vpop.f32.mrb[0].mxu0
  %227 = vmatprep.mubr.f32.mxu0 0.0
  %228 = vmatmul.mubr.f32.gmra.mrb[0].mxu0 %v156
  %v229 = vpop.f32.mrb[0].mxu0
  %v230 = vadd.f32 %v137, %v229
  %v231 = vpop.f32.mrb[0].mxu0
  %232 = vdwg.mxu0
  %v233 = vlaneseq
  %v234 = vshrl.u32 %v233, 7
  %v235 = vsub.s32 0, %v234
  %v236 = vrot.slane %v150, %v235
  %v237 = vadd.f32 %v225, %v236
  %v238 = vadd.f32 %v230, %v236
  %v239 = vld [vmem:[%s1 + $0x1a] sm:$0xff]
  %v240 = vld [vmem:[%s1 + $0x22] sm:$0x3]
  %v241 = vadd.f32 %v237, %v239
  %v242 = vadd.f32 %v238, %v240
  %v243 = vld [vmem:[%s1 + $0x24] sm:$0x1]
  %v244 = vld [vmem:[%s1 + $0x25] sm:$0x1]
  %vm245 = vcmask 261120
  %v246 = vsel %vm245, %v241, 0.0
  %247 = vadd.xlane.f32.xlu0 %v246
  %v248 = vpop.xlane.xlu0 %247
  %vm249 = vcmask 254976
  %v250 = vsel %vm249, %v242, 0.0
  %251 = vadd.xlane.f32.xlu0 %v250
  %v252 = vpop.xlane.xlu0 %251
  %v253 = vrcp.pop 32.0
  %v254 = vmul.f32 %v248, %v253
  %v255 = vmul.f32 %v252, %v253
  %v256 = vsub.f32 %v241, %v254
  %v257 = vsub.f32 %v242, %v255
  %v258 = vmul.f32 %v256, %v256
  %v259 = vmul.f32 %v257, %v257
  %v260 = vsel %vm245, %v258, 0.0
  %261 = vadd.xlane.f32.xlu0 %v260
  %v262 = vpop.xlane.xlu0 %261
  %v263 = vsel %vm249, %v259, 0.0
  %264 = vadd.xlane.f32.xlu0 %v263
  %v265 = vpop.xlane.xlu0 %264
  %v266 = vmul.f32 %v262, %v253
  %v267 = vmul.f32 %v265, %v253
  %v268 = vadd.f32 %v266, 1e-05
  %v269 = vadd.f32 %v267, 1e-05
  %v270 = vrsqrt.pop %v268
  %v271 = vrsqrt.pop %v269
  %v272 = vmul.f32 %v256, %v270
  %v273 = vmul.f32 %v257, %v271
  %v274 = vlaneseq
  %v275 = vshrl.u32 %v274, 7
  %v276 = vsub.s32 0, %v275
  %v277 = vrot.slane %v243, %v276
  %v278 = vmul.f32 %v272, %v277
  %v279 = vmul.f32 %v273, %v277
  %v280 = vlaneseq
  %v281 = vshrl.u32 %v280, 7
  %v282 = vsub.s32 0, %v281
  %v283 = vrot.slane %v244, %v282
  %v284 = vadd.f32 %v278, %v283
  %v285 = vadd.f32 %v279, %v283
  %v286 = vpack.c.bf16 %v285, %v284
  %v287 = vld [vmem:[%s2] sm:$0xf]
  %v288 = vld [vmem:[%s2 + $0x4] sm:$0xf]
  %v289 = vld [vmem:[%s2 + $0x8] sm:$0xf]
  %v290 = vld [vmem:[%s2 + $0xc] sm:$0xf]
  %v295 = vunpack.c.l.b16 %v287
  %v296 = vunpack.c.l.b16 %v288
  %v297 = vunpack.c.l.b16 %v289
  %v298 = vunpack.c.l.b16 %v290
  %v299 = vpack.c.b16 %v296, %v295
  %v300 = vpack.c.b16 %v298, %v297
  %v304 = vsel %vm245, %v286, 0
  %306 = vmatprep.subr.bf16.mxu0 0
  %307 = vmatpush1.bf16.msra.mxu0 %v299
  %308 = vmatprep.subr.bf16.mxu0 0
  %309 = vmatpush1.bf16.msra.mxu0 %v300
  %310 = vmatprep.subr.bf16.mxu0 0
  %311 = vmatpush1.bf16.msra.mxu0 0
  %312 = vmatprep.subr.bf16.mxu0 0
  %313 = vmatpush1.bf16.msra.mxu0 0
  %314 = vmatprep.subr.bf16.mxu0 0
  %315 = vmatpush1.bf16.msra.mxu0 0
  %316 = vmatprep.subr.bf16.mxu0 0
  %317 = vmatpush1.bf16.msra.mxu0 0
  %318 = vmatprep.subr.bf16.mxu0 0
  %319 = vmatpush1.bf16.msra.mxu0 0
  %320 = vmatprep.subr.bf16.mxu0 0
  %321 = vmatpush1.bf16.msra.mxu0 0
  %322 = vmatprep.subr.bf16.mxu0 0
  %323 = vmatpush1.bf16.msra.mxu0 0
  %324 = vmatprep.subr.bf16.mxu0 0
  %325 = vmatpush1.bf16.msra.mxu0 0
  %326 = vmatprep.subr.bf16.mxu0 0
  %327 = vmatpush1.bf16.msra.mxu0 0
  %328 = vmatprep.subr.bf16.mxu0 0
  %329 = vmatpush1.bf16.msra.mxu0 0
  %330 = vmatprep.subr.bf16.mxu0 0
  %331 = vmatpush1.bf16.msra.mxu0 0
  %332 = vmatprep.subr.bf16.mxu0 0
  %333 = vmatpush1.bf16.msra.mxu0 0
  %334 = vmatprep.subr.bf16.mxu0 0
  %335 = vmatpush1.bf16.msra.mxu0 0
  %336 = vmatprep.subr.bf16.mxu0 0
  %337 = vmatpush1.bf16.msra.mxu0 0
  %338 = vmatprep.mubr.bf16.mxu0 0
  %339 = vmatmul.mubr.bf16.gmra.mrb[0].mxu0 %v304
  %v340 = vpop.f32.mrb[0].mxu0
  %v341 = vadd.f32 0.0, %v340
  %v342 = vpop.f32.mrb[0].mxu0
  %v343 = vpop.f32.mrb[0].mxu0
  %v344 = vadd.f32 0.0, %v343
  %v345 = vpop.f32.mrb[0].mxu0
  %346 = vdwg.mxu0
  %v347 = vld [vmem:[%s1 + $0x26] sm:$0x1]
  %v348 = vlaneseq
  %v349 = vshrl.u32 %v348, 7
  %v350 = vsub.s32 0, %v349
  %v351 = vrot.slane %v347, %v350
  %v352 = vadd.f32 %v341, %v351
  %v353 = vadd.f32 %v344, %v351
  %v354 = vld [vmem:[%s1 + $0x27] sm:$0x1]
  %v355 = vlaneseq
  %v356 = vshrl.u32 %v355, 7
  %v357 = vsub.s32 0, %v356
  %v358 = vrot.slane %v354, %v357
  %360 = vrot.lane.b32.xlu0 %v358, 32
  %v361 = vpop.permute.xlu0 %360
  %v363 = vadd.f32 %v341, %v361
  %v364 = vadd.f32 %v344, %v361
  %v365 = vld [vmem:[%s1 + $0x28] sm:$0x1]
  %v366 = vlaneseq
  %v367 = vshrl.u32 %v366, 7
  %v368 = vsub.s32 0, %v367
  %v369 = vrot.slane %v365, %v368
  %371 = vrot.lane.b32.xlu0 %v369, 64
  %v372 = vpop.permute.xlu0 %371
  %v374 = vadd.f32 %v341, %v372
  %v375 = vadd.f32 %v344, %v372
  %378 = vrot.lane.b32.xlu0 %v363, 96
  %v379 = vpop.permute.xlu0 %378
  %380 = vrot.lane.b32.xlu0 %v364, 96
  %v381 = vpop.permute.xlu0 %380
  %v383 = vsel %vm58, %v352, 0
  %v386 = vsel %vm58, %v353, 0
  %v388 = vsel %vm58, %v379, 0
  %v390 = vsel %vm58, %v381, 0
  %392 = vmatprep.subr.mxu0 0.0
  %393 = vmatpush1.xpose.msra.mxu0 %v388
  %394 = vmatprep.subr.mxu0 0.0
  %395 = vmatpush1.xpose.msra.mxu0 %v390
  %396 = vmatprep.subr.mxu0 0.0
  %397 = vmatpush1.xpose.msra.mxu0 0.0
  %398 = vmatprep.subr.mxu0 0.0
  %399 = vmatpush1.xpose.msra.mxu0 0.0
  %400 = vmatprep.subr.mxu0 0.0
  %401 = vmatpush1.xpose.msra.mxu0 0.0
  %402 = vmatprep.subr.mxu0 0.0
  %403 = vmatpush1.xpose.msra.mxu0 0.0
  %404 = vmatprep.subr.mxu0 0.0
  %405 = vmatpush1.xpose.msra.mxu0 0.0
  %406 = vmatprep.subr.mxu0 0.0
  %407 = vmatpush1.xpose.msra.mxu0 0.0
  %408 = vmatprep.subr.mxu0 0.0
  %409 = vmatpush1.xpose.msra.mxu0 0.0
  %410 = vmatprep.subr.mxu0 0.0
  %411 = vmatpush1.xpose.msra.mxu0 0.0
  %412 = vmatprep.subr.mxu0 0.0
  %413 = vmatpush1.xpose.msra.mxu0 0.0
  %414 = vmatprep.subr.mxu0 0.0
  %415 = vmatpush1.xpose.msra.mxu0 0.0
  %416 = vmatprep.subr.mxu0 0.0
  %417 = vmatpush1.xpose.msra.mxu0 0.0
  %418 = vmatprep.subr.mxu0 0.0
  %419 = vmatpush1.xpose.msra.mxu0 0.0
  %420 = vmatprep.subr.mxu0 0.0
  %421 = vmatpush1.xpose.msra.mxu0 0.0
  %422 = vmatprep.subr.mxu0 0.0
  %423 = vmatpush1.xpose.msra.mxu0 0.0
  %424 = vmatprep.subr.mxu0 0.0
  %425 = vmatpush1.xpose.msra.mxu0 0.0
  %426 = vmatprep.subr.mxu0 0.0
  %427 = vmatpush1.xpose.msra.mxu0 0.0
  %428 = vmatprep.subr.mxu0 0.0
  %429 = vmatpush1.xpose.msra.mxu0 0.0
  %430 = vmatprep.subr.mxu0 0.0
  %431 = vmatpush1.xpose.msra.mxu0 0.0
  %432 = vmatprep.subr.mxu0 0.0
  %433 = vmatpush1.xpose.msra.mxu0 0.0
  %434 = vmatprep.subr.mxu0 0.0
  %435 = vmatpush1.xpose.msra.mxu0 0.0
  %436 = vmatprep.subr.mxu0 0.0
  %437 = vmatpush1.xpose.msra.mxu0 0.0
  %438 = vmatprep.subr.mxu0 0.0
  %439 = vmatpush1.xpose.msra.mxu0 0.0
  %440 = vmatprep.subr.mxu0 0.0
  %441 = vmatpush1.xpose.msra.mxu0 0.0
  %442 = vmatprep.subr.mxu0 0.0
  %443 = vmatpush1.xpose.msra.mxu0 0.0
  %444 = vmatprep.subr.mxu0 0.0
  %445 = vmatpush1.xpose.msra.mxu0 0.0
  %446 = vmatprep.subr.mxu0 0.0
  %447 = vmatpush1.xpose.msra.mxu0 0.0
  %448 = vmatprep.subr.mxu0 0.0
  %449 = vmatpush1.xpose.msra.mxu0 0.0
  %450 = vmatprep.subr.mxu0 0.0
  %451 = vmatpush1.xpose.msra.mxu0 0.0
  %452 = vmatprep.subr.mxu0 0.0
  %453 = vmatpush1.xpose.msra.mxu0 0.0
  %454 = vmatprep.subr.mxu0 0.0
  %455 = vmatpush1.xpose.msra.mxu0 0.0
  %456 = vmatprep.mubr.f32.mxu0 0.0
  %457 = vmatmul.mubr.f32.gmra.mrb[0].mxu0 %v383
  %v458 = vpop.f32.mrb[0].mxu0
  %v459 = vadd.f32 0.0, %v458
  %v460 = vpop.f32.mrb[0].mxu0
  %461 = vmatprep.mubr.f32.mxu0 0.0
  %462 = vmatmul.mubr.f32.gmra.mrb[0].mxu0 %v386
  %v463 = vpop.f32.mrb[0].mxu0
  %v464 = vadd.f32 0.0, %v463
  %v465 = vpop.f32.mrb[0].mxu0
  %466 = vdwg.mxu0
  %v467 = vmul.f32 %v459, 0.35355338
  %v468 = vmul.f32 %v464, 0.35355338
  %vm469 = vcmask 80896
  %v470 = vsel %vm469, %v467, -inf
  %471 = vmax.xlane.f32.xlu0 %v470
  %v472 = vpop.xlane.xlu0 %471
  %vm473 = vcmask 74752
  %v474 = vsel %vm473, %v468, -inf
  %475 = vmax.xlane.f32.xlu0 %v474
  %v476 = vpop.xlane.xlu0 %475
  %v477 = vsub.f32 %v467, %v472
  %v478 = vsub.f32 %v468, %v476
  %v479 = vmul.f32 %v477, 1.442695
  %v480 = vpow.pop %v479
  %v481 = vmul.f32 %v478, 1.442695
  %v482 = vpow.pop %v481
  %v483 = vsel %vm469, %v480, 0.0
  %484 = vadd.xlane.f32.xlu0 %v483
  %v485 = vpop.xlane.xlu0 %484
  %v486 = vsel %vm473, %v482, 0.0
  %487 = vadd.xlane.f32.xlu0 %v486
  %v488 = vpop.xlane.xlu0 %487
  %v489 = vrcp.pop %v485
  %v490 = vrcp.pop %v488
  %v491 = vmul.f32 %v480, %v489
  %v492 = vmul.f32 %v482, %v490
  %495 = vrot.lane.b32.xlu0 %v374, 64
  %v496 = vpop.permute.xlu0 %495
  %497 = vrot.lane.b32.xlu0 %v375, 64
  %v498 = vpop.permute.xlu0 %497
  %v501 = vsel %vm469, %v491, 0
  %v504 = vsel %vm469, %v492, 0
  %vm506 = vcmask 1041408
  %v507 = vsel %vm506, %v498, 0
  %509 = vmatprep.subr.mxu0 0.0
  %510 = vmatpush1.msra.mxu0 %v496
  %511 = vmatprep.subr.mxu0 0.0
  %512 = vmatpush1.msra.mxu0 %v507
  %513 = vmatprep.subr.mxu0 0.0
  %514 = vmatpush1.msra.mxu0 0.0
  %515 = vmatprep.subr.mxu0 0.0
  %516 = vmatpush1.msra.mxu0 0.0
  %517 = vmatprep.subr.mxu0 0.0
  %518 = vmatpush1.msra.mxu0 0.0
  %519 = vmatprep.subr.mxu0 0.0
  %520 = vmatpush1.msra.mxu0 0.0
  %521 = vmatprep.subr.mxu0 0.0
  %522 = vmatpush1.msra.mxu0 0.0
  %523 = vmatprep.subr.mxu0 0.0
  %524 = vmatpush1.msra.mxu0 0.0
  %525 = vmatprep.subr.mxu0 0.0
  %526 = vmatpush1.msra.mxu0 0.0
  %527 = vmatprep.subr.mxu0 0.0
  %528 = vmatpush1.msra.mxu0 0.0
  %529 = vmatprep.subr.mxu0 0.0
  %530 = vmatpush1.msra.mxu0 0.0
  %531 = vmatprep.subr.mxu0 0.0
  %532 = vmatpush1.msra.mxu0 0.0
  %533 = vmatprep.subr.mxu0 0.0
  %534 = vmatpush1.msra.mxu0 0.0
  %535 = vmatprep.subr.mxu0 0.0
  %536 = vmatpush1.msra.mxu0 0.0
  %537 = vmatprep.subr.mxu0 0.0
  %538 = vmatpush1.msra.mxu0 0.0
  %539 = vmatprep.subr.mxu0 0.0
  %540 = vmatpush1.msra.mxu0 0.0
  %541 = vmatprep.subr.mxu0 0.0
  %542 = vmatpush1.msra.mxu0 0.0
  %543 = vmatprep.subr.mxu0 0.0
  %544 = vmatpush1.msra.mxu0 0.0
  %545 = vmatprep.subr.mxu0 0.0
  %546 = vmatpush1.msra.mxu0 0.0
  %547 = vmatprep.subr.mxu0 0.0
  %548 = vmatpush1.msra.mxu0 0.0
  %549 = vmatprep.subr.mxu0 0.0
  %550 = vmatpush1.msra.mxu0 0.0
  %551 = vmatprep.subr.mxu0 0.0
  %552 = vmatpush1.msra.mxu0 0.0
  %553 = vmatprep.subr.mxu0 0.0
  %554 = vmatpush1.msra.mxu0 0.0
  %555 = vmatprep.subr.mxu0 0.0
  %556 = vmatpush1.msra.mxu0 0.0
  %557 = vmatprep.subr.mxu0 0.0
  %558 = vmatpush1.msra.mxu0 0.0
  %559 = vmatprep.subr.mxu0 0.0
  %560 = vmatpush1.msra.mxu0 0.0
  %561 = vmatprep.subr.mxu0 0.0
  %562 = vmatpush1.msra.mxu0 0.0
  %563 = vmatprep.subr.mxu0 0.0
  %564 = vmatpush1.msra.mxu0 0.0
  %565 = vmatprep.subr.mxu0 0.0
  %566 = vmatpush1.msra.mxu0 0.0
  %567 = vmatprep.subr.mxu0 0.0
  %568 = vmatpush1.msra.mxu0 0.0
  %569 = vmatprep.subr.mxu0 0.0
  %570 = vmatpush1.msra.mxu0 0.0
  %571 = vmatprep.subr.mxu0 0.0
  %572 = vmatpush1.msra.mxu0 0.0
  %573 = vmatprep.mubr.f32.mxu0 0.0
  %574 = vmatmul.mubr.f32.gmra.mrb[0].mxu0 %v501
  %v575 = vpop.f32.mrb[0].mxu0
  %v576 = vadd.f32 0.0, %v575
  %v577 = vpop.f32.mrb[0].mxu0
  %578 = vmatprep.mubr.f32.mxu0 0.0
  %579 = vmatmul.mubr.f32.gmra.mrb[0].mxu0 %v504
  %v580 = vpop.f32.mrb[0].mxu0
  %v581 = vadd.f32 0.0, %v580
  %v582 = vpop.f32.mrb[0].mxu0
  %583 = vdwg.mxu0
  %v584 = vpack.c.bf16 %v581, %v576
  %v585 = vld [vmem:[%s3] sm:$0xf]
  %586 = vrot.lane.b32.xlu0 %v352, 120
  %v587 = vpop.permute.xlu0 %586
  %588 = vrot.lane.b32.xlu0 %v353, 120
  %v589 = vpop.permute.xlu0 %588
  %590 = vrot.lane.b32.xlu0 %v363, 88
  %v591 = vpop.permute.xlu0 %590
  %592 = vrot.lane.b32.xlu0 %v364, 88
  %v593 = vpop.permute.xlu0 %592
  %v594 = vsel %vm58, %v587, 0
  %v596 = vsel %vm58, %v589, 0
  %v598 = vsel %vm58, %v591, 0
  %v600 = vsel %vm58, %v593, 0
  %602 = vmatprep.subr.mxu0 0.0
  %603 = vmatpush1.xpose.msra.mxu0 %v598
  %604 = vmatprep.subr.mxu0 0.0
  %605 = vmatpush1.xpose.msra.mxu0 %v600
  %606 = vmatprep.subr.mxu0 0.0
  %607 = vmatpush1.xpose.msra.mxu0 0.0
  %608 = vmatprep.subr.mxu0 0.0
  %609 = vmatpush1.xpose.msra.mxu0 0.0
  %610 = vmatprep.subr.mxu0 0.0
  %611 = vmatpush1.xpose.msra.mxu0 0.0
  %612 = vmatprep.subr.mxu0 0.0
  %613 = vmatpush1.xpose.msra.mxu0 0.0
  %614 = vmatprep.subr.mxu0 0.0
  %615 = vmatpush1.xpose.msra.mxu0 0.0
  %616 = vmatprep.subr.mxu0 0.0
  %617 = vmatpush1.xpose.msra.mxu0 0.0
  %618 = vmatprep.subr.mxu0 0.0
  %619 = vmatpush1.xpose.msra.mxu0 0.0
  %620 = vmatprep.subr.mxu0 0.0
  %621 = vmatpush1.xpose.msra.mxu0 0.0
  %622 = vmatprep.subr.mxu0 0.0
  %623 = vmatpush1.xpose.msra.mxu0 0.0
  %624 = vmatprep.subr.mxu0 0.0
  %625 = vmatpush1.xpose.msra.mxu0 0.0
  %626 = vmatprep.subr.mxu0 0.0
  %627 = vmatpush1.xpose.msra.mxu0 0.0
  %628 = vmatprep.subr.mxu0 0.0
  %629 = vmatpush1.xpose.msra.mxu0 0.0
  %630 = vmatprep.subr.mxu0 0.0
  %631 = vmatpush1.xpose.msra.mxu0 0.0
  %632 = vmatprep.subr.mxu0 0.0
  %633 = vmatpush1.xpose.msra.mxu0 0.0
  %634 = vmatprep.subr.mxu0 0.0
  %635 = vmatpush1.xpose.msra.mxu0 0.0
  %636 = vmatprep.subr.mxu0 0.0
  %637 = vmatpush1.xpose.msra.mxu0 0.0
  %638 = vmatprep.subr.mxu0 0.0
  %639 = vmatpush1.xpose.msra.mxu0 0.0
  %640 = vmatprep.subr.mxu0 0.0
  %641 = vmatpush1.xpose.msra.mxu0 0.0
  %642 = vmatprep.subr.mxu0 0.0
  %643 = vmatpush1.xpose.msra.mxu0 0.0
  %644 = vmatprep.subr.mxu0 0.0
  %645 = vmatpush1.xpose.msra.mxu0 0.0
  %646 = vmatprep.subr.mxu0 0.0
  %647 = vmatpush1.xpose.msra.mxu0 0.0
  %648 = vmatprep.subr.mxu0 0.0
  %649 = vmatpush1.xpose.msra.mxu0 0.0
  %650 = vmatprep.subr.mxu0 0.0
  %651 = vmatpush1.xpose.msra.mxu0 0.0
  %652 = vmatprep.subr.mxu0 0.0
  %653 = vmatpush1.xpose.msra.mxu0 0.0
  %654 = vmatprep.subr.mxu0 0.0
  %655 = vmatpush1.xpose.msra.mxu0 0.0
  %656 = vmatprep.subr.mxu0 0.0
  %657 = vmatpush1.xpose.msra.mxu0 0.0
  %658 = vmatprep.subr.mxu0 0.0
  %659 = vmatpush1.xpose.msra.mxu0 0.0
  %660 = vmatprep.subr.mxu0 0.0
  %661 = vmatpush1.xpose.msra.mxu0 0.0
  %662 = vmatprep.subr.mxu0 0.0
  %663 = vmatpush1.xpose.msra.mxu0 0.0
  %664 = vmatprep.subr.mxu0 0.0
  %665 = vmatpush1.xpose.msra.mxu0 0.0
  %666 = vmatprep.mubr.f32.mxu0 0.0
  %667 = vmatmul.mubr.f32.gmra.mrb[0].mxu0 %v594
  %v668 = vpop.f32.mrb[0].mxu0
  %v669 = vadd.f32 0.0, %v668
  %v670 = vpop.f32.mrb[0].mxu0
  %671 = vmatprep.mubr.f32.mxu0 0.0
  %672 = vmatmul.mubr.f32.gmra.mrb[0].mxu0 %v596
  %v673 = vpop.f32.mrb[0].mxu0
  %v674 = vadd.f32 0.0, %v673
  %v675 = vpop.f32.mrb[0].mxu0
  %676 = vdwg.mxu0
  %v677 = vmul.f32 %v669, 0.35355338
  %v678 = vmul.f32 %v674, 0.35355338
  %v679 = vsel %vm469, %v677, -inf
  %680 = vmax.xlane.f32.xlu0 %v679
  %v681 = vpop.xlane.xlu0 %680
  %v682 = vsel %vm473, %v678, -inf
  %683 = vmax.xlane.f32.xlu0 %v682
  %v684 = vpop.xlane.xlu0 %683
  %v685 = vsub.f32 %v677, %v681
  %v686 = vsub.f32 %v678, %v684
  %v687 = vmul.f32 %v685, 1.442695
  %v688 = vpow.pop %v687
  %v689 = vmul.f32 %v686, 1.442695
  %v690 = vpow.pop %v689
  %v691 = vsel %vm469, %v688, 0.0
  %692 = vadd.xlane.f32.xlu0 %v691
  %v693 = vpop.xlane.xlu0 %692
  %v694 = vsel %vm473, %v690, 0.0
  %695 = vadd.xlane.f32.xlu0 %v694
  %v696 = vpop.xlane.xlu0 %695
  %v697 = vrcp.pop %v693
  %v698 = vrcp.pop %v696
  %v699 = vmul.f32 %v688, %v697
  %v700 = vmul.f32 %v690, %v698
  %701 = vrot.lane.b32.xlu0 %v374, 56
  %v702 = vpop.permute.xlu0 %701
  %703 = vrot.lane.b32.xlu0 %v375, 56
  %v704 = vpop.permute.xlu0 %703
  %v707 = vsel %vm469, %v699, 0
  %v710 = vsel %vm469, %v700, 0
  %v712 = vsel %vm506, %v704, 0
  %714 = vmatprep.subr.mxu0 0.0
  %715 = vmatpush1.msra.mxu0 %v702
  %716 = vmatprep.subr.mxu0 0.0
  %717 = vmatpush1.msra.mxu0 %v712
  %718 = vmatprep.subr.mxu0 0.0
  %719 = vmatpush1.msra.mxu0 0.0
  %720 = vmatprep.subr.mxu0 0.0
  %721 = vmatpush1.msra.mxu0 0.0
  %722 = vmatprep.subr.mxu0 0.0
  %723 = vmatpush1.msra.mxu0 0.0
  %724 = vmatprep.subr.mxu0 0.0
  %725 = vmatpush1.msra.mxu0 0.0
  %726 = vmatprep.subr.mxu0 0.0
  %727 = vmatpush1.msra.mxu0 0.0
  %728 = vmatprep.subr.mxu0 0.0
  %729 = vmatpush1.msra.mxu0 0.0
  %730 = vmatprep.subr.mxu0 0.0
  %731 = vmatpush1.msra.mxu0 0.0
  %732 = vmatprep.subr.mxu0 0.0
  %733 = vmatpush1.msra.mxu0 0.0
  %734 = vmatprep.subr.mxu0 0.0
  %735 = vmatpush1.msra.mxu0 0.0
  %736 = vmatprep.subr.mxu0 0.0
  %737 = vmatpush1.msra.mxu0 0.0
  %738 = vmatprep.subr.mxu0 0.0
  %739 = vmatpush1.msra.mxu0 0.0
  %740 = vmatprep.subr.mxu0 0.0
  %741 = vmatpush1.msra.mxu0 0.0
  %742 = vmatprep.subr.mxu0 0.0
  %743 = vmatpush1.msra.mxu0 0.0
  %744 = vmatprep.subr.mxu0 0.0
  %745 = vmatpush1.msra.mxu0 0.0
  %746 = vmatprep.subr.mxu0 0.0
  %747 = vmatpush1.msra.mxu0 0.0
  %748 = vmatprep.subr.mxu0 0.0
  %749 = vmatpush1.msra.mxu0 0.0
  %750 = vmatprep.subr.mxu0 0.0
  %751 = vmatpush1.msra.mxu0 0.0
  %752 = vmatprep.subr.mxu0 0.0
  %753 = vmatpush1.msra.mxu0 0.0
  %754 = vmatprep.subr.mxu0 0.0
  %755 = vmatpush1.msra.mxu0 0.0
  %756 = vmatprep.subr.mxu0 0.0
  %757 = vmatpush1.msra.mxu0 0.0
  %758 = vmatprep.subr.mxu0 0.0
  %759 = vmatpush1.msra.mxu0 0.0
  %760 = vmatprep.subr.mxu0 0.0
  %761 = vmatpush1.msra.mxu0 0.0
  %762 = vmatprep.subr.mxu0 0.0
  %763 = vmatpush1.msra.mxu0 0.0
  %764 = vmatprep.subr.mxu0 0.0
  %765 = vmatpush1.msra.mxu0 0.0
  %766 = vmatprep.subr.mxu0 0.0
  %767 = vmatpush1.msra.mxu0 0.0
  %768 = vmatprep.subr.mxu0 0.0
  %769 = vmatpush1.msra.mxu0 0.0
  %770 = vmatprep.subr.mxu0 0.0
  %771 = vmatpush1.msra.mxu0 0.0
  %772 = vmatprep.subr.mxu0 0.0
  %773 = vmatpush1.msra.mxu0 0.0
  %774 = vmatprep.subr.mxu0 0.0
  %775 = vmatpush1.msra.mxu0 0.0
  %776 = vmatprep.subr.mxu0 0.0
  %777 = vmatpush1.msra.mxu0 0.0
  %778 = vmatprep.mubr.f32.mxu0 0.0
  %779 = vmatmul.mubr.f32.gmra.mrb[0].mxu0 %v707
  %v780 = vpop.f32.mrb[0].mxu0
  %v781 = vadd.f32 0.0, %v780
  %v782 = vpop.f32.mrb[0].mxu0
  %783 = vmatprep.mubr.f32.mxu0 0.0
  %784 = vmatmul.mubr.f32.gmra.mrb[0].mxu0 %v710
  %v785 = vpop.f32.mrb[0].mxu0
  %v786 = vadd.f32 0.0, %v785
  %v787 = vpop.f32.mrb[0].mxu0
  %788 = vdwg.mxu0
  %v789 = vpack.c.bf16 %v786, %v781
  %s790 = scalar_lea.vmem %s3, 4
  %v791 = vld [vmem:[%s790] sm:$0xf]
  %v793 = vsel %vm58, %v789, 0
  %vm795 = vcmask 1043456
  %v797 = vsel %vm795, %v791, 0
  %799 = vmatprep.subr.bf16.mxu0 0
  %800 = vmatpush1.bf16.msra.mxu0 %v797
  %801 = vmatprep.subr.bf16.mxu0 0
  %802 = vmatpush1.bf16.msra.mxu0 0
  %803 = vmatprep.subr.bf16.mxu0 0
  %804 = vmatpush1.bf16.msra.mxu0 0
  %805 = vmatprep.subr.bf16.mxu0 0
  %806 = vmatpush1.bf16.msra.mxu0 0
  %807 = vmatprep.subr.bf16.mxu0 0
  %808 = vmatpush1.bf16.msra.mxu0 0
  %809 = vmatprep.subr.bf16.mxu0 0
  %810 = vmatpush1.bf16.msra.mxu0 0
  %811 = vmatprep.subr.bf16.mxu0 0
  %812 = vmatpush1.bf16.msra.mxu0 0
  %813 = vmatprep.subr.bf16.mxu0 0
  %814 = vmatpush1.bf16.msra.mxu0 0
  %815 = vmatprep.subr.bf16.mxu0 0
  %816 = vmatpush1.bf16.msra.mxu0 0
  %817 = vmatprep.subr.bf16.mxu0 0
  %818 = vmatpush1.bf16.msra.mxu0 0
  %819 = vmatprep.subr.bf16.mxu0 0
  %820 = vmatpush1.bf16.msra.mxu0 0
  %821 = vmatprep.subr.bf16.mxu0 0
  %822 = vmatpush1.bf16.msra.mxu0 0
  %823 = vmatprep.subr.bf16.mxu0 0
  %824 = vmatpush1.bf16.msra.mxu0 0
  %825 = vmatprep.subr.bf16.mxu0 0
  %826 = vmatpush1.bf16.msra.mxu0 0
  %827 = vmatprep.subr.bf16.mxu0 0
  %828 = vmatpush1.bf16.msra.mxu0 0
  %829 = vmatprep.subr.bf16.mxu0 0
  %830 = vmatpush1.bf16.msra.mxu0 0
  %831 = vmatprep.mubr.bf16.mxu0 0
  %832 = vmatmul.mubr.bf16.gmra.mrb[0].mxu0 %v793
  %v833 = vpop.f32.mrb[0].mxu0
  %v834 = vadd.f32 0.0, %v833
  %v835 = vpop.f32.mrb[0].mxu0
  %v836 = vpop.f32.mrb[0].mxu0
  %v837 = vadd.f32 0.0, %v836
  %v838 = vpop.f32.mrb[0].mxu0
  %839 = vdwg.mxu0
  %v841 = vsel %vm58, %v584, 0
  %v844 = vsel %vm795, %v585, 0
  %846 = vmatprep.subr.bf16.mxu0 0
  %847 = vmatpush1.bf16.msra.mxu0 %v844
  %848 = vmatprep.subr.bf16.mxu0 0
  %849 = vmatpush1.bf16.msra.mxu0 0
  %850 = vmatprep.subr.bf16.mxu0 0
  %851 = vmatpush1.bf16.msra.mxu0 0
  %852 = vmatprep.subr.bf16.mxu0 0
  %853 = vmatpush1.bf16.msra.mxu0 0
  %854 = vmatprep.subr.bf16.mxu0 0
  %855 = vmatpush1.bf16.msra.mxu0 0
  %856 = vmatprep.subr.bf16.mxu0 0
  %857 = vmatpush1.bf16.msra.mxu0 0
  %858 = vmatprep.subr.bf16.mxu0 0
  %859 = vmatpush1.bf16.msra.mxu0 0
  %860 = vmatprep.subr.bf16.mxu0 0
  %861 = vmatpush1.bf16.msra.mxu0 0
  %862 = vmatprep.subr.bf16.mxu0 0
  %863 = vmatpush1.bf16.msra.mxu0 0
  %864 = vmatprep.subr.bf16.mxu0 0
  %865 = vmatpush1.bf16.msra.mxu0 0
  %866 = vmatprep.subr.bf16.mxu0 0
  %867 = vmatpush1.bf16.msra.mxu0 0
  %868 = vmatprep.subr.bf16.mxu0 0
  %869 = vmatpush1.bf16.msra.mxu0 0
  %870 = vmatprep.subr.bf16.mxu0 0
  %871 = vmatpush1.bf16.msra.mxu0 0
  %872 = vmatprep.subr.bf16.mxu0 0
  %873 = vmatpush1.bf16.msra.mxu0 0
  %874 = vmatprep.subr.bf16.mxu0 0
  %875 = vmatpush1.bf16.msra.mxu0 0
  %876 = vmatprep.subr.bf16.mxu0 0
  %877 = vmatpush1.bf16.msra.mxu0 0
  %878 = vmatprep.mubr.bf16.mxu0 0
  %879 = vmatmul.mubr.bf16.gmra.mrb[0].mxu0 %v841
  %v880 = vpop.f32.mrb[0].mxu0
  %v881 = vadd.f32 %v834, %v880
  %v882 = vpop.f32.mrb[0].mxu0
  %v883 = vpop.f32.mrb[0].mxu0
  %v884 = vadd.f32 %v837, %v883
  %v885 = vpop.f32.mrb[0].mxu0
  %886 = vdwg.mxu0
  %887 = vrot.lane.b32.xlu0 %v352, 112
  %v888 = vpop.permute.xlu0 %887
  %889 = vrot.lane.b32.xlu0 %v353, 112
  %v890 = vpop.permute.xlu0 %889
  %891 = vrot.lane.b32.xlu0 %v363, 80
  %v892 = vpop.permute.xlu0 %891
  %893 = vrot.lane.b32.xlu0 %v364, 80
  %v894 = vpop.permute.xlu0 %893
  %v895 = vsel %vm58, %v888, 0
  %v897 = vsel %vm58, %v890, 0
  %v899 = vsel %vm58, %v892, 0
  %v901 = vsel %vm58, %v894, 0
  %903 = vmatprep.subr.mxu0 0.0
  %904 = vmatpush1.xpose.msra.mxu0 %v899
  %905 = vmatprep.subr.mxu0 0.0
  %906 = vmatpush1.xpose.msra.mxu0 %v901
  %907 = vmatprep.subr.mxu0 0.0
  %908 = vmatpush1.xpose.msra.mxu0 0.0
  %909 = vmatprep.subr.mxu0 0.0
  %910 = vmatpush1.xpose.msra.mxu0 0.0
  %911 = vmatprep.subr.mxu0 0.0
  %912 = vmatpush1.xpose.msra.mxu0 0.0
  %913 = vmatprep.subr.mxu0 0.0
  %914 = vmatpush1.xpose.msra.mxu0 0.0
  %915 = vmatprep.subr.mxu0 0.0
  %916 = vmatpush1.xpose.msra.mxu0 0.0
  %917 = vmatprep.subr.mxu0 0.0
  %918 = vmatpush1.xpose.msra.mxu0 0.0
  %919 = vmatprep.subr.mxu0 0.0
  %920 = vmatpush1.xpose.msra.mxu0 0.0
  %921 = vmatprep.subr.mxu0 0.0
  %922 = vmatpush1.xpose.msra.mxu0 0.0
  %923 = vmatprep.subr.mxu0 0.0
  %924 = vmatpush1.xpose.msra.mxu0 0.0
  %925 = vmatprep.subr.mxu0 0.0
  %926 = vmatpush1.xpose.msra.mxu0 0.0
  %927 = vmatprep.subr.mxu0 0.0
  %928 = vmatpush1.xpose.msra.mxu0 0.0
  %929 = vmatprep.subr.mxu0 0.0
  %930 = vmatpush1.xpose.msra.mxu0 0.0
  %931 = vmatprep.subr.mxu0 0.0
  %932 = vmatpush1.xpose.msra.mxu0 0.0
  %933 = vmatprep.subr.mxu0 0.0
  %934 = vmatpush1.xpose.msra.mxu0 0.0
  %935 = vmatprep.subr.mxu0 0.0
  %936 = vmatpush1.xpose.msra.mxu0 0.0
  %937 = vmatprep.subr.mxu0 0.0
  %938 = vmatpush1.xpose.msra.mxu0 0.0
  %939 = vmatprep.subr.mxu0 0.0
  %940 = vmatpush1.xpose.msra.mxu0 0.0
  %941 = vmatprep.subr.mxu0 0.0
  %942 = vmatpush1.xpose.msra.mxu0 0.0
  %943 = vmatprep.subr.mxu0 0.0
  %944 = vmatpush1.xpose.msra.mxu0 0.0
  %945 = vmatprep.subr.mxu0 0.0
  %946 = vmatpush1.xpose.msra.mxu0 0.0
  %947 = vmatprep.subr.mxu0 0.0
  %948 = vmatpush1.xpose.msra.mxu0 0.0
  %949 = vmatprep.subr.mxu0 0.0
  %950 = vmatpush1.xpose.msra.mxu0 0.0
  %951 = vmatprep.subr.mxu0 0.0
  %952 = vmatpush1.xpose.msra.mxu0 0.0
  %953 = vmatprep.subr.mxu0 0.0
  %954 = vmatpush1.xpose.msra.mxu0 0.0
  %955 = vmatprep.subr.mxu0 0.0
  %956 = vmatpush1.xpose.msra.mxu0 0.0
  %957 = vmatprep.subr.mxu0 0.0
  %958 = vmatpush1.xpose.msra.mxu0 0.0
  %959 = vmatprep.subr.mxu0 0.0
  %960 = vmatpush1.xpose.msra.mxu0 0.0
  %961 = vmatprep.subr.mxu0 0.0
  %962 = vmatpush1.xpose.msra.mxu0 0.0
  %963 = vmatprep.subr.mxu0 0.0
  %964 = vmatpush1.xpose.msra.mxu0 0.0
  %965 = vmatprep.subr.mxu0 0.0
  %966 = vmatpush1.xpose.msra.mxu0 0.0
  %967 = vmatprep.mubr.f32.mxu0 0.0
  %968 = vmatmul.mubr.f32.gmra.mrb[0].mxu0 %v895
  %v969 = vpop.f32.mrb[0].mxu0
  %v970 = vadd.f32 0.0, %v969
  %v971 = vpop.f32.mrb[0].mxu0
  %972 = vmatprep.mubr.f32.mxu0 0.0
  %973 = vmatmul.mubr.f32.gmra.mrb[0].mxu0 %v897
  %v974 = vpop.f32.mrb[0].mxu0
  %v975 = vadd.f32 0.0, %v974
  %v976 = vpop.f32.mrb[0].mxu0
  %977 = vdwg.mxu0
  %v978 = vmul.f32 %v970, 0.35355338
  %v979 = vmul.f32 %v975, 0.35355338
  %v980 = vsel %vm469, %v978, -inf
  %981 = vmax.xlane.f32.xlu0 %v980
  %v982 = vpop.xlane.xlu0 %981
  %v983 = vsel %vm473, %v979, -inf
  %984 = vmax.xlane.f32.xlu0 %v983
  %v985 = vpop.xlane.xlu0 %984
  %v986 = vsub.f32 %v978, %v982
  %v987 = vsub.f32 %v979, %v985
  %v988 = vmul.f32 %v986, 1.442695
  %v989 = vpow.pop %v988
  %v990 = vmul.f32 %v987, 1.442695
  %v991 = vpow.pop %v990
  %v992 = vsel %vm469, %v989, 0.0
  %993 = vadd.xlane.f32.xlu0 %v992
  %v994 = vpop.xlane.xlu0 %993
  %v995 = vsel %vm473, %v991, 0.0
  %996 = vadd.xlane.f32.xlu0 %v995
  %v997 = vpop.xlane.xlu0 %996
  %v998 = vrcp.pop %v994
  %v999 = vrcp.pop %v997
  %v1000 = vmul.f32 %v989, %v998
  %v1001 = vmul.f32 %v991, %v999
  %1002 = vrot.lane.b32.xlu0 %v374, 48
  %v1003 = vpop.permute.xlu0 %1002
  %1004 = vrot.lane.b32.xlu0 %v375, 48
  %v1005 = vpop.permute.xlu0 %1004
  %v1008 = vsel %vm469, %v1000, 0
  %v1011 = vsel %vm469, %v1001, 0
  %v1013 = vsel %vm506, %v1005, 0
  %1015 = vmatprep.subr.mxu0 0.0
  %1016 = vmatpush1.msra.mxu0 %v1003
  %1017 = vmatprep.subr.mxu0 0.0
  %1018 = vmatpush1.msra.mxu0 %v1013
  %1019 = vmatprep.subr.mxu0 0.0
  %1020 = vmatpush1.msra.mxu0 0.0
  %1021 = vmatprep.subr.mxu0 0.0
  %1022 = vmatpush1.msra.mxu0 0.0
  %1023 = vmatprep.subr.mxu0 0.0
  %1024 = vmatpush1.msra.mxu0 0.0
  %1025 = vmatprep.subr.mxu0 0.0
  %1026 = vmatpush1.msra.mxu0 0.0
  %1027 = vmatprep.subr.mxu0 0.0
  %1028 = vmatpush1.msra.mxu0 0.0
  %1029 = vmatprep.subr.mxu0 0.0
  %1030 = vmatpush1.msra.mxu0 0.0
  %1031 = vmatprep.subr.mxu0 0.0
  %1032 = vmatpush1.msra.mxu0 0.0
  %1033 = vmatprep.subr.mxu0 0.0
  %1034 = vmatpush1.msra.mxu0 0.0
  %1035 = vmatprep.subr.mxu0 0.0
  %1036 = vmatpush1.msra.mxu0 0.0
  %1037 = vmatprep.subr.mxu0 0.0
  %1038 = vmatpush1.msra.mxu0 0.0
  %1039 = vmatprep.subr.mxu0 0.0
  %1040 = vmatpush1.msra.mxu0 0.0
  %1041 = vmatprep.subr.mxu0 0.0
  %1042 = vmatpush1.msra.mxu0 0.0
  %1043 = vmatprep.subr.mxu0 0.0
  %1044 = vmatpush1.msra.mxu0 0.0
  %1045 = vmatprep.subr.mxu0 0.0
  %1046 = vmatpush1.msra.mxu0 0.0
  %1047 = vmatprep.subr.mxu0 0.0
  %1048 = vmatpush1.msra.mxu0 0.0
  %1049 = vmatprep.subr.mxu0 0.0
  %1050 = vmatpush1.msra.mxu0 0.0
  %1051 = vmatprep.subr.mxu0 0.0
  %1052 = vmatpush1.msra.mxu0 0.0
  %1053 = vmatprep.subr.mxu0 0.0
  %1054 = vmatpush1.msra.mxu0 0.0
  %1055 = vmatprep.subr.mxu0 0.0
  %1056 = vmatpush1.msra.mxu0 0.0
  %1057 = vmatprep.subr.mxu0 0.0
  %1058 = vmatpush1.msra.mxu0 0.0
  %1059 = vmatprep.subr.mxu0 0.0
  %1060 = vmatpush1.msra.mxu0 0.0
  %1061 = vmatprep.subr.mxu0 0.0
  %1062 = vmatpush1.msra.mxu0 0.0
  %1063 = vmatprep.subr.mxu0 0.0
  %1064 = vmatpush1.msra.mxu0 0.0
  %1065 = vmatprep.subr.mxu0 0.0
  %1066 = vmatpush1.msra.mxu0 0.0
  %1067 = vmatprep.subr.mxu0 0.0
  %1068 = vmatpush1.msra.mxu0 0.0
  %1069 = vmatprep.subr.mxu0 0.0
  %1070 = vmatpush1.msra.mxu0 0.0
  %1071 = vmatprep.subr.mxu0 0.0
  %1072 = vmatpush1.msra.mxu0 0.0
  %1073 = vmatprep.subr.mxu0 0.0
  %1074 = vmatpush1.msra.mxu0 0.0
  %1075 = vmatprep.subr.mxu0 0.0
  %1076 = vmatpush1.msra.mxu0 0.0
  %1077 = vmatprep.subr.mxu0 0.0
  %1078 = vmatpush1.msra.mxu0 0.0
  %1079 = vmatprep.mubr.f32.mxu0 0.0
  %1080 = vmatmul.mubr.f32.gmra.mrb[0].mxu0 %v1008
  %v1081 = vpop.f32.mrb[0].mxu0
  %v1082 = vadd.f32 0.0, %v1081
  %v1083 = vpop.f32.mrb[0].mxu0
  %1084 = vmatprep.mubr.f32.mxu0 0.0
  %1085 = vmatmul.mubr.f32.gmra.mrb[0].mxu0 %v1011
  %v1086 = vpop.f32.mrb[0].mxu0
  %v1087 = vadd.f32 0.0, %v1086
  %v1088 = vpop.f32.mrb[0].mxu0
  %1089 = vdwg.mxu0
  %v1090 = vpack.c.bf16 %v1087, %v1082
  %s1091 = scalar_lea.vmem %s3, 8
  %v1092 = vld [vmem:[%s1091] sm:$0xf]
  %v1094 = vsel %vm58, %v1090, 0
  %v1097 = vsel %vm795, %v1092, 0
  %1099 = vmatprep.subr.bf16.mxu0 0
  %1100 = vmatpush1.bf16.msra.mxu0 %v1097
  %1101 = vmatprep.subr.bf16.mxu0 0
  %1102 = vmatpush1.bf16.msra.mxu0 0
  %1103 = vmatprep.subr.bf16.mxu0 0
  %1104 = vmatpush1.bf16.msra.mxu0 0
  %1105 = vmatprep.subr.bf16.mxu0 0
  %1106 = vmatpush1.bf16.msra.mxu0 0
  %1107 = vmatprep.subr.bf16.mxu0 0
  %1108 = vmatpush1.bf16.msra.mxu0 0
  %1109 = vmatprep.subr.bf16.mxu0 0
  %1110 = vmatpush1.bf16.msra.mxu0 0
  %1111 = vmatprep.subr.bf16.mxu0 0
  %1112 = vmatpush1.bf16.msra.mxu0 0
  %1113 = vmatprep.subr.bf16.mxu0 0
  %1114 = vmatpush1.bf16.msra.mxu0 0
  %1115 = vmatprep.subr.bf16.mxu0 0
  %1116 = vmatpush1.bf16.msra.mxu0 0
  %1117 = vmatprep.subr.bf16.mxu0 0
  %1118 = vmatpush1.bf16.msra.mxu0 0
  %1119 = vmatprep.subr.bf16.mxu0 0
  %1120 = vmatpush1.bf16.msra.mxu0 0
  %1121 = vmatprep.subr.bf16.mxu0 0
  %1122 = vmatpush1.bf16.msra.mxu0 0
  %1123 = vmatprep.subr.bf16.mxu0 0
  %1124 = vmatpush1.bf16.msra.mxu0 0
  %1125 = vmatprep.subr.bf16.mxu0 0
  %1126 = vmatpush1.bf16.msra.mxu0 0
  %1127 = vmatprep.subr.bf16.mxu0 0
  %1128 = vmatpush1.bf16.msra.mxu0 0
  %1129 = vmatprep.subr.bf16.mxu0 0
  %1130 = vmatpush1.bf16.msra.mxu0 0
  %1131 = vmatprep.mubr.bf16.mxu0 0
  %1132 = vmatmul.mubr.bf16.gmra.mrb[0].mxu0 %v1094
  %v1133 = vpop.f32.mrb[0].mxu0
  %v1134 = vadd.f32 0.0, %v1133
  %v1135 = vpop.f32.mrb[0].mxu0
  %v1136 = vpop.f32.mrb[0].mxu0
  %v1137 = vadd.f32 0.0, %v1136
  %v1138 = vpop.f32.mrb[0].mxu0
  %1139 = vdwg.mxu0
  %v1140 = vadd.f32 %v881, %v1134
  %v1141 = vadd.f32 %v884, %v1137
  %1142 = vrot.lane.b32.xlu0 %v352, 104
  %v1143 = vpop.permute.xlu0 %1142
  %1144 = vrot.lane.b32.xlu0 %v353, 104
  %v1145 = vpop.permute.xlu0 %1144
  %1146 = vrot.lane.b32.xlu0 %v363, 72
  %v1147 = vpop.permute.xlu0 %1146
  %1148 = vrot.lane.b32.xlu0 %v364, 72
  %v1149 = vpop.permute.xlu0 %1148
  %v1150 = vsel %vm58, %v1143, 0
  %v1152 = vsel %vm58, %v1145, 0
  %v1154 = vsel %vm58, %v1147, 0
  %v1156 = vsel %vm58, %v1149, 0
  %1158 = vmatprep.subr.mxu0 0.0
  %1159 = vmatpush1.xpose.msra.mxu0 %v1154
  %1160 = vmatprep.subr.mxu0 0.0
  %1161 = vmatpush1.xpose.msra.mxu0 %v1156
  %1162 = vmatprep.subr.mxu0 0.0
  %1163 = vmatpush1.xpose.msra.mxu0 0.0
  %1164 = vmatprep.subr.mxu0 0.0
  %1165 = vmatpush1.xpose.msra.mxu0 0.0
  %1166 = vmatprep.subr.mxu0 0.0
  %1167 = vmatpush1.xpose.msra.mxu0 0.0
  %1168 = vmatprep.subr.mxu0 0.0
  %1169 = vmatpush1.xpose.msra.mxu0 0.0
  %1170 = vmatprep.subr.mxu0 0.0
  %1171 = vmatpush1.xpose.msra.mxu0 0.0
  %1172 = vmatprep.subr.mxu0 0.0
  %1173 = vmatpush1.xpose.msra.mxu0 0.0
  %1174 = vmatprep.subr.mxu0 0.0
  %1175 = vmatpush1.xpose.msra.mxu0 0.0
  %1176 = vmatprep.subr.mxu0 0.0
  %1177 = vmatpush1.xpose.msra.mxu0 0.0
  %1178 = vmatprep.subr.mxu0 0.0
  %1179 = vmatpush1.xpose.msra.mxu0 0.0
  %1180 = vmatprep.subr.mxu0 0.0
  %1181 = vmatpush1.xpose.msra.mxu0 0.0
  %1182 = vmatprep.subr.mxu0 0.0
  %1183 = vmatpush1.xpose.msra.mxu0 0.0
  %1184 = vmatprep.subr.mxu0 0.0
  %1185 = vmatpush1.xpose.msra.mxu0 0.0
  %1186 = vmatprep.subr.mxu0 0.0
  %1187 = vmatpush1.xpose.msra.mxu0 0.0
  %1188 = vmatprep.subr.mxu0 0.0
  %1189 = vmatpush1.xpose.msra.mxu0 0.0
  %1190 = vmatprep.subr.mxu0 0.0
  %1191 = vmatpush1.xpose.msra.mxu0 0.0
  %1192 = vmatprep.subr.mxu0 0.0
  %1193 = vmatpush1.xpose.msra.mxu0 0.0
  %1194 = vmatprep.subr.mxu0 0.0
  %1195 = vmatpush1.xpose.msra.mxu0 0.0
  %1196 = vmatprep.subr.mxu0 0.0
  %1197 = vmatpush1.xpose.msra.mxu0 0.0
  %1198 = vmatprep.subr.mxu0 0.0
  %1199 = vmatpush1.xpose.msra.mxu0 0.0
  %1200 = vmatprep.subr.mxu0 0.0
  %1201 = vmatpush1.xpose.msra.mxu0 0.0
  %1202 = vmatprep.subr.mxu0 0.0
  %1203 = vmatpush1.xpose.msra.mxu0 0.0
  %1204 = vmatprep.subr.mxu0 0.0
  %1205 = vmatpush1.xpose.msra.mxu0 0.0
  %1206 = vmatprep.subr.mxu0 0.0
  %1207 = vmatpush1.xpose.msra.mxu0 0.0
  %1208 = vmatprep.subr.mxu0 0.0
  %1209 = vmatpush1.xpose.msra.mxu0 0.0
  %1210 = vmatprep.subr.mxu0 0.0
  %1211 = vmatpush1.xpose.msra.mxu0 0.0
  %1212 = vmatprep.subr.mxu0 0.0
  %1213 = vmatpush1.xpose.msra.mxu0 0.0
  %1214 = vmatprep.subr.mxu0 0.0
  %1215 = vmatpush1.xpose.msra.mxu0 0.0
  %1216 = vmatprep.subr.mxu0 0.0
  %1217 = vmatpush1.xpose.msra.mxu0 0.0
  %1218 = vmatprep.subr.mxu0 0.0
  %1219 = vmatpush1.xpose.msra.mxu0 0.0
  %1220 = vmatprep.subr.mxu0 0.0
  %1221 = vmatpush1.xpose.msra.mxu0 0.0
  %1222 = vmatprep.mubr.f32.mxu0 0.0
  %1223 = vmatmul.mubr.f32.gmra.mrb[0].mxu0 %v1150
  %v1224 = vpop.f32.mrb[0].mxu0
  %v1225 = vadd.f32 0.0, %v1224
  %v1226 = vpop.f32.mrb[0].mxu0
  %1227 = vmatprep.mubr.f32.mxu0 0.0
  %1228 = vmatmul.mubr.f32.gmra.mrb[0].mxu0 %v1152
  %v1229 = vpop.f32.mrb[0].mxu0
  %v1230 = vadd.f32 0.0, %v1229
  %v1231 = vpop.f32.mrb[0].mxu0
  %1232 = vdwg.mxu0
  %v1233 = vmul.f32 %v1225, 0.35355338
  %v1234 = vmul.f32 %v1230, 0.35355338
  %v1235 = vsel %vm469, %v1233, -inf
  %1236 = vmax.xlane.f32.xlu0 %v1235
  %v1237 = vpop.xlane.xlu0 %1236
  %v1238 = vsel %vm473, %v1234, -inf
  %1239 = vmax.xlane.f32.xlu0 %v1238
  %v1240 = vpop.xlane.xlu0 %1239
  %v1241 = vsub.f32 %v1233, %v1237
  %v1242 = vsub.f32 %v1234, %v1240
  %v1243 = vmul.f32 %v1241, 1.442695
  %v1244 = vpow.pop %v1243
  %v1245 = vmul.f32 %v1242, 1.442695
  %v1246 = vpow.pop %v1245
  %v1247 = vsel %vm469, %v1244, 0.0
  %1248 = vadd.xlane.f32.xlu0 %v1247
  %v1249 = vpop.xlane.xlu0 %1248
  %v1250 = vsel %vm473, %v1246, 0.0
  %1251 = vadd.xlane.f32.xlu0 %v1250
  %v1252 = vpop.xlane.xlu0 %1251
  %v1253 = vrcp.pop %v1249
  %v1254 = vrcp.pop %v1252
  %v1255 = vmul.f32 %v1244, %v1253
  %v1256 = vmul.f32 %v1246, %v1254
  %1257 = vrot.lane.b32.xlu0 %v374, 40
  %v1258 = vpop.permute.xlu0 %1257
  %1259 = vrot.lane.b32.xlu0 %v375, 40
  %v1260 = vpop.permute.xlu0 %1259
  %v1263 = vsel %vm469, %v1255, 0
  %v1266 = vsel %vm469, %v1256, 0
  %v1268 = vsel %vm506, %v1260, 0
  %1270 = vmatprep.subr.mxu0 0.0
  %1271 = vmatpush1.msra.mxu0 %v1258
  %1272 = vmatprep.subr.mxu0 0.0
  %1273 = vmatpush1.msra.mxu0 %v1268
  %1274 = vmatprep.subr.mxu0 0.0
  %1275 = vmatpush1.msra.mxu0 0.0
  %1276 = vmatprep.subr.mxu0 0.0
  %1277 = vmatpush1.msra.mxu0 0.0
  %1278 = vmatprep.subr.mxu0 0.0
  %1279 = vmatpush1.msra.mxu0 0.0
  %1280 = vmatprep.subr.mxu0 0.0
  %1281 = vmatpush1.msra.mxu0 0.0
  %1282 = vmatprep.subr.mxu0 0.0
  %1283 = vmatpush1.msra.mxu0 0.0
  %1284 = vmatprep.subr.mxu0 0.0
  %1285 = vmatpush1.msra.mxu0 0.0
  %1286 = vmatprep.subr.mxu0 0.0
  %1287 = vmatpush1.msra.mxu0 0.0
  %1288 = vmatprep.subr.mxu0 0.0
  %1289 = vmatpush1.msra.mxu0 0.0
  %1290 = vmatprep.subr.mxu0 0.0
  %1291 = vmatpush1.msra.mxu0 0.0
  %1292 = vmatprep.subr.mxu0 0.0
  %1293 = vmatpush1.msra.mxu0 0.0
  %1294 = vmatprep.subr.mxu0 0.0
  %1295 = vmatpush1.msra.mxu0 0.0
  %1296 = vmatprep.subr.mxu0 0.0
  %1297 = vmatpush1.msra.mxu0 0.0
  %1298 = vmatprep.subr.mxu0 0.0
  %1299 = vmatpush1.msra.mxu0 0.0
  %1300 = vmatprep.subr.mxu0 0.0
  %1301 = vmatpush1.msra.mxu0 0.0
  %1302 = vmatprep.subr.mxu0 0.0
  %1303 = vmatpush1.msra.mxu0 0.0
  %1304 = vmatprep.subr.mxu0 0.0
  %1305 = vmatpush1.msra.mxu0 0.0
  %1306 = vmatprep.subr.mxu0 0.0
  %1307 = vmatpush1.msra.mxu0 0.0
  %1308 = vmatprep.subr.mxu0 0.0
  %1309 = vmatpush1.msra.mxu0 0.0
  %1310 = vmatprep.subr.mxu0 0.0
  %1311 = vmatpush1.msra.mxu0 0.0
  %1312 = vmatprep.subr.mxu0 0.0
  %1313 = vmatpush1.msra.mxu0 0.0
  %1314 = vmatprep.subr.mxu0 0.0
  %1315 = vmatpush1.msra.mxu0 0.0
  %1316 = vmatprep.subr.mxu0 0.0
  %1317 = vmatpush1.msra.mxu0 0.0
  %1318 = vmatprep.subr.mxu0 0.0
  %1319 = vmatpush1.msra.mxu0 0.0
  %1320 = vmatprep.subr.mxu0 0.0
  %1321 = vmatpush1.msra.mxu0 0.0
  %1322 = vmatprep.subr.mxu0 0.0
  %1323 = vmatpush1.msra.mxu0 0.0
  %1324 = vmatprep.subr.mxu0 0.0
  %1325 = vmatpush1.msra.mxu0 0.0
  %1326 = vmatprep.subr.mxu0 0.0
  %1327 = vmatpush1.msra.mxu0 0.0
  %1328 = vmatprep.subr.mxu0 0.0
  %1329 = vmatpush1.msra.mxu0 0.0
  %1330 = vmatprep.subr.mxu0 0.0
  %1331 = vmatpush1.msra.mxu0 0.0
  %1332 = vmatprep.subr.mxu0 0.0
  %1333 = vmatpush1.msra.mxu0 0.0
  %1334 = vmatprep.mubr.f32.mxu0 0.0
  %1335 = vmatmul.mubr.f32.gmra.mrb[0].mxu0 %v1263
  %v1336 = vpop.f32.mrb[0].mxu0
  %v1337 = vadd.f32 0.0, %v1336
  %v1338 = vpop.f32.mrb[0].mxu0
  %1339 = vmatprep.mubr.f32.mxu0 0.0
  %1340 = vmatmul.mubr.f32.gmra.mrb[0].mxu0 %v1266
  %v1341 = vpop.f32.mrb[0].mxu0
  %v1342 = vadd.f32 0.0, %v1341
  %v1343 = vpop.f32.mrb[0].mxu0
  %1344 = vdwg.mxu0
  %v1345 = vpack.c.bf16 %v1342, %v1337
  %s1346 = scalar_lea.vmem %s3, 12
  %v1347 = vld [vmem:[%s1346] sm:$0xf]
  %v1349 = vsel %vm58, %v1345, 0
  %v1352 = vsel %vm795, %v1347, 0
  %1354 = vmatprep.subr.bf16.mxu0 0
  %1355 = vmatpush1.bf16.msra.mxu0 %v1352
  %1356 = vmatprep.subr.bf16.mxu0 0
  %1357 = vmatpush1.bf16.msra.mxu0 0
  %1358 = vmatprep.subr.bf16.mxu0 0
  %1359 = vmatpush1.bf16.msra.mxu0 0
  %1360 = vmatprep.subr.bf16.mxu0 0
  %1361 = vmatpush1.bf16.msra.mxu0 0
  %1362 = vmatprep.subr.bf16.mxu0 0
  %1363 = vmatpush1.bf16.msra.mxu0 0
  %1364 = vmatprep.subr.bf16.mxu0 0
  %1365 = vmatpush1.bf16.msra.mxu0 0
  %1366 = vmatprep.subr.bf16.mxu0 0
  %1367 = vmatpush1.bf16.msra.mxu0 0
  %1368 = vmatprep.subr.bf16.mxu0 0
  %1369 = vmatpush1.bf16.msra.mxu0 0
  %1370 = vmatprep.subr.bf16.mxu0 0
  %1371 = vmatpush1.bf16.msra.mxu0 0
  %1372 = vmatprep.subr.bf16.mxu0 0
  %1373 = vmatpush1.bf16.msra.mxu0 0
  %1374 = vmatprep.subr.bf16.mxu0 0
  %1375 = vmatpush1.bf16.msra.mxu0 0
  %1376 = vmatprep.subr.bf16.mxu0 0
  %1377 = vmatpush1.bf16.msra.mxu0 0
  %1378 = vmatprep.subr.bf16.mxu0 0
  %1379 = vmatpush1.bf16.msra.mxu0 0
  %1380 = vmatprep.subr.bf16.mxu0 0
  %1381 = vmatpush1.bf16.msra.mxu0 0
  %1382 = vmatprep.subr.bf16.mxu0 0
  %1383 = vmatpush1.bf16.msra.mxu0 0
  %1384 = vmatprep.subr.bf16.mxu0 0
  %1385 = vmatpush1.bf16.msra.mxu0 0
  %1386 = vmatprep.mubr.bf16.mxu0 0
  %1387 = vmatmul.mubr.bf16.gmra.mrb[0].mxu0 %v1349
  %v1388 = vpop.f32.mrb[0].mxu0
  %v1389 = vadd.f32 0.0, %v1388
  %v1390 = vpop.f32.mrb[0].mxu0
  %v1391 = vpop.f32.mrb[0].mxu0
  %v1392 = vadd.f32 0.0, %v1391
  %v1393 = vpop.f32.mrb[0].mxu0
  %1394 = vdwg.mxu0
  %v1395 = vadd.f32 %v1140, %v1389
  %v1396 = vadd.f32 %v1141, %v1392
  %v1397 = vld [vmem:[%s1 + $0x29] sm:$0x1]
  %v1398 = vlaneseq
  %v1399 = vshrl.u32 %v1398, 7
  %v1400 = vsub.s32 0, %v1399
  %v1401 = vrot.slane %v1397, %v1400
  %v1402 = vadd.f32 %v1395, %v1401
  %v1403 = vadd.f32 %v1396, %v1401
  %v1404 = vadd.f32 %v284, %v1402
  %v1405 = vadd.f32 %v285, %v1403
  %v1406 = vld [vmem:[%s1 + $0x2a] sm:$0x1]
  %v1407 = vld [vmem:[%s1 + $0x2b] sm:$0x1]
  %v1408 = vsel %vm245, %v1404, 0.0
  %1409 = vadd.xlane.f32.xlu0 %v1408
  %v1410 = vpop.xlane.xlu0 %1409
  %v1411 = vsel %vm249, %v1405, 0.0
  %1412 = vadd.xlane.f32.xlu0 %v1411
  %v1413 = vpop.xlane.xlu0 %1412
  %v1414 = vmul.f32 %v1410, %v253
  %v1415 = vmul.f32 %v1413, %v253
  %v1416 = vsub.f32 %v1404, %v1414
  %v1417 = vsub.f32 %v1405, %v1415
  %v1418 = vmul.f32 %v1416, %v1416
  %v1419 = vmul.f32 %v1417, %v1417
  %v1420 = vsel %vm245, %v1418, 0.0
  %1421 = vadd.xlane.f32.xlu0 %v1420
  %v1422 = vpop.xlane.xlu0 %1421
  %v1423 = vsel %vm249, %v1419, 0.0
  %1424 = vadd.xlane.f32.xlu0 %v1423
  %v1425 = vpop.xlane.xlu0 %1424
  %v1426 = vmul.f32 %v1422, %v253
  %v1427 = vmul.f32 %v1425, %v253
  %v1428 = vadd.f32 %v1426, 1e-05
  %v1429 = vadd.f32 %v1427, 1e-05
  %v1430 = vrsqrt.pop %v1428
  %v1431 = vrsqrt.pop %v1429
  %v1432 = vmul.f32 %v1416, %v1430
  %v1433 = vmul.f32 %v1417, %v1431
  %v1434 = vlaneseq
  %v1435 = vshrl.u32 %v1434, 7
  %v1436 = vsub.s32 0, %v1435
  %v1437 = vrot.slane %v1406, %v1436
  %v1438 = vmul.f32 %v1432, %v1437
  %v1439 = vmul.f32 %v1433, %v1437
  %v1440 = vlaneseq
  %v1441 = vshrl.u32 %v1440, 7
  %v1442 = vsub.s32 0, %v1441
  %v1443 = vrot.slane %v1407, %v1442
  %v1444 = vadd.f32 %v1438, %v1443
  %v1445 = vadd.f32 %v1439, %v1443
  %v1446 = vpack.c.bf16 %v1445, %v1444
  %v1447 = vld [vmem:[%s4] sm:$0xf]
  %v1448 = vld [vmem:[%s4 + $0x4] sm:$0xf]
  %v1449 = vld [vmem:[%s4 + $0x8] sm:$0xf]
  %v1450 = vld [vmem:[%s4 + $0xc] sm:$0xf]
  %v1451 = vld [vmem:[%s1 + $0x2c] sm:$0x1]
  %v1452 = vlaneseq
  %v1453 = vshrl.u32 %v1452, 7
  %v1454 = vsub.s32 0, %v1453
  %v1455 = vrot.slane %v1451, %v1454
  %v1460 = vunpack.c.l.b16 %v1447
  %v1461 = vunpack.c.l.b16 %v1448
  %v1462 = vunpack.c.l.b16 %v1449
  %v1463 = vunpack.c.l.b16 %v1450
  %v1464 = vpack.c.b16 %v1461, %v1460
  %v1465 = vpack.c.b16 %v1463, %v1462
  %v1469 = vsel %vm245, %v1446, 0
  %1471 = vmatprep.subr.bf16.mxu0 0
  %1472 = vmatpush1.bf16.msra.mxu0 %v1464
  %1473 = vmatprep.subr.bf16.mxu0 0
  %1474 = vmatpush1.bf16.msra.mxu0 %v1465
  %1475 = vmatprep.subr.bf16.mxu0 0
  %1476 = vmatpush1.bf16.msra.mxu0 0
  %1477 = vmatprep.subr.bf16.mxu0 0
  %1478 = vmatpush1.bf16.msra.mxu0 0
  %1479 = vmatprep.subr.bf16.mxu0 0
  %1480 = vmatpush1.bf16.msra.mxu0 0
  %1481 = vmatprep.subr.bf16.mxu0 0
  %1482 = vmatpush1.bf16.msra.mxu0 0
  %1483 = vmatprep.subr.bf16.mxu0 0
  %1484 = vmatpush1.bf16.msra.mxu0 0
  %1485 = vmatprep.subr.bf16.mxu0 0
  %1486 = vmatpush1.bf16.msra.mxu0 0
  %1487 = vmatprep.subr.bf16.mxu0 0
  %1488 = vmatpush1.bf16.msra.mxu0 0
  %1489 = vmatprep.subr.bf16.mxu0 0
  %1490 = vmatpush1.bf16.msra.mxu0 0
  %1491 = vmatprep.subr.bf16.mxu0 0
  %1492 = vmatpush1.bf16.msra.mxu0 0
  %1493 = vmatprep.subr.bf16.mxu0 0
  %1494 = vmatpush1.bf16.msra.mxu0 0
  %1495 = vmatprep.subr.bf16.mxu0 0
  %1496 = vmatpush1.bf16.msra.mxu0 0
  %1497 = vmatprep.subr.bf16.mxu0 0
  %1498 = vmatpush1.bf16.msra.mxu0 0
  %1499 = vmatprep.subr.bf16.mxu0 0
  %1500 = vmatpush1.bf16.msra.mxu0 0
  %1501 = vmatprep.subr.bf16.mxu0 0
  %1502 = vmatpush1.bf16.msra.mxu0 0
  %1503 = vmatprep.mubr.bf16.mxu0 0
  %1504 = vmatmul.mubr.bf16.gmra.mrb[0].mxu0 %v1469
  %v1505 = vpop.f32.mrb[0].mxu0
  %v1506 = vadd.f32 %v1455, %v1505
  %v1507 = vpop.f32.mrb[0].mxu0
  %v1508 = vpop.f32.mrb[0].mxu0
  %v1509 = vadd.f32 %v1455, %v1508
  %v1510 = vpop.f32.mrb[0].mxu0
  %1511 = vdwg.mxu0
  %v1512 = vmax.f32 %v1506, 0.0
  %v1513 = vmax.f32 %v1509, 0.0
  %v1514 = vpack.c.bf16 %v1513, %v1512
  %v1515 = vld [vmem:[%s5] sm:$0xf]
  %v1516 = vld [vmem:[%s5 + $0x4] sm:$0xf]
  %v1517 = vld [vmem:[%s5 + $0x8] sm:$0xf]
  %v1518 = vld [vmem:[%s5 + $0xc] sm:$0xf]
  %v1519 = vld [vmem:[%s5 + $0x10] sm:$0xf]
  %v1520 = vld [vmem:[%s5 + $0x14] sm:$0xf]
  %v1521 = vld [vmem:[%s5 + $0x18] sm:$0xf]
  %v1522 = vld [vmem:[%s5 + $0x1c] sm:$0xf]
  %v1523 = vld [vmem:[%s5 + $0x20] sm:$0xf]
  %v1524 = vld [vmem:[%s5 + $0x24] sm:$0xf]
  %v1525 = vld [vmem:[%s5 + $0x28] sm:$0xf]
  %v1526 = vld [vmem:[%s5 + $0x2c] sm:$0xf]
  %v1527 = vld [vmem:[%s5 + $0x30] sm:$0xf]
  %v1528 = vld [vmem:[%s5 + $0x34] sm:$0xf]
  %v1529 = vld [vmem:[%s5 + $0x38] sm:$0xf]
  %v1530 = vld [vmem:[%s5 + $0x3c] sm:$0xf]
  %v1531 = vld [vmem:[%s1 + $0x2d] sm:$0x1]
  %v1532 = vlaneseq
  %v1533 = vshrl.u32 %v1532, 7
  %v1534 = vsub.s32 0, %v1533
  %v1535 = vrot.slane %v1531, %v1534
  %v1552 = vunpack.c.l.b16 %v1515
  %v1553 = vunpack.c.l.b16 %v1516
  %v1554 = vunpack.c.l.b16 %v1517
  %v1555 = vunpack.c.l.b16 %v1518
  %v1556 = vunpack.c.l.b16 %v1519
  %v1557 = vunpack.c.l.b16 %v1520
  %v1558 = vunpack.c.l.b16 %v1521
  %v1559 = vunpack.c.l.b16 %v1522
  %v1560 = vunpack.c.l.b16 %v1523
  %v1561 = vunpack.c.l.b16 %v1524
  %v1562 = vunpack.c.l.b16 %v1525
  %v1563 = vunpack.c.l.b16 %v1526
  %v1564 = vunpack.c.l.b16 %v1527
  %v1565 = vunpack.c.l.b16 %v1528
  %v1566 = vunpack.c.l.b16 %v1529
  %v1567 = vunpack.c.l.b16 %v1530
  %v1568 = vpack.c.b16 %v1553, %v1552
  %v1569 = vpack.c.b16 %v1555, %v1554
  %v1570 = vpack.c.b16 %v1557, %v1556
  %v1571 = vpack.c.b16 %v1559, %v1558
  %v1572 = vpack.c.b16 %v1561, %v1560
  %v1573 = vpack.c.b16 %v1563, %v1562
  %v1574 = vpack.c.b16 %v1565, %v1564
  %v1575 = vpack.c.b16 %v1567, %v1566
  %1584 = vmatprep.subr.bf16.mxu0 0
  %1585 = vmatpush1.bf16.msra.mxu0 %v1568
  %1586 = vmatprep.subr.bf16.mxu0 0
  %1587 = vmatpush1.bf16.msra.mxu0 %v1569
  %1588 = vmatprep.subr.bf16.mxu0 0
  %1589 = vmatpush1.bf16.msra.mxu0 %v1570
  %1590 = vmatprep.subr.bf16.mxu0 0
  %1591 = vmatpush1.bf16.msra.mxu0 %v1571
  %1592 = vmatprep.subr.bf16.mxu0 0
  %1593 = vmatpush1.bf16.msra.mxu0 %v1572
  %1594 = vmatprep.subr.bf16.mxu0 0
  %1595 = vmatpush1.bf16.msra.mxu0 %v1573
  %1596 = vmatprep.subr.bf16.mxu0 0
  %1597 = vmatpush1.bf16.msra.mxu0 %v1574
  %1598 = vmatprep.subr.bf16.mxu0 0
  %1599 = vmatpush1.bf16.msra.mxu0 %v1575
  %1600 = vmatprep.subr.bf16.mxu0 0
  %1601 = vmatpush1.bf16.msra.mxu0 0
  %1602 = vmatprep.subr.bf16.mxu0 0
  %1603 = vmatpush1.bf16.msra.mxu0 0
  %1604 = vmatprep.subr.bf16.mxu0 0
  %1605 = vmatpush1.bf16.msra.mxu0 0
  %1606 = vmatprep.subr.bf16.mxu0 0
  %1607 = vmatpush1.bf16.msra.mxu0 0
  %1608 = vmatprep.subr.bf16.mxu0 0
  %1609 = vmatpush1.bf16.msra.mxu0 0
  %1610 = vmatprep.subr.bf16.mxu0 0
  %1611 = vmatpush1.bf16.msra.mxu0 0
  %1612 = vmatprep.subr.bf16.mxu0 0
  %1613 = vmatpush1.bf16.msra.mxu0 0
  %1614 = vmatprep.subr.bf16.mxu0 0
  %1615 = vmatpush1.bf16.msra.mxu0 0
  %1616 = vmatprep.mubr.bf16.mxu0 0
  %1617 = vmatmul.mubr.bf16.gmra.mrb[0].mxu0 %v1514
  %v1618 = vpop.f32.mrb[0].mxu0
  %v1619 = vadd.f32 %v1535, %v1618
  %v1620 = vpop.f32.mrb[0].mxu0
  %v1621 = vpop.f32.mrb[0].mxu0
  %v1622 = vadd.f32 %v1535, %v1621
  %v1623 = vpop.f32.mrb[0].mxu0
  %1624 = vdwg.mxu0
  %v1625 = vadd.f32 %v1444, %v1619
  %v1626 = vadd.f32 %v1445, %v1622
  %v1627 = vld [vmem:[%s1 + $0x2e] sm:$0x1]
  %v1628 = vld [vmem:[%s1 + $0x2f] sm:$0x1]
  %v1629 = vsel %vm245, %v1625, 0.0
  %1630 = vadd.xlane.f32.xlu0 %v1629
  %v1631 = vpop.xlane.xlu0 %1630
  %v1632 = vsel %vm249, %v1626, 0.0
  %1633 = vadd.xlane.f32.xlu0 %v1632
  %v1634 = vpop.xlane.xlu0 %1633
  %v1635 = vmul.f32 %v1631, %v253
  %v1636 = vmul.f32 %v1634, %v253
  %v1637 = vsub.f32 %v1625, %v1635
  %v1638 = vsub.f32 %v1626, %v1636
  %v1639 = vmul.f32 %v1637, %v1637
  %v1640 = vmul.f32 %v1638, %v1638
  %v1641 = vsel %vm245, %v1639, 0.0
  %1642 = vadd.xlane.f32.xlu0 %v1641
  %v1643 = vpop.xlane.xlu0 %1642
  %v1644 = vsel %vm249, %v1640, 0.0
  %1645 = vadd.xlane.f32.xlu0 %v1644
  %v1646 = vpop.xlane.xlu0 %1645
  %v1647 = vmul.f32 %v1643, %v253
  %v1648 = vmul.f32 %v1646, %v253
  %v1649 = vadd.f32 %v1647, 1e-05
  %v1650 = vadd.f32 %v1648, 1e-05
  %v1651 = vrsqrt.pop %v1649
  %v1652 = vrsqrt.pop %v1650
  %v1653 = vmul.f32 %v1637, %v1651
  %v1654 = vmul.f32 %v1638, %v1652
  %v1655 = vlaneseq
  %v1656 = vshrl.u32 %v1655, 7
  %v1657 = vsub.s32 0, %v1656
  %v1658 = vrot.slane %v1627, %v1657
  %v1659 = vmul.f32 %v1653, %v1658
  %v1660 = vmul.f32 %v1654, %v1658
  %v1661 = vlaneseq
  %v1662 = vshrl.u32 %v1661, 7
  %v1663 = vsub.s32 0, %v1662
  %v1664 = vrot.slane %v1628, %v1663
  %v1665 = vadd.f32 %v1659, %v1664
  %v1666 = vadd.f32 %v1660, %v1664
  %v1667 = vpack.c.bf16 %v1666, %v1665
  %s1668 = scalar_lea.vmem %s2, 16
  %v1669 = vld [vmem:[%s1668] sm:$0xf]
  %v1670 = vld [vmem:[%s1668 + $0x4] sm:$0xf]
  %v1671 = vld [vmem:[%s1668 + $0x8] sm:$0xf]
  %v1672 = vld [vmem:[%s1668 + $0xc] sm:$0xf]
  %v1677 = vunpack.c.l.b16 %v1669
  %v1678 = vunpack.c.l.b16 %v1670
  %v1679 = vunpack.c.l.b16 %v1671
  %v1680 = vunpack.c.l.b16 %v1672
  %v1681 = vpack.c.b16 %v1678, %v1677
  %v1682 = vpack.c.b16 %v1680, %v1679
  %v1686 = vsel %vm245, %v1667, 0
  %1688 = vmatprep.subr.bf16.mxu0 0
  %1689 = vmatpush1.bf16.msra.mxu0 %v1681
  %1690 = vmatprep.subr.bf16.mxu0 0
  %1691 = vmatpush1.bf16.msra.mxu0 %v1682
  %1692 = vmatprep.subr.bf16.mxu0 0
  %1693 = vmatpush1.bf16.msra.mxu0 0
  %1694 = vmatprep.subr.bf16.mxu0 0
  %1695 = vmatpush1.bf16.msra.mxu0 0
  %1696 = vmatprep.subr.bf16.mxu0 0
  %1697 = vmatpush1.bf16.msra.mxu0 0
  %1698 = vmatprep.subr.bf16.mxu0 0
  %1699 = vmatpush1.bf16.msra.mxu0 0
  %1700 = vmatprep.subr.bf16.mxu0 0
  %1701 = vmatpush1.bf16.msra.mxu0 0
  %1702 = vmatprep.subr.bf16.mxu0 0
  %1703 = vmatpush1.bf16.msra.mxu0 0
  %1704 = vmatprep.subr.bf16.mxu0 0
  %1705 = vmatpush1.bf16.msra.mxu0 0
  %1706 = vmatprep.subr.bf16.mxu0 0
  %1707 = vmatpush1.bf16.msra.mxu0 0
  %1708 = vmatprep.subr.bf16.mxu0 0
  %1709 = vmatpush1.bf16.msra.mxu0 0
  %1710 = vmatprep.subr.bf16.mxu0 0
  %1711 = vmatpush1.bf16.msra.mxu0 0
  %1712 = vmatprep.subr.bf16.mxu0 0
  %1713 = vmatpush1.bf16.msra.mxu0 0
  %1714 = vmatprep.subr.bf16.mxu0 0
  %1715 = vmatpush1.bf16.msra.mxu0 0
  %1716 = vmatprep.subr.bf16.mxu0 0
  %1717 = vmatpush1.bf16.msra.mxu0 0
  %1718 = vmatprep.subr.bf16.mxu0 0
  %1719 = vmatpush1.bf16.msra.mxu0 0
  %1720 = vmatprep.mubr.bf16.mxu0 0
  %1721 = vmatmul.mubr.bf16.gmra.mrb[0].mxu0 %v1686
  %v1722 = vpop.f32.mrb[0].mxu0
  %v1723 = vadd.f32 0.0, %v1722
  %v1724 = vpop.f32.mrb[0].mxu0
  %v1725 = vpop.f32.mrb[0].mxu0
  %v1726 = vadd.f32 0.0, %v1725
  %v1727 = vpop.f32.mrb[0].mxu0
  %1728 = vdwg.mxu0
  %v1729 = vld [vmem:[%s1 + $0x30] sm:$0x1]
  %v1730 = vlaneseq
  %v1731 = vshrl.u32 %v1730, 7
  %v1732 = vsub.s32 0, %v1731
  %v1733 = vrot.slane %v1729, %v1732
  %v1734 = vadd.f32 %v1723, %v1733
  %v1735 = vadd.f32 %v1726, %v1733
  %v1736 = vld [vmem:[%s1 + $0x31] sm:$0x1]
  %v1737 = vlaneseq
  %v1738 = vshrl.u32 %v1737, 7
  %v1739 = vsub.s32 0, %v1738
  %v1740 = vrot.slane %v1736, %v1739
  %1742 = vrot.lane.b32.xlu0 %v1740, 32
  %v1743 = vpop.permute.xlu0 %1742
  %v1745 = vadd.f32 %v1723, %v1743
  %v1746 = vadd.f32 %v1726, %v1743
  %v1747 = vld [vmem:[%s1 + $0x32] sm:$0x1]
  %v1748 = vlaneseq
  %v1749 = vshrl.u32 %v1748, 7
  %v1750 = vsub.s32 0, %v1749
  %v1751 = vrot.slane %v1747, %v1750
  %1753 = vrot.lane.b32.xlu0 %v1751, 64
  %v1754 = vpop.permute.xlu0 %1753
  %v1756 = vadd.f32 %v1723, %v1754
  %v1757 = vadd.f32 %v1726, %v1754
  %1760 = vrot.lane.b32.xlu0 %v1745, 96
  %v1761 = vpop.permute.xlu0 %1760
  %1762 = vrot.lane.b32.xlu0 %v1746, 96
  %v1763 = vpop.permute.xlu0 %1762
  %v1765 = vsel %vm58, %v1734, 0
  %v1768 = vsel %vm58, %v1735, 0
  %v1770 = vsel %vm58, %v1761, 0
  %v1772 = vsel %vm58, %v1763, 0
  %1774 = vmatprep.subr.mxu0 0.0
  %1775 = vmatpush1.xpose.msra.mxu0 %v1770
  %1776 = vmatprep.subr.mxu0 0.0
  %1777 = vmatpush1.xpose.msra.mxu0 %v1772
  %1778 = vmatprep.subr.mxu0 0.0
  %1779 = vmatpush1.xpose.msra.mxu0 0.0
  %1780 = vmatprep.subr.mxu0 0.0
  %1781 = vmatpush1.xpose.msra.mxu0 0.0
  %1782 = vmatprep.subr.mxu0 0.0
  %1783 = vmatpush1.xpose.msra.mxu0 0.0
  %1784 = vmatprep.subr.mxu0 0.0
  %1785 = vmatpush1.xpose.msra.mxu0 0.0
  %1786 = vmatprep.subr.mxu0 0.0
  %1787 = vmatpush1.xpose.msra.mxu0 0.0
  %1788 = vmatprep.subr.mxu0 0.0
  %1789 = vmatpush1.xpose.msra.mxu0 0.0
  %1790 = vmatprep.subr.mxu0 0.0
  %1791 = vmatpush1.xpose.msra.mxu0 0.0
  %1792 = vmatprep.subr.mxu0 0.0
  %1793 = vmatpush1.xpose.msra.mxu0 0.0
  %1794 = vmatprep.subr.mxu0 0.0
  %1795 = vmatpush1.xpose.msra.mxu0 0.0
  %1796 = vmatprep.subr.mxu0 0.0
  %1797 = vmatpush1.xpose.msra.mxu0 0.0
  %1798 = vmatprep.subr.mxu0 0.0
  %1799 = vmatpush1.xpose.msra.mxu0 0.0
  %1800 = vmatprep.subr.mxu0 0.0
  %1801 = vmatpush1.xpose.msra.mxu0 0.0
  %1802 = vmatprep.subr.mxu0 0.0
  %1803 = vmatpush1.xpose.msra.mxu0 0.0
  %1804 = vmatprep.subr.mxu0 0.0
  %1805 = vmatpush1.xpose.msra.mxu0 0.0
  %1806 = vmatprep.subr.mxu0 0.0
  %1807 = vmatpush1.xpose.msra.mxu0 0.0
  %1808 = vmatprep.subr.mxu0 0.0
  %1809 = vmatpush1.xpose.msra.mxu0 0.0
  %1810 = vmatprep.subr.mxu0 0.0
  %1811 = vmatpush1.xpose.msra.mxu0 0.0
  %1812 = vmatprep.subr.mxu0 0.0
  %1813 = vmatpush1.xpose.msra.mxu0 0.0
  %1814 = vmatprep.subr.mxu0 0.0
  %1815 = vmatpush1.xpose.msra.mxu0 0.0
  %1816 = vmatprep.subr.mxu0 0.0
  %1817 = vmatpush1.xpose.msra.mxu0 0.0
  %1818 = vmatprep.subr.mxu0 0.0
  %1819 = vmatpush1.xpose.msra.mxu0 0.0
  %1820 = vmatprep.subr.mxu0 0.0
  %1821 = vmatpush1.xpose.msra.mxu0 0.0
  %1822 = vmatprep.subr.mxu0 0.0
  %1823 = vmatpush1.xpose.msra.mxu0 0.0
  %1824 = vmatprep.subr.mxu0 0.0
  %1825 = vmatpush1.xpose.msra.mxu0 0.0
  %1826 = vmatprep.subr.mxu0 0.0
  %1827 = vmatpush1.xpose.msra.mxu0 0.0
  %1828 = vmatprep.subr.mxu0 0.0
  %1829 = vmatpush1.xpose.msra.mxu0 0.0
  %1830 = vmatprep.subr.mxu0 0.0
  %1831 = vmatpush1.xpose.msra.mxu0 0.0
  %1832 = vmatprep.subr.mxu0 0.0
  %1833 = vmatpush1.xpose.msra.mxu0 0.0
  %1834 = vmatprep.subr.mxu0 0.0
  %1835 = vmatpush1.xpose.msra.mxu0 0.0
  %1836 = vmatprep.subr.mxu0 0.0
  %1837 = vmatpush1.xpose.msra.mxu0 0.0
  %1838 = vmatprep.mubr.f32.mxu0 0.0
  %1839 = vmatmul.mubr.f32.gmra.mrb[0].mxu0 %v1765
  %v1840 = vpop.f32.mrb[0].mxu0
  %v1841 = vadd.f32 0.0, %v1840
  %v1842 = vpop.f32.mrb[0].mxu0
  %1843 = vmatprep.mubr.f32.mxu0 0.0
  %1844 = vmatmul.mubr.f32.gmra.mrb[0].mxu0 %v1768
  %v1845 = vpop.f32.mrb[0].mxu0
  %v1846 = vadd.f32 0.0, %v1845
  %v1847 = vpop.f32.mrb[0].mxu0
  %1848 = vdwg.mxu0
  %v1849 = vmul.f32 %v1841, 0.35355338
  %v1850 = vmul.f32 %v1846, 0.35355338
  %v1851 = vsel %vm469, %v1849, -inf
  %1852 = vmax.xlane.f32.xlu0 %v1851
  %v1853 = vpop.xlane.xlu0 %1852
  %v1854 = vsel %vm473, %v1850, -inf
  %1855 = vmax.xlane.f32.xlu0 %v1854
  %v1856 = vpop.xlane.xlu0 %1855
  %v1857 = vsub.f32 %v1849, %v1853
  %v1858 = vsub.f32 %v1850, %v1856
  %v1859 = vmul.f32 %v1857, 1.442695
  %v1860 = vpow.pop %v1859
  %v1861 = vmul.f32 %v1858, 1.442695
  %v1862 = vpow.pop %v1861
  %v1863 = vsel %vm469, %v1860, 0.0
  %1864 = vadd.xlane.f32.xlu0 %v1863
  %v1865 = vpop.xlane.xlu0 %1864
  %v1866 = vsel %vm473, %v1862, 0.0
  %1867 = vadd.xlane.f32.xlu0 %v1866
  %v1868 = vpop.xlane.xlu0 %1867
  %v1869 = vrcp.pop %v1865
  %v1870 = vrcp.pop %v1868
  %v1871 = vmul.f32 %v1860, %v1869
  %v1872 = vmul.f32 %v1862, %v1870
  %1875 = vrot.lane.b32.xlu0 %v1756, 64
  %v1876 = vpop.permute.xlu0 %1875
  %1877 = vrot.lane.b32.xlu0 %v1757, 64
  %v1878 = vpop.permute.xlu0 %1877
  %v1881 = vsel %vm469, %v1871, 0
  %v1884 = vsel %vm469, %v1872, 0
  %v1886 = vsel %vm506, %v1878, 0
  %1888 = vmatprep.subr.mxu0 0.0
  %1889 = vmatpush1.msra.mxu0 %v1876
  %1890 = vmatprep.subr.mxu0 0.0
  %1891 = vmatpush1.msra.mxu0 %v1886
  %1892 = vmatprep.subr.mxu0 0.0
  %1893 = vmatpush1.msra.mxu0 0.0
  %1894 = vmatprep.subr.mxu0 0.0
  %1895 = vmatpush1.msra.mxu0 0.0
  %1896 = vmatprep.subr.mxu0 0.0
  %1897 = vmatpush1.msra.mxu0 0.0
  %1898 = vmatprep.subr.mxu0 0.0
  %1899 = vmatpush1.msra.mxu0 0.0
  %1900 = vmatprep.subr.mxu0 0.0
  %1901 = vmatpush1.msra.mxu0 0.0
  %1902 = vmatprep.subr.mxu0 0.0
  %1903 = vmatpush1.msra.mxu0 0.0
  %1904 = vmatprep.subr.mxu0 0.0
  %1905 = vmatpush1.msra.mxu0 0.0
  %1906 = vmatprep.subr.mxu0 0.0
  %1907 = vmatpush1.msra.mxu0 0.0
  %1908 = vmatprep.subr.mxu0 0.0
  %1909 = vmatpush1.msra.mxu0 0.0
  %1910 = vmatprep.subr.mxu0 0.0
  %1911 = vmatpush1.msra.mxu0 0.0
  %1912 = vmatprep.subr.mxu0 0.0
  %1913 = vmatpush1.msra.mxu0 0.0
  %1914 = vmatprep.subr.mxu0 0.0
  %1915 = vmatpush1.msra.mxu0 0.0
  %1916 = vmatprep.subr.mxu0 0.0
  %1917 = vmatpush1.msra.mxu0 0.0
  %1918 = vmatprep.subr.mxu0 0.0
  %1919 = vmatpush1.msra.mxu0 0.0
  %1920 = vmatprep.subr.mxu0 0.0
  %1921 = vmatpush1.msra.mxu0 0.0
  %1922 = vmatprep.subr.mxu0 0.0
  %1923 = vmatpush1.msra.mxu0 0.0
  %1924 = vmatprep.subr.mxu0 0.0
  %1925 = vmatpush1.msra.mxu0 0.0
  %1926 = vmatprep.subr.mxu0 0.0
  %1927 = vmatpush1.msra.mxu0 0.0
  %1928 = vmatprep.subr.mxu0 0.0
  %1929 = vmatpush1.msra.mxu0 0.0
  %1930 = vmatprep.subr.mxu0 0.0
  %1931 = vmatpush1.msra.mxu0 0.0
  %1932 = vmatprep.subr.mxu0 0.0
  %1933 = vmatpush1.msra.mxu0 0.0
  %1934 = vmatprep.subr.mxu0 0.0
  %1935 = vmatpush1.msra.mxu0 0.0
  %1936 = vmatprep.subr.mxu0 0.0
  %1937 = vmatpush1.msra.mxu0 0.0
  %1938 = vmatprep.subr.mxu0 0.0
  %1939 = vmatpush1.msra.mxu0 0.0
  %1940 = vmatprep.subr.mxu0 0.0
  %1941 = vmatpush1.msra.mxu0 0.0
  %1942 = vmatprep.subr.mxu0 0.0
  %1943 = vmatpush1.msra.mxu0 0.0
  %1944 = vmatprep.subr.mxu0 0.0
  %1945 = vmatpush1.msra.mxu0 0.0
  %1946 = vmatprep.subr.mxu0 0.0
  %1947 = vmatpush1.msra.mxu0 0.0
  %1948 = vmatprep.subr.mxu0 0.0
  %1949 = vmatpush1.msra.mxu0 0.0
  %1950 = vmatprep.subr.mxu0 0.0
  %1951 = vmatpush1.msra.mxu0 0.0
  %1952 = vmatprep.mubr.f32.mxu0 0.0
  %1953 = vmatmul.mubr.f32.gmra.mrb[0].mxu0 %v1881
  %v1954 = vpop.f32.mrb[0].mxu0
  %v1955 = vadd.f32 0.0, %v1954
  %v1956 = vpop.f32.mrb[0].mxu0
  %1957 = vmatprep.mubr.f32.mxu0 0.0
  %1958 = vmatmul.mubr.f32.gmra.mrb[0].mxu0 %v1884
  %v1959 = vpop.f32.mrb[0].mxu0
  %v1960 = vadd.f32 0.0, %v1959
  %v1961 = vpop.f32.mrb[0].mxu0
  %1962 = vdwg.mxu0
  %v1963 = vpack.c.bf16 %v1960, %v1955
  %s1964 = scalar_lea.vmem %s3, 16
  %v1965 = vld [vmem:[%s1964] sm:$0xf]
  %1966 = vrot.lane.b32.xlu0 %v1734, 120
  %v1967 = vpop.permute.xlu0 %1966
  %1968 = vrot.lane.b32.xlu0 %v1735, 120
  %v1969 = vpop.permute.xlu0 %1968
  %1970 = vrot.lane.b32.xlu0 %v1745, 88
  %v1971 = vpop.permute.xlu0 %1970
  %1972 = vrot.lane.b32.xlu0 %v1746, 88
  %v1973 = vpop.permute.xlu0 %1972
  %v1974 = vsel %vm58, %v1967, 0
  %v1976 = vsel %vm58, %v1969, 0
  %v1978 = vsel %vm58, %v1971, 0
  %v1980 = vsel %vm58, %v1973, 0
  %1982 = vmatprep.subr.mxu0 0.0
  %1983 = vmatpush1.xpose.msra.mxu0 %v1978
  %1984 = vmatprep.subr.mxu0 0.0
  %1985 = vmatpush1.xpose.msra.mxu0 %v1980
  %1986 = vmatprep.subr.mxu0 0.0
  %1987 = vmatpush1.xpose.msra.mxu0 0.0
  %1988 = vmatprep.subr.mxu0 0.0
  %1989 = vmatpush1.xpose.msra.mxu0 0.0
  %1990 = vmatprep.subr.mxu0 0.0
  %1991 = vmatpush1.xpose.msra.mxu0 0.0
  %1992 = vmatprep.subr.mxu0 0.0
  %1993 = vmatpush1.xpose.msra.mxu0 0.0
  %1994 = vmatprep.subr.mxu0 0.0
  %1995 = vmatpush1.xpose.msra.mxu0 0.0
  %1996 = vmatprep.subr.mxu0 0.0
  %1997 = vmatpush1.xpose.msra.mxu0 0.0
  %1998 = vmatprep.subr.mxu0 0.0
  %1999 = vmatpush1.xpose.msra.mxu0 0.0
  %2000 = vmatprep.subr.mxu0 0.0
  %2001 = vmatpush1.xpose.msra.mxu0 0.0
  %2002 = vmatprep.subr.mxu0 0.0
  %2003 = vmatpush1.xpose.msra.mxu0 0.0
  %2004 = vmatprep.subr.mxu0 0.0
  %2005 = vmatpush1.xpose.msra.mxu0 0.0
  %2006 = vmatprep.subr.mxu0 0.0
  %2007 = vmatpush1.xpose.msra.mxu0 0.0
  %2008 = vmatprep.subr.mxu0 0.0
  %2009 = vmatpush1.xpose.msra.mxu0 0.0
  %2010 = vmatprep.subr.mxu0 0.0
  %2011 = vmatpush1.xpose.msra.mxu0 0.0
  %2012 = vmatprep.subr.mxu0 0.0
  %2013 = vmatpush1.xpose.msra.mxu0 0.0
  %2014 = vmatprep.subr.mxu0 0.0
  %2015 = vmatpush1.xpose.msra.mxu0 0.0
  %2016 = vmatprep.subr.mxu0 0.0
  %2017 = vmatpush1.xpose.msra.mxu0 0.0
  %2018 = vmatprep.subr.mxu0 0.0
  %2019 = vmatpush1.xpose.msra.mxu0 0.0
  %2020 = vmatprep.subr.mxu0 0.0
  %2021 = vmatpush1.xpose.msra.mxu0 0.0
  %2022 = vmatprep.subr.mxu0 0.0
  %2023 = vmatpush1.xpose.msra.mxu0 0.0
  %2024 = vmatprep.subr.mxu0 0.0
  %2025 = vmatpush1.xpose.msra.mxu0 0.0
  %2026 = vmatprep.subr.mxu0 0.0
  %2027 = vmatpush1.xpose.msra.mxu0 0.0
  %2028 = vmatprep.subr.mxu0 0.0
  %2029 = vmatpush1.xpose.msra.mxu0 0.0
  %2030 = vmatprep.subr.mxu0 0.0
  %2031 = vmatpush1.xpose.msra.mxu0 0.0
  %2032 = vmatprep.subr.mxu0 0.0
  %2033 = vmatpush1.xpose.msra.mxu0 0.0
  %2034 = vmatprep.subr.mxu0 0.0
  %2035 = vmatpush1.xpose.msra.mxu0 0.0
  %2036 = vmatprep.subr.mxu0 0.0
  %2037 = vmatpush1.xpose.msra.mxu0 0.0
  %2038 = vmatprep.subr.mxu0 0.0
  %2039 = vmatpush1.xpose.msra.mxu0 0.0
  %2040 = vmatprep.subr.mxu0 0.0
  %2041 = vmatpush1.xpose.msra.mxu0 0.0
  %2042 = vmatprep.subr.mxu0 0.0
  %2043 = vmatpush1.xpose.msra.mxu0 0.0
  %2044 = vmatprep.subr.mxu0 0.0
  %2045 = vmatpush1.xpose.msra.mxu0 0.0
  %2046 = vmatprep.mubr.f32.mxu0 0.0
  %2047 = vmatmul.mubr.f32.gmra.mrb[0].mxu0 %v1974
  %v2048 = vpop.f32.mrb[0].mxu0
  %v2049 = vadd.f32 0.0, %v2048
  %v2050 = vpop.f32.mrb[0].mxu0
  %2051 = vmatprep.mubr.f32.mxu0 0.0
  %2052 = vmatmul.mubr.f32.gmra.mrb[0].mxu0 %v1976
  %v2053 = vpop.f32.mrb[0].mxu0
  %v2054 = vadd.f32 0.0, %v2053
  %v2055 = vpop.f32.mrb[0].mxu0
  %2056 = vdwg.mxu0
  %v2057 = vmul.f32 %v2049, 0.35355338
  %v2058 = vmul.f32 %v2054, 0.35355338
  %v2059 = vsel %vm469, %v2057, -inf
  %2060 = vmax.xlane.f32.xlu0 %v2059
  %v2061 = vpop.xlane.xlu0 %2060
  %v2062 = vsel %vm473, %v2058, -inf
  %2063 = vmax.xlane.f32.xlu0 %v2062
  %v2064 = vpop.xlane.xlu0 %2063
  %v2065 = vsub.f32 %v2057, %v2061
  %v2066 = vsub.f32 %v2058, %v2064
  %v2067 = vmul.f32 %v2065, 1.442695
  %v2068 = vpow.pop %v2067
  %v2069 = vmul.f32 %v2066, 1.442695
  %v2070 = vpow.pop %v2069
  %v2071 = vsel %vm469, %v2068, 0.0
  %2072 = vadd.xlane.f32.xlu0 %v2071
  %v2073 = vpop.xlane.xlu0 %2072
  %v2074 = vsel %vm473, %v2070, 0.0
  %2075 = vadd.xlane.f32.xlu0 %v2074
  %v2076 = vpop.xlane.xlu0 %2075
  %v2077 = vrcp.pop %v2073
  %v2078 = vrcp.pop %v2076
  %v2079 = vmul.f32 %v2068, %v2077
  %v2080 = vmul.f32 %v2070, %v2078
  %2081 = vrot.lane.b32.xlu0 %v1756, 56
  %v2082 = vpop.permute.xlu0 %2081
  %2083 = vrot.lane.b32.xlu0 %v1757, 56
  %v2084 = vpop.permute.xlu0 %2083
  %v2087 = vsel %vm469, %v2079, 0
  %v2090 = vsel %vm469, %v2080, 0
  %v2092 = vsel %vm506, %v2084, 0
  %2094 = vmatprep.subr.mxu0 0.0
  %2095 = vmatpush1.msra.mxu0 %v2082
  %2096 = vmatprep.subr.mxu0 0.0
  %2097 = vmatpush1.msra.mxu0 %v2092
  %2098 = vmatprep.subr.mxu0 0.0
  %2099 = vmatpush1.msra.mxu0 0.0
  %2100 = vmatprep.subr.mxu0 0.0
  %2101 = vmatpush1.msra.mxu0 0.0
  %2102 = vmatprep.subr.mxu0 0.0
  %2103 = vmatpush1.msra.mxu0 0.0
  %2104 = vmatprep.subr.mxu0 0.0
  %2105 = vmatpush1.msra.mxu0 0.0
  %2106 = vmatprep.subr.mxu0 0.0
  %2107 = vmatpush1.msra.mxu0 0.0
  %2108 = vmatprep.subr.mxu0 0.0
  %2109 = vmatpush1.msra.mxu0 0.0
  %2110 = vmatprep.subr.mxu0 0.0
  %2111 = vmatpush1.msra.mxu0 0.0
  %2112 = vmatprep.subr.mxu0 0.0
  %2113 = vmatpush1.msra.mxu0 0.0
  %2114 = vmatprep.subr.mxu0 0.0
  %2115 = vmatpush1.msra.mxu0 0.0
  %2116 = vmatprep.subr.mxu0 0.0
  %2117 = vmatpush1.msra.mxu0 0.0
  %2118 = vmatprep.subr.mxu0 0.0
  %2119 = vmatpush1.msra.mxu0 0.0
  %2120 = vmatprep.subr.mxu0 0.0
  %2121 = vmatpush1.msra.mxu0 0.0
  %2122 = vmatprep.subr.mxu0 0.0
  %2123 = vmatpush1.msra.mxu0 0.0
  %2124 = vmatprep.subr.mxu0 0.0
  %2125 = vmatpush1.msra.mxu0 0.0
  %2126 = vmatprep.subr.mxu0 0.0
  %2127 = vmatpush1.msra.mxu0 0.0
  %2128 = vmatprep.subr.mxu0 0.0
  %2129 = vmatpush1.msra.mxu0 0.0
  %2130 = vmatprep.subr.mxu0 0.0
  %2131 = vmatpush1.msra.mxu0 0.0
  %2132 = vmatprep.subr.mxu0 0.0
  %2133 = vmatpush1.msra.mxu0 0.0
  %2134 = vmatprep.subr.mxu0 0.0
  %2135 = vmatpush1.msra.mxu0 0.0
  %2136 = vmatprep.subr.mxu0 0.0
  %2137 = vmatpush1.msra.mxu0 0.0
  %2138 = vmatprep.subr.mxu0 0.0
  %2139 = vmatpush1.msra.mxu0 0.0
  %2140 = vmatprep.subr.mxu0 0.0
  %2141 = vmatpush1.msra.mxu0 0.0
  %2142 = vmatprep.subr.mxu0 0.0
  %2143 = vmatpush1.msra.mxu0 0.0
  %2144 = vmatprep.subr.mxu0 0.0
  %2145 = vmatpush1.msra.mxu0 0.0
  %2146 = vmatprep.subr.mxu0 0.0
  %2147 = vmatpush1.msra.mxu0 0.0
  %2148 = vmatprep.subr.mxu0 0.0
  %2149 = vmatpush1.msra.mxu0 0.0
  %2150 = vmatprep.subr.mxu0 0.0
  %2151 = vmatpush1.msra.mxu0 0.0
  %2152 = vmatprep.subr.mxu0 0.0
  %2153 = vmatpush1.msra.mxu0 0.0
  %2154 = vmatprep.subr.mxu0 0.0
  %2155 = vmatpush1.msra.mxu0 0.0
  %2156 = vmatprep.subr.mxu0 0.0
  %2157 = vmatpush1.msra.mxu0 0.0
  %2158 = vmatprep.mubr.f32.mxu0 0.0
  %2159 = vmatmul.mubr.f32.gmra.mrb[0].mxu0 %v2087
  %v2160 = vpop.f32.mrb[0].mxu0
  %v2161 = vadd.f32 0.0, %v2160
  %v2162 = vpop.f32.mrb[0].mxu0
  %2163 = vmatprep.mubr.f32.mxu0 0.0
  %2164 = vmatmul.mubr.f32.gmra.mrb[0].mxu0 %v2090
  %v2165 = vpop.f32.mrb[0].mxu0
  %v2166 = vadd.f32 0.0, %v2165
  %v2167 = vpop.f32.mrb[0].mxu0
  %2168 = vdwg.mxu0
  %v2169 = vpack.c.bf16 %v2166, %v2161
  %s2170 = scalar_lea.vmem %s3, 20
  %v2171 = vld [vmem:[%s2170] sm:$0xf]
  %v2173 = vsel %vm58, %v2169, 0
  %v2176 = vsel %vm795, %v2171, 0
  %2178 = vmatprep.subr.bf16.mxu0 0
  %2179 = vmatpush1.bf16.msra.mxu0 %v2176
  %2180 = vmatprep.subr.bf16.mxu0 0
  %2181 = vmatpush1.bf16.msra.mxu0 0
  %2182 = vmatprep.subr.bf16.mxu0 0
  %2183 = vmatpush1.bf16.msra.mxu0 0
  %2184 = vmatprep.subr.bf16.mxu0 0
  %2185 = vmatpush1.bf16.msra.mxu0 0
  %2186 = vmatprep.subr.bf16.mxu0 0
  %2187 = vmatpush1.bf16.msra.mxu0 0
  %2188 = vmatprep.subr.bf16.mxu0 0
  %2189 = vmatpush1.bf16.msra.mxu0 0
  %2190 = vmatprep.subr.bf16.mxu0 0
  %2191 = vmatpush1.bf16.msra.mxu0 0
  %2192 = vmatprep.subr.bf16.mxu0 0
  %2193 = vmatpush1.bf16.msra.mxu0 0
  %2194 = vmatprep.subr.bf16.mxu0 0
  %2195 = vmatpush1.bf16.msra.mxu0 0
  %2196 = vmatprep.subr.bf16.mxu0 0
  %2197 = vmatpush1.bf16.msra.mxu0 0
  %2198 = vmatprep.subr.bf16.mxu0 0
  %2199 = vmatpush1.bf16.msra.mxu0 0
  %2200 = vmatprep.subr.bf16.mxu0 0
  %2201 = vmatpush1.bf16.msra.mxu0 0
  %2202 = vmatprep.subr.bf16.mxu0 0
  %2203 = vmatpush1.bf16.msra.mxu0 0
  %2204 = vmatprep.subr.bf16.mxu0 0
  %2205 = vmatpush1.bf16.msra.mxu0 0
  %2206 = vmatprep.subr.bf16.mxu0 0
  %2207 = vmatpush1.bf16.msra.mxu0 0
  %2208 = vmatprep.subr.bf16.mxu0 0
  %2209 = vmatpush1.bf16.msra.mxu0 0
  %2210 = vmatprep.mubr.bf16.mxu0 0
  %2211 = vmatmul.mubr.bf16.gmra.mrb[0].mxu0 %v2173
  %v2212 = vpop.f32.mrb[0].mxu0
  %v2213 = vadd.f32 0.0, %v2212
  %v2214 = vpop.f32.mrb[0].mxu0
  %v2215 = vpop.f32.mrb[0].mxu0
  %v2216 = vadd.f32 0.0, %v2215
  %v2217 = vpop.f32.mrb[0].mxu0
  %2218 = vdwg.mxu0
  %v2220 = vsel %vm58, %v1963, 0
  %v2223 = vsel %vm795, %v1965, 0
  %2225 = vmatprep.subr.bf16.mxu0 0
  %2226 = vmatpush1.bf16.msra.mxu0 %v2223
  %2227 = vmatprep.subr.bf16.mxu0 0
  %2228 = vmatpush1.bf16.msra.mxu0 0
  %2229 = vmatprep.subr.bf16.mxu0 0
  %2230 = vmatpush1.bf16.msra.mxu0 0
  %2231 = vmatprep.subr.bf16.mxu0 0
  %2232 = vmatpush1.bf16.msra.mxu0 0
  %2233 = vmatprep.subr.bf16.mxu0 0
  %2234 = vmatpush1.bf16.msra.mxu0 0
  %2235 = vmatprep.subr.bf16.mxu0 0
  %2236 = vmatpush1.bf16.msra.mxu0 0
  %2237 = vmatprep.subr.bf16.mxu0 0
  %2238 = vmatpush1.bf16.msra.mxu0 0
  %2239 = vmatprep.subr.bf16.mxu0 0
  %2240 = vmatpush1.bf16.msra.mxu0 0
  %2241 = vmatprep.subr.bf16.mxu0 0
  %2242 = vmatpush1.bf16.msra.mxu0 0
  %2243 = vmatprep.subr.bf16.mxu0 0
  %2244 = vmatpush1.bf16.msra.mxu0 0
  %2245 = vmatprep.subr.bf16.mxu0 0
  %2246 = vmatpush1.bf16.msra.mxu0 0
  %2247 = vmatprep.subr.bf16.mxu0 0
  %2248 = vmatpush1.bf16.msra.mxu0 0
  %2249 = vmatprep.subr.bf16.mxu0 0
  %2250 = vmatpush1.bf16.msra.mxu0 0
  %2251 = vmatprep.subr.bf16.mxu0 0
  %2252 = vmatpush1.bf16.msra.mxu0 0
  %2253 = vmatprep.subr.bf16.mxu0 0
  %2254 = vmatpush1.bf16.msra.mxu0 0
  %2255 = vmatprep.subr.bf16.mxu0 0
  %2256 = vmatpush1.bf16.msra.mxu0 0
  %2257 = vmatprep.mubr.bf16.mxu0 0
  %2258 = vmatmul.mubr.bf16.gmra.mrb[0].mxu0 %v2220
  %v2259 = vpop.f32.mrb[0].mxu0
  %v2260 = vadd.f32 %v2213, %v2259
  %v2261 = vpop.f32.mrb[0].mxu0
  %v2262 = vpop.f32.mrb[0].mxu0
  %v2263 = vadd.f32 %v2216, %v2262
  %v2264 = vpop.f32.mrb[0].mxu0
  %2265 = vdwg.mxu0
  %2266 = vrot.lane.b32.xlu0 %v1734, 112
  %v2267 = vpop.permute.xlu0 %2266
  %2268 = vrot.lane.b32.xlu0 %v1735, 112
  %v2269 = vpop.permute.xlu0 %2268
  %2270 = vrot.lane.b32.xlu0 %v1745, 80
  %v2271 = vpop.permute.xlu0 %2270
  %2272 = vrot.lane.b32.xlu0 %v1746, 80
  %v2273 = vpop.permute.xlu0 %2272
  %v2274 = vsel %vm58, %v2267, 0
  %v2276 = vsel %vm58, %v2269, 0
  %v2278 = vsel %vm58, %v2271, 0
  %v2280 = vsel %vm58, %v2273, 0
  %2282 = vmatprep.subr.mxu0 0.0
  %2283 = vmatpush1.xpose.msra.mxu0 %v2278
  %2284 = vmatprep.subr.mxu0 0.0
  %2285 = vmatpush1.xpose.msra.mxu0 %v2280
  %2286 = vmatprep.subr.mxu0 0.0
  %2287 = vmatpush1.xpose.msra.mxu0 0.0
  %2288 = vmatprep.subr.mxu0 0.0
  %2289 = vmatpush1.xpose.msra.mxu0 0.0
  %2290 = vmatprep.subr.mxu0 0.0
  %2291 = vmatpush1.xpose.msra.mxu0 0.0
  %2292 = vmatprep.subr.mxu0 0.0
  %2293 = vmatpush1.xpose.msra.mxu0 0.0
  %2294 = vmatprep.subr.mxu0 0.0
  %2295 = vmatpush1.xpose.msra.mxu0 0.0
  %2296 = vmatprep.subr.mxu0 0.0
  %2297 = vmatpush1.xpose.msra.mxu0 0.0
  %2298 = vmatprep.subr.mxu0 0.0
  %2299 = vmatpush1.xpose.msra.mxu0 0.0
  %2300 = vmatprep.subr.mxu0 0.0
  %2301 = vmatpush1.xpose.msra.mxu0 0.0
  %2302 = vmatprep.subr.mxu0 0.0
  %2303 = vmatpush1.xpose.msra.mxu0 0.0
  %2304 = vmatprep.subr.mxu0 0.0
  %2305 = vmatpush1.xpose.msra.mxu0 0.0
  %2306 = vmatprep.subr.mxu0 0.0
  %2307 = vmatpush1.xpose.msra.mxu0 0.0
  %2308 = vmatprep.subr.mxu0 0.0
  %2309 = vmatpush1.xpose.msra.mxu0 0.0
  %2310 = vmatprep.subr.mxu0 0.0
  %2311 = vmatpush1.xpose.msra.mxu0 0.0
  %2312 = vmatprep.subr.mxu0 0.0
  %2313 = vmatpush1.xpose.msra.mxu0 0.0
  %2314 = vmatprep.subr.mxu0 0.0
  %2315 = vmatpush1.xpose.msra.mxu0 0.0
  %2316 = vmatprep.subr.mxu0 0.0
  %2317 = vmatpush1.xpose.msra.mxu0 0.0
  %2318 = vmatprep.subr.mxu0 0.0
  %2319 = vmatpush1.xpose.msra.mxu0 0.0
  %2320 = vmatprep.subr.mxu0 0.0
  %2321 = vmatpush1.xpose.msra.mxu0 0.0
  %2322 = vmatprep.subr.mxu0 0.0
  %2323 = vmatpush1.xpose.msra.mxu0 0.0
  %2324 = vmatprep.subr.mxu0 0.0
  %2325 = vmatpush1.xpose.msra.mxu0 0.0
  %2326 = vmatprep.subr.mxu0 0.0
  %2327 = vmatpush1.xpose.msra.mxu0 0.0
  %2328 = vmatprep.subr.mxu0 0.0
  %2329 = vmatpush1.xpose.msra.mxu0 0.0
  %2330 = vmatprep.subr.mxu0 0.0
  %2331 = vmatpush1.xpose.msra.mxu0 0.0
  %2332 = vmatprep.subr.mxu0 0.0
  %2333 = vmatpush1.xpose.msra.mxu0 0.0
  %2334 = vmatprep.subr.mxu0 0.0
  %2335 = vmatpush1.xpose.msra.mxu0 0.0
  %2336 = vmatprep.subr.mxu0 0.0
  %2337 = vmatpush1.xpose.msra.mxu0 0.0
  %2338 = vmatprep.subr.mxu0 0.0
  %2339 = vmatpush1.xpose.msra.mxu0 0.0
  %2340 = vmatprep.subr.mxu0 0.0
  %2341 = vmatpush1.xpose.msra.mxu0 0.0
  %2342 = vmatprep.subr.mxu0 0.0
  %2343 = vmatpush1.xpose.msra.mxu0 0.0
  %2344 = vmatprep.subr.mxu0 0.0
  %2345 = vmatpush1.xpose.msra.mxu0 0.0
  %2346 = vmatprep.mubr.f32.mxu0 0.0
  %2347 = vmatmul.mubr.f32.gmra.mrb[0].mxu0 %v2274
  %v2348 = vpop.f32.mrb[0].mxu0
  %v2349 = vadd.f32 0.0, %v2348
  %v2350 = vpop.f32.mrb[0].mxu0
  %2351 = vmatprep.mubr.f32.mxu0 0.0
  %2352 = vmatmul.mubr.f32.gmra.mrb[0].mxu0 %v2276
  %v2353 = vpop.f32.mrb[0].mxu0
  %v2354 = vadd.f32 0.0, %v2353
  %v2355 = vpop.f32.mrb[0].mxu0
  %2356 = vdwg.mxu0
  %v2357 = vmul.f32 %v2349, 0.35355338
  %v2358 = vmul.f32 %v2354, 0.35355338
  %v2359 = vsel %vm469, %v2357, -inf
  %2360 = vmax.xlane.f32.xlu0 %v2359
  %v2361 = vpop.xlane.xlu0 %2360
  %v2362 = vsel %vm473, %v2358, -inf
  %2363 = vmax.xlane.f32.xlu0 %v2362
  %v2364 = vpop.xlane.xlu0 %2363
  %v2365 = vsub.f32 %v2357, %v2361
  %v2366 = vsub.f32 %v2358, %v2364
  %v2367 = vmul.f32 %v2365, 1.442695
  %v2368 = vpow.pop %v2367
  %v2369 = vmul.f32 %v2366, 1.442695
  %v2370 = vpow.pop %v2369
  %v2371 = vsel %vm469, %v2368, 0.0
  %2372 = vadd.xlane.f32.xlu0 %v2371
  %v2373 = vpop.xlane.xlu0 %2372
  %v2374 = vsel %vm473, %v2370, 0.0
  %2375 = vadd.xlane.f32.xlu0 %v2374
  %v2376 = vpop.xlane.xlu0 %2375
  %v2377 = vrcp.pop %v2373
  %v2378 = vrcp.pop %v2376
  %v2379 = vmul.f32 %v2368, %v2377
  %v2380 = vmul.f32 %v2370, %v2378
  %2381 = vrot.lane.b32.xlu0 %v1756, 48
  %v2382 = vpop.permute.xlu0 %2381
  %2383 = vrot.lane.b32.xlu0 %v1757, 48
  %v2384 = vpop.permute.xlu0 %2383
  %v2387 = vsel %vm469, %v2379, 0
  %v2390 = vsel %vm469, %v2380, 0
  %v2392 = vsel %vm506, %v2384, 0
  %2394 = vmatprep.subr.mxu0 0.0
  %2395 = vmatpush1.msra.mxu0 %v2382
  %2396 = vmatprep.subr.mxu0 0.0
  %2397 = vmatpush1.msra.mxu0 %v2392
  %2398 = vmatprep.subr.mxu0 0.0
  %2399 = vmatpush1.msra.mxu0 0.0
  %2400 = vmatprep.subr.mxu0 0.0
  %2401 = vmatpush1.msra.mxu0 0.0
  %2402 = vmatprep.subr.mxu0 0.0
  %2403 = vmatpush1.msra.mxu0 0.0
  %2404 = vmatprep.subr.mxu0 0.0
  %2405 = vmatpush1.msra.mxu0 0.0
  %2406 = vmatprep.subr.mxu0 0.0
  %2407 = vmatpush1.msra.mxu0 0.0
  %2408 = vmatprep.subr.mxu0 0.0
  %2409 = vmatpush1.msra.mxu0 0.0
  %2410 = vmatprep.subr.mxu0 0.0
  %2411 = vmatpush1.msra.mxu0 0.0
  %2412 = vmatprep.subr.mxu0 0.0
  %2413 = vmatpush1.msra.mxu0 0.0
  %2414 = vmatprep.subr.mxu0 0.0
  %2415 = vmatpush1.msra.mxu0 0.0
  %2416 = vmatprep.subr.mxu0 0.0
  %2417 = vmatpush1.msra.mxu0 0.0
  %2418 = vmatprep.subr.mxu0 0.0
  %2419 = vmatpush1.msra.mxu0 0.0
  %2420 = vmatprep.subr.mxu0 0.0
  %2421 = vmatpush1.msra.mxu0 0.0
  %2422 = vmatprep.subr.mxu0 0.0
  %2423 = vmatpush1.msra.mxu0 0.0
  %2424 = vmatprep.subr.mxu0 0.0
  %2425 = vmatpush1.msra.mxu0 0.0
  %2426 = vmatprep.subr.mxu0 0.0
  %2427 = vmatpush1.msra.mxu0 0.0
  %2428 = vmatprep.subr.mxu0 0.0
  %2429 = vmatpush1.msra.mxu0 0.0
  %2430 = vmatprep.subr.mxu0 0.0
  %2431 = vmatpush1.msra.mxu0 0.0
  %2432 = vmatprep.subr.mxu0 0.0
  %2433 = vmatpush1.msra.mxu0 0.0
  %2434 = vmatprep.subr.mxu0 0.0
  %2435 = vmatpush1.msra.mxu0 0.0
  %2436 = vmatprep.subr.mxu0 0.0
  %2437 = vmatpush1.msra.mxu0 0.0
  %2438 = vmatprep.subr.mxu0 0.0
  %2439 = vmatpush1.msra.mxu0 0.0
  %2440 = vmatprep.subr.mxu0 0.0
  %2441 = vmatpush1.msra.mxu0 0.0
  %2442 = vmatprep.subr.mxu0 0.0
  %2443 = vmatpush1.msra.mxu0 0.0
  %2444 = vmatprep.subr.mxu0 0.0
  %2445 = vmatpush1.msra.mxu0 0.0
  %2446 = vmatprep.subr.mxu0 0.0
  %2447 = vmatpush1.msra.mxu0 0.0
  %2448 = vmatprep.subr.mxu0 0.0
  %2449 = vmatpush1.msra.mxu0 0.0
  %2450 = vmatprep.subr.mxu0 0.0
  %2451 = vmatpush1.msra.mxu0 0.0
  %2452 = vmatprep.subr.mxu0 0.0
  %2453 = vmatpush1.msra.mxu0 0.0
  %2454 = vmatprep.subr.mxu0 0.0
  %2455 = vmatpush1.msra.mxu0 0.0
  %2456 = vmatprep.subr.mxu0 0.0
  %2457 = vmatpush1.msra.mxu0 0.0
  %2458 = vmatprep.mubr.f32.mxu0 0.0
  %2459 = vmatmul.mubr.f32.gmra.mrb[0].mxu0 %v2387
  %v2460 = vpop.f32.mrb[0].mxu0
  %v2461 = vadd.f32 0.0, %v2460
  %v2462 = vpop.f32.mrb[0].mxu0
  %2463 = vmatprep.mubr.f32.mxu0 0.0
  %2464 = vmatmul.mubr.f32.gmra.mrb[0].mxu0 %v2390
  %v2465 = vpop.f32.mrb[0].mxu0
  %v2466 = vadd.f32 0.0, %v2465
  %v2467 = vpop.f32.mrb[0].mxu0
  %2468 = vdwg.mxu0
  %v2469 = vpack.c.bf16 %v2466, %v2461
  %s2470 = scalar_lea.vmem %s3, 24
  %v2471 = vld [vmem:[%s2470] sm:$0xf]
  %v2473 = vsel %vm58, %v2469, 0
  %v2476 = vsel %vm795, %v2471, 0
  %2478 = vmatprep.subr.bf16.mxu0 0
  %2479 = vmatpush1.bf16.msra.mxu0 %v2476
  %2480 = vmatprep.subr.bf16.mxu0 0
  %2481 = vmatpush1.bf16.msra.mxu0 0
  %2482 = vmatprep.subr.bf16.mxu0 0
  %2483 = vmatpush1.bf16.msra.mxu0 0
  %2484 = vmatprep.subr.bf16.mxu0 0
  %2485 = vmatpush1.bf16.msra.mxu0 0
  %2486 = vmatprep.subr.bf16.mxu0 0
  %2487 = vmatpush1.bf16.msra.mxu0 0
  %2488 = vmatprep.subr.bf16.mxu0 0
  %2489 = vmatpush1.bf16.msra.mxu0 0
  %2490 = vmatprep.subr.bf16.mxu0 0
  %2491 = vmatpush1.bf16.msra.mxu0 0
  %2492 = vmatprep.subr.bf16.mxu0 0
  %2493 = vmatpush1.bf16.msra.mxu0 0
  %2494 = vmatprep.subr.bf16.mxu0 0
  %2495 = vmatpush1.bf16.msra.mxu0 0
  %2496 = vmatprep.subr.bf16.mxu0 0
  %2497 = vmatpush1.bf16.msra.mxu0 0
  %2498 = vmatprep.subr.bf16.mxu0 0
  %2499 = vmatpush1.bf16.msra.mxu0 0
  %2500 = vmatprep.subr.bf16.mxu0 0
  %2501 = vmatpush1.bf16.msra.mxu0 0
  %2502 = vmatprep.subr.bf16.mxu0 0
  %2503 = vmatpush1.bf16.msra.mxu0 0
  %2504 = vmatprep.subr.bf16.mxu0 0
  %2505 = vmatpush1.bf16.msra.mxu0 0
  %2506 = vmatprep.subr.bf16.mxu0 0
  %2507 = vmatpush1.bf16.msra.mxu0 0
  %2508 = vmatprep.subr.bf16.mxu0 0
  %2509 = vmatpush1.bf16.msra.mxu0 0
  %2510 = vmatprep.mubr.bf16.mxu0 0
  %2511 = vmatmul.mubr.bf16.gmra.mrb[0].mxu0 %v2473
  %v2512 = vpop.f32.mrb[0].mxu0
  %v2513 = vadd.f32 0.0, %v2512
  %v2514 = vpop.f32.mrb[0].mxu0
  %v2515 = vpop.f32.mrb[0].mxu0
  %v2516 = vadd.f32 0.0, %v2515
  %v2517 = vpop.f32.mrb[0].mxu0
  %2518 = vdwg.mxu0
  %v2519 = vadd.f32 %v2260, %v2513
  %v2520 = vadd.f32 %v2263, %v2516
  %2521 = vrot.lane.b32.xlu0 %v1734, 104
  %v2522 = vpop.permute.xlu0 %2521
  %2523 = vrot.lane.b32.xlu0 %v1735, 104
  %v2524 = vpop.permute.xlu0 %2523
  %2525 = vrot.lane.b32.xlu0 %v1745, 72
  %v2526 = vpop.permute.xlu0 %2525
  %2527 = vrot.lane.b32.xlu0 %v1746, 72
  %v2528 = vpop.permute.xlu0 %2527
  %v2529 = vsel %vm58, %v2522, 0
  %v2531 = vsel %vm58, %v2524, 0
  %v2533 = vsel %vm58, %v2526, 0
  %v2535 = vsel %vm58, %v2528, 0
  %2537 = vmatprep.subr.mxu0 0.0
  %2538 = vmatpush1.xpose.msra.mxu0 %v2533
  %2539 = vmatprep.subr.mxu0 0.0
  %2540 = vmatpush1.xpose.msra.mxu0 %v2535
  %2541 = vmatprep.subr.mxu0 0.0
  %2542 = vmatpush1.xpose.msra.mxu0 0.0
  %2543 = vmatprep.subr.mxu0 0.0
  %2544 = vmatpush1.xpose.msra.mxu0 0.0
  %2545 = vmatprep.subr.mxu0 0.0
  %2546 = vmatpush1.xpose.msra.mxu0 0.0
  %2547 = vmatprep.subr.mxu0 0.0
  %2548 = vmatpush1.xpose.msra.mxu0 0.0
  %2549 = vmatprep.subr.mxu0 0.0
  %2550 = vmatpush1.xpose.msra.mxu0 0.0
  %2551 = vmatprep.subr.mxu0 0.0
  %2552 = vmatpush1.xpose.msra.mxu0 0.0
  %2553 = vmatprep.subr.mxu0 0.0
  %2554 = vmatpush1.xpose.msra.mxu0 0.0
  %2555 = vmatprep.subr.mxu0 0.0
  %2556 = vmatpush1.xpose.msra.mxu0 0.0
  %2557 = vmatprep.subr.mxu0 0.0
  %2558 = vmatpush1.xpose.msra.mxu0 0.0
  %2559 = vmatprep.subr.mxu0 0.0
  %2560 = vmatpush1.xpose.msra.mxu0 0.0
  %2561 = vmatprep.subr.mxu0 0.0
  %2562 = vmatpush1.xpose.msra.mxu0 0.0
  %2563 = vmatprep.subr.mxu0 0.0
  %2564 = vmatpush1.xpose.msra.mxu0 0.0
  %2565 = vmatprep.subr.mxu0 0.0
  %2566 = vmatpush1.xpose.msra.mxu0 0.0
  %2567 = vmatprep.subr.mxu0 0.0
  %2568 = vmatpush1.xpose.msra.mxu0 0.0
  %2569 = vmatprep.subr.mxu0 0.0
  %2570 = vmatpush1.xpose.msra.mxu0 0.0
  %2571 = vmatprep.subr.mxu0 0.0
  %2572 = vmatpush1.xpose.msra.mxu0 0.0
  %2573 = vmatprep.subr.mxu0 0.0
  %2574 = vmatpush1.xpose.msra.mxu0 0.0
  %2575 = vmatprep.subr.mxu0 0.0
  %2576 = vmatpush1.xpose.msra.mxu0 0.0
  %2577 = vmatprep.subr.mxu0 0.0
  %2578 = vmatpush1.xpose.msra.mxu0 0.0
  %2579 = vmatprep.subr.mxu0 0.0
  %2580 = vmatpush1.xpose.msra.mxu0 0.0
  %2581 = vmatprep.subr.mxu0 0.0
  %2582 = vmatpush1.xpose.msra.mxu0 0.0
  %2583 = vmatprep.subr.mxu0 0.0
  %2584 = vmatpush1.xpose.msra.mxu0 0.0
  %2585 = vmatprep.subr.mxu0 0.0
  %2586 = vmatpush1.xpose.msra.mxu0 0.0
  %2587 = vmatprep.subr.mxu0 0.0
  %2588 = vmatpush1.xpose.msra.mxu0 0.0
  %2589 = vmatprep.subr.mxu0 0.0
  %2590 = vmatpush1.xpose.msra.mxu0 0.0
  %2591 = vmatprep.subr.mxu0 0.0
  %2592 = vmatpush1.xpose.msra.mxu0 0.0
  %2593 = vmatprep.subr.mxu0 0.0
  %2594 = vmatpush1.xpose.msra.mxu0 0.0
  %2595 = vmatprep.subr.mxu0 0.0
  %2596 = vmatpush1.xpose.msra.mxu0 0.0
  %2597 = vmatprep.subr.mxu0 0.0
  %2598 = vmatpush1.xpose.msra.mxu0 0.0
  %2599 = vmatprep.subr.mxu0 0.0
  %2600 = vmatpush1.xpose.msra.mxu0 0.0
  %2601 = vmatprep.mubr.f32.mxu0 0.0
  %2602 = vmatmul.mubr.f32.gmra.mrb[0].mxu0 %v2529
  %v2603 = vpop.f32.mrb[0].mxu0
  %v2604 = vadd.f32 0.0, %v2603
  %v2605 = vpop.f32.mrb[0].mxu0
  %2606 = vmatprep.mubr.f32.mxu0 0.0
  %2607 = vmatmul.mubr.f32.gmra.mrb[0].mxu0 %v2531
  %v2608 = vpop.f32.mrb[0].mxu0
  %v2609 = vadd.f32 0.0, %v2608
  %v2610 = vpop.f32.mrb[0].mxu0
  %2611 = vdwg.mxu0
  %v2612 = vmul.f32 %v2604, 0.35355338
  %v2613 = vmul.f32 %v2609, 0.35355338
  %v2614 = vsel %vm469, %v2612, -inf
  %2615 = vmax.xlane.f32.xlu0 %v2614
  %v2616 = vpop.xlane.xlu0 %2615
  %v2617 = vsel %vm473, %v2613, -inf
  %2618 = vmax.xlane.f32.xlu0 %v2617
  %v2619 = vpop.xlane.xlu0 %2618
  %v2620 = vsub.f32 %v2612, %v2616
  %v2621 = vsub.f32 %v2613, %v2619
  %v2622 = vmul.f32 %v2620, 1.442695
  %v2623 = vpow.pop %v2622
  %v2624 = vmul.f32 %v2621, 1.442695
  %v2625 = vpow.pop %v2624
  %v2626 = vsel %vm469, %v2623, 0.0
  %2627 = vadd.xlane.f32.xlu0 %v2626
  %v2628 = vpop.xlane.xlu0 %2627
  %v2629 = vsel %vm473, %v2625, 0.0
  %2630 = vadd.xlane.f32.xlu0 %v2629
  %v2631 = vpop.xlane.xlu0 %2630
  %v2632 = vrcp.pop %v2628
  %v2633 = vrcp.pop %v2631
  %v2634 = vmul.f32 %v2623, %v2632
  %v2635 = vmul.f32 %v2625, %v2633
  %2636 = vrot.lane.b32.xlu0 %v1756, 40
  %v2637 = vpop.permute.xlu0 %2636
  %2638 = vrot.lane.b32.xlu0 %v1757, 40
  %v2639 = vpop.permute.xlu0 %2638
  %v2642 = vsel %vm469, %v2634, 0
  %v2645 = vsel %vm469, %v2635, 0
  %v2647 = vsel %vm506, %v2639, 0
  %2649 = vmatprep.subr.mxu0 0.0
  %2650 = vmatpush1.msra.mxu0 %v2637
  %2651 = vmatprep.subr.mxu0 0.0
  %2652 = vmatpush1.msra.mxu0 %v2647
  %2653 = vmatprep.subr.mxu0 0.0
  %2654 = vmatpush1.msra.mxu0 0.0
  %2655 = vmatprep.subr.mxu0 0.0
  %2656 = vmatpush1.msra.mxu0 0.0
  %2657 = vmatprep.subr.mxu0 0.0
  %2658 = vmatpush1.msra.mxu0 0.0
  %2659 = vmatprep.subr.mxu0 0.0
  %2660 = vmatpush1.msra.mxu0 0.0
  %2661 = vmatprep.subr.mxu0 0.0
  %2662 = vmatpush1.msra.mxu0 0.0
  %2663 = vmatprep.subr.mxu0 0.0
  %2664 = vmatpush1.msra.mxu0 0.0
  %2665 = vmatprep.subr.mxu0 0.0
  %2666 = vmatpush1.msra.mxu0 0.0
  %2667 = vmatprep.subr.mxu0 0.0
  %2668 = vmatpush1.msra.mxu0 0.0
  %2669 = vmatprep.subr.mxu0 0.0
  %2670 = vmatpush1.msra.mxu0 0.0
  %2671 = vmatprep.subr.mxu0 0.0
  %2672 = vmatpush1.msra.mxu0 0.0
  %2673 = vmatprep.subr.mxu0 0.0
  %2674 = vmatpush1.msra.mxu0 0.0
  %2675 = vmatprep.subr.mxu0 0.0
  %2676 = vmatpush1.msra.mxu0 0.0
  %2677 = vmatprep.subr.mxu0 0.0
  %2678 = vmatpush1.msra.mxu0 0.0
  %2679 = vmatprep.subr.mxu0 0.0
  %2680 = vmatpush1.msra.mxu0 0.0
  %2681 = vmatprep.subr.mxu0 0.0
  %2682 = vmatpush1.msra.mxu0 0.0
  %2683 = vmatprep.subr.mxu0 0.0
  %2684 = vmatpush1.msra.mxu0 0.0
  %2685 = vmatprep.subr.mxu0 0.0
  %2686 = vmatpush1.msra.mxu0 0.0
  %2687 = vmatprep.subr.mxu0 0.0
  %2688 = vmatpush1.msra.mxu0 0.0
  %2689 = vmatprep.subr.mxu0 0.0
  %2690 = vmatpush1.msra.mxu0 0.0
  %2691 = vmatprep.subr.mxu0 0.0
  %2692 = vmatpush1.msra.mxu0 0.0
  %2693 = vmatprep.subr.mxu0 0.0
  %2694 = vmatpush1.msra.mxu0 0.0
  %2695 = vmatprep.subr.mxu0 0.0
  %2696 = vmatpush1.msra.mxu0 0.0
  %2697 = vmatprep.subr.mxu0 0.0
  %2698 = vmatpush1.msra.mxu0 0.0
  %2699 = vmatprep.subr.mxu0 0.0
  %2700 = vmatpush1.msra.mxu0 0.0
  %2701 = vmatprep.subr.mxu0 0.0
  %2702 = vmatpush1.msra.mxu0 0.0
  %2703 = vmatprep.subr.mxu0 0.0
  %2704 = vmatpush1.msra.mxu0 0.0
  %2705 = vmatprep.subr.mxu0 0.0
  %2706 = vmatpush1.msra.mxu0 0.0
  %2707 = vmatprep.subr.mxu0 0.0
  %2708 = vmatpush1.msra.mxu0 0.0
  %2709 = vmatprep.subr.mxu0 0.0
  %2710 = vmatpush1.msra.mxu0 0.0
  %2711 = vmatprep.subr.mxu0 0.0
  %2712 = vmatpush1.msra.mxu0 0.0
  %2713 = vmatprep.mubr.f32.mxu0 0.0
  %2714 = vmatmul.mubr.f32.gmra.mrb[0].mxu0 %v2642
  %v2715 = vpop.f32.mrb[0].mxu0
  %v2716 = vadd.f32 0.0, %v2715
  %v2717 = vpop.f32.mrb[0].mxu0
  %2718 = vmatprep.mubr.f32.mxu0 0.0
  %2719 = vmatmul.mubr.f32.gmra.mrb[0].mxu0 %v2645
  %v2720 = vpop.f32.mrb[0].mxu0
  %v2721 = vadd.f32 0.0, %v2720
  %v2722 = vpop.f32.mrb[0].mxu0
  %2723 = vdwg.mxu0
  %v2724 = vpack.c.bf16 %v2721, %v2716
  %s2725 = scalar_lea.vmem %s3, 28
  %v2726 = vld [vmem:[%s2725] sm:$0xf]
  %v2728 = vsel %vm58, %v2724, 0
  %v2731 = vsel %vm795, %v2726, 0
  %2733 = vmatprep.subr.bf16.mxu0 0
  %2734 = vmatpush1.bf16.msra.mxu0 %v2731
  %2735 = vmatprep.subr.bf16.mxu0 0
  %2736 = vmatpush1.bf16.msra.mxu0 0
  %2737 = vmatprep.subr.bf16.mxu0 0
  %2738 = vmatpush1.bf16.msra.mxu0 0
  %2739 = vmatprep.subr.bf16.mxu0 0
  %2740 = vmatpush1.bf16.msra.mxu0 0
  %2741 = vmatprep.subr.bf16.mxu0 0
  %2742 = vmatpush1.bf16.msra.mxu0 0
  %2743 = vmatprep.subr.bf16.mxu0 0
  %2744 = vmatpush1.bf16.msra.mxu0 0
  %2745 = vmatprep.subr.bf16.mxu0 0
  %2746 = vmatpush1.bf16.msra.mxu0 0
  %2747 = vmatprep.subr.bf16.mxu0 0
  %2748 = vmatpush1.bf16.msra.mxu0 0
  %2749 = vmatprep.subr.bf16.mxu0 0
  %2750 = vmatpush1.bf16.msra.mxu0 0
  %2751 = vmatprep.subr.bf16.mxu0 0
  %2752 = vmatpush1.bf16.msra.mxu0 0
  %2753 = vmatprep.subr.bf16.mxu0 0
  %2754 = vmatpush1.bf16.msra.mxu0 0
  %2755 = vmatprep.subr.bf16.mxu0 0
  %2756 = vmatpush1.bf16.msra.mxu0 0
  %2757 = vmatprep.subr.bf16.mxu0 0
  %2758 = vmatpush1.bf16.msra.mxu0 0
  %2759 = vmatprep.subr.bf16.mxu0 0
  %2760 = vmatpush1.bf16.msra.mxu0 0
  %2761 = vmatprep.subr.bf16.mxu0 0
  %2762 = vmatpush1.bf16.msra.mxu0 0
  %2763 = vmatprep.subr.bf16.mxu0 0
  %2764 = vmatpush1.bf16.msra.mxu0 0
  %2765 = vmatprep.mubr.bf16.mxu0 0
  %2766 = vmatmul.mubr.bf16.gmra.mrb[0].mxu0 %v2728
  %v2767 = vpop.f32.mrb[0].mxu0
  %v2768 = vadd.f32 0.0, %v2767
  %v2769 = vpop.f32.mrb[0].mxu0
  %v2770 = vpop.f32.mrb[0].mxu0
  %v2771 = vadd.f32 0.0, %v2770
  %v2772 = vpop.f32.mrb[0].mxu0
  %2773 = vdwg.mxu0
  %v2774 = vadd.f32 %v2519, %v2768
  %v2775 = vadd.f32 %v2520, %v2771
  %v2776 = vld [vmem:[%s1 + $0x33] sm:$0x1]
  %v2777 = vlaneseq
  %v2778 = vshrl.u32 %v2777, 7
  %v2779 = vsub.s32 0, %v2778
  %v2780 = vrot.slane %v2776, %v2779
  %v2781 = vadd.f32 %v2774, %v2780
  %v2782 = vadd.f32 %v2775, %v2780
  %v2783 = vadd.f32 %v1665, %v2781
  %v2784 = vadd.f32 %v1666, %v2782
  %v2785 = vld [vmem:[%s1 + $0x34] sm:$0x1]
  %v2786 = vld [vmem:[%s1 + $0x35] sm:$0x1]
  %v2787 = vsel %vm245, %v2783, 0.0
  %2788 = vadd.xlane.f32.xlu0 %v2787
  %v2789 = vpop.xlane.xlu0 %2788
  %v2790 = vsel %vm249, %v2784, 0.0
  %2791 = vadd.xlane.f32.xlu0 %v2790
  %v2792 = vpop.xlane.xlu0 %2791
  %v2793 = vmul.f32 %v2789, %v253
  %v2794 = vmul.f32 %v2792, %v253
  %v2795 = vsub.f32 %v2783, %v2793
  %v2796 = vsub.f32 %v2784, %v2794
  %v2797 = vmul.f32 %v2795, %v2795
  %v2798 = vmul.f32 %v2796, %v2796
  %v2799 = vsel %vm245, %v2797, 0.0
  %2800 = vadd.xlane.f32.xlu0 %v2799
  %v2801 = vpop.xlane.xlu0 %2800
  %v2802 = vsel %vm249, %v2798, 0.0
  %2803 = vadd.xlane.f32.xlu0 %v2802
  %v2804 = vpop.xlane.xlu0 %2803
  %v2805 = vmul.f32 %v2801, %v253
  %v2806 = vmul.f32 %v2804, %v253
  %v2807 = vadd.f32 %v2805, 1e-05
  %v2808 = vadd.f32 %v2806, 1e-05
  %v2809 = vrsqrt.pop %v2807
  %v2810 = vrsqrt.pop %v2808
  %v2811 = vmul.f32 %v2795, %v2809
  %v2812 = vmul.f32 %v2796, %v2810
  %v2813 = vlaneseq
  %v2814 = vshrl.u32 %v2813, 7
  %v2815 = vsub.s32 0, %v2814
  %v2816 = vrot.slane %v2785, %v2815
  %v2817 = vmul.f32 %v2811, %v2816
  %v2818 = vmul.f32 %v2812, %v2816
  %v2819 = vlaneseq
  %v2820 = vshrl.u32 %v2819, 7
  %v2821 = vsub.s32 0, %v2820
  %v2822 = vrot.slane %v2786, %v2821
  %v2823 = vadd.f32 %v2817, %v2822
  %v2824 = vadd.f32 %v2818, %v2822
  %v2825 = vpack.c.bf16 %v2824, %v2823
  %s2826 = scalar_lea.vmem %s4, 16
  %v2827 = vld [vmem:[%s2826] sm:$0xf]
  %v2828 = vld [vmem:[%s2826 + $0x4] sm:$0xf]
  %v2829 = vld [vmem:[%s2826 + $0x8] sm:$0xf]
  %v2830 = vld [vmem:[%s2826 + $0xc] sm:$0xf]
  %v2831 = vld [vmem:[%s1 + $0x36] sm:$0x1]
  %v2832 = vlaneseq
  %v2833 = vshrl.u32 %v2832, 7
  %v2834 = vsub.s32 0, %v2833
  %v2835 = vrot.slane %v2831, %v2834
  %v2840 = vunpack.c.l.b16 %v2827
  %v2841 = vunpack.c.l.b16 %v2828
  %v2842 = vunpack.c.l.b16 %v2829
  %v2843 = vunpack.c.l.b16 %v2830
  %v2844 = vpack.c.b16 %v2841, %v2840
  %v2845 = vpack.c.b16 %v2843, %v2842
  %v2849 = vsel %vm245, %v2825, 0
  %2851 = vmatprep.subr.bf16.mxu0 0
  %2852 = vmatpush1.bf16.msra.mxu0 %v2844
  %2853 = vmatprep.subr.bf16.mxu0 0
  %2854 = vmatpush1.bf16.msra.mxu0 %v2845
  %2855 = vmatprep.subr.bf16.mxu0 0
  %2856 = vmatpush1.bf16.msra.mxu0 0
  %2857 = vmatprep.subr.bf16.mxu0 0
  %2858 = vmatpush1.bf16.msra.mxu0 0
  %2859 = vmatprep.subr.bf16.mxu0 0
  %2860 = vmatpush1.bf16.msra.mxu0 0
  %2861 = vmatprep.subr.bf16.mxu0 0
  %2862 = vmatpush1.bf16.msra.mxu0 0
  %2863 = vmatprep.subr.bf16.mxu0 0
  %2864 = vmatpush1.bf16.msra.mxu0 0
  %2865 = vmatprep.subr.bf16.mxu0 0
  %2866 = vmatpush1.bf16.msra.mxu0 0
  %2867 = vmatprep.subr.bf16.mxu0 0
  %2868 = vmatpush1.bf16.msra.mxu0 0
  %2869 = vmatprep.subr.bf16.mxu0 0
  %2870 = vmatpush1.bf16.msra.mxu0 0
  %2871 = vmatprep.subr.bf16.mxu0 0
  %2872 = vmatpush1.bf16.msra.mxu0 0
  %2873 = vmatprep.subr.bf16.mxu0 0
  %2874 = vmatpush1.bf16.msra.mxu0 0
  %2875 = vmatprep.subr.bf16.mxu0 0
  %2876 = vmatpush1.bf16.msra.mxu0 0
  %2877 = vmatprep.subr.bf16.mxu0 0
  %2878 = vmatpush1.bf16.msra.mxu0 0
  %2879 = vmatprep.subr.bf16.mxu0 0
  %2880 = vmatpush1.bf16.msra.mxu0 0
  %2881 = vmatprep.subr.bf16.mxu0 0
  %2882 = vmatpush1.bf16.msra.mxu0 0
  %2883 = vmatprep.mubr.bf16.mxu0 0
  %2884 = vmatmul.mubr.bf16.gmra.mrb[0].mxu0 %v2849
  %v2885 = vpop.f32.mrb[0].mxu0
  %v2886 = vadd.f32 %v2835, %v2885
  %v2887 = vpop.f32.mrb[0].mxu0
  %v2888 = vpop.f32.mrb[0].mxu0
  %v2889 = vadd.f32 %v2835, %v2888
  %v2890 = vpop.f32.mrb[0].mxu0
  %2891 = vdwg.mxu0
  %v2892 = vmax.f32 %v2886, 0.0
  %v2893 = vmax.f32 %v2889, 0.0
  %v2894 = vpack.c.bf16 %v2893, %v2892
  %s2895 = scalar_lea.vmem %s5, 64
  %v2896 = vld [vmem:[%s2895] sm:$0xf]
  %v2897 = vld [vmem:[%s2895 + $0x4] sm:$0xf]
  %v2898 = vld [vmem:[%s2895 + $0x8] sm:$0xf]
  %v2899 = vld [vmem:[%s2895 + $0xc] sm:$0xf]
  %v2900 = vld [vmem:[%s2895 + $0x10] sm:$0xf]
  %v2901 = vld [vmem:[%s2895 + $0x14] sm:$0xf]
  %v2902 = vld [vmem:[%s2895 + $0x18] sm:$0xf]
  %v2903 = vld [vmem:[%s2895 + $0x1c] sm:$0xf]
  %v2904 = vld [vmem:[%s2895 + $0x20] sm:$0xf]
  %v2905 = vld [vmem:[%s2895 + $0x24] sm:$0xf]
  %v2906 = vld [vmem:[%s2895 + $0x28] sm:$0xf]
  %v2907 = vld [vmem:[%s2895 + $0x2c] sm:$0xf]
  %v2908 = vld [vmem:[%s2895 + $0x30] sm:$0xf]
  %v2909 = vld [vmem:[%s2895 + $0x34] sm:$0xf]
  %v2910 = vld [vmem:[%s2895 + $0x38] sm:$0xf]
  %v2911 = vld [vmem:[%s2895 + $0x3c] sm:$0xf]
  %v2912 = vld [vmem:[%s1 + $0x37] sm:$0x1]
  %v2913 = vlaneseq
  %v2914 = vshrl.u32 %v2913, 7
  %v2915 = vsub.s32 0, %v2914
  %v2916 = vrot.slane %v2912, %v2915
  %v2933 = vunpack.c.l.b16 %v2896
  %v2934 = vunpack.c.l.b16 %v2897
  %v2935 = vunpack.c.l.b16 %v2898
  %v2936 = vunpack.c.l.b16 %v2899
  %v2937 = vunpack.c.l.b16 %v2900
  %v2938 = vunpack.c.l.b16 %v2901
  %v2939 = vunpack.c.l.b16 %v2902
  %v2940 = vunpack.c.l.b16 %v2903
  %v2941 = vunpack.c.l.b16 %v2904
  %v2942 = vunpack.c.l.b16 %v2905
  %v2943 = vunpack.c.l.b16 %v2906
  %v2944 = vunpack.c.l.b16 %v2907
  %v2945 = vunpack.c.l.b16 %v2908
  %v2946 = vunpack.c.l.b16 %v2909
  %v2947 = vunpack.c.l.b16 %v2910
  %v2948 = vunpack.c.l.b16 %v2911
  %v2949 = vpack.c.b16 %v2934, %v2933
  %v2950 = vpack.c.b16 %v2936, %v2935
  %v2951 = vpack.c.b16 %v2938, %v2937
  %v2952 = vpack.c.b16 %v2940, %v2939
  %v2953 = vpack.c.b16 %v2942, %v2941
  %v2954 = vpack.c.b16 %v2944, %v2943
  %v2955 = vpack.c.b16 %v2946, %v2945
  %v2956 = vpack.c.b16 %v2948, %v2947
  %2965 = vmatprep.subr.bf16.mxu0 0
  %2966 = vmatpush1.bf16.msra.mxu0 %v2949
  %2967 = vmatprep.subr.bf16.mxu0 0
  %2968 = vmatpush1.bf16.msra.mxu0 %v2950
  %2969 = vmatprep.subr.bf16.mxu0 0
  %2970 = vmatpush1.bf16.msra.mxu0 %v2951
  %2971 = vmatprep.subr.bf16.mxu0 0
  %2972 = vmatpush1.bf16.msra.mxu0 %v2952
  %2973 = vmatprep.subr.bf16.mxu0 0
  %2974 = vmatpush1.bf16.msra.mxu0 %v2953
  %2975 = vmatprep.subr.bf16.mxu0 0
  %2976 = vmatpush1.bf16.msra.mxu0 %v2954
  %2977 = vmatprep.subr.bf16.mxu0 0
  %2978 = vmatpush1.bf16.msra.mxu0 %v2955
  %2979 = vmatprep.subr.bf16.mxu0 0
  %2980 = vmatpush1.bf16.msra.mxu0 %v2956
  %2981 = vmatprep.subr.bf16.mxu0 0
  %2982 = vmatpush1.bf16.msra.mxu0 0
  %2983 = vmatprep.subr.bf16.mxu0 0
  %2984 = vmatpush1.bf16.msra.mxu0 0
  %2985 = vmatprep.subr.bf16.mxu0 0
  %2986 = vmatpush1.bf16.msra.mxu0 0
  %2987 = vmatprep.subr.bf16.mxu0 0
  %2988 = vmatpush1.bf16.msra.mxu0 0
  %2989 = vmatprep.subr.bf16.mxu0 0
  %2990 = vmatpush1.bf16.msra.mxu0 0
  %2991 = vmatprep.subr.bf16.mxu0 0
  %2992 = vmatpush1.bf16.msra.mxu0 0
  %2993 = vmatprep.subr.bf16.mxu0 0
  %2994 = vmatpush1.bf16.msra.mxu0 0
  %2995 = vmatprep.subr.bf16.mxu0 0
  %2996 = vmatpush1.bf16.msra.mxu0 0
  %2997 = vmatprep.mubr.bf16.mxu0 0
  %2998 = vmatmul.mubr.bf16.gmra.mrb[0].mxu0 %v2894
  %v2999 = vpop.f32.mrb[0].mxu0
  %v3000 = vadd.f32 %v2916, %v2999
  %v3001 = vpop.f32.mrb[0].mxu0
  %v3002 = vpop.f32.mrb[0].mxu0
  %v3003 = vadd.f32 %v2916, %v3002
  %v3004 = vpop.f32.mrb[0].mxu0
  %3005 = vdwg.mxu0
  %v3006 = vadd.f32 %v2823, %v3000
  %v3007 = vadd.f32 %v2824, %v3003
  %v3008 = vld [vmem:[%s1 + $0x38] sm:$0x1]
  %v3009 = vld [vmem:[%s1 + $0x39] sm:$0x1]
  %v3010 = vsel %vm245, %v3006, 0.0
  %3011 = vadd.xlane.f32.xlu0 %v3010
  %v3012 = vpop.xlane.xlu0 %3011
  %v3013 = vsel %vm249, %v3007, 0.0
  %3014 = vadd.xlane.f32.xlu0 %v3013
  %v3015 = vpop.xlane.xlu0 %3014
  %v3016 = vmul.f32 %v3012, %v253
  %v3017 = vmul.f32 %v3015, %v253
  %v3018 = vsub.f32 %v3006, %v3016
  %v3019 = vsub.f32 %v3007, %v3017
  %v3020 = vmul.f32 %v3018, %v3018
  %v3021 = vmul.f32 %v3019, %v3019
  %v3022 = vsel %vm245, %v3020, 0.0
  %3023 = vadd.xlane.f32.xlu0 %v3022
  %v3024 = vpop.xlane.xlu0 %3023
  %v3025 = vsel %vm249, %v3021, 0.0
  %3026 = vadd.xlane.f32.xlu0 %v3025
  %v3027 = vpop.xlane.xlu0 %3026
  %v3028 = vmul.f32 %v3024, %v253
  %v3029 = vmul.f32 %v3027, %v253
  %v3030 = vadd.f32 %v3028, 1e-05
  %v3031 = vadd.f32 %v3029, 1e-05
  %v3032 = vrsqrt.pop %v3030
  %v3033 = vrsqrt.pop %v3031
  %v3034 = vmul.f32 %v3018, %v3032
  %v3035 = vmul.f32 %v3019, %v3033
  %v3036 = vlaneseq
  %v3037 = vshrl.u32 %v3036, 7
  %v3038 = vsub.s32 0, %v3037
  %v3039 = vrot.slane %v3008, %v3038
  %v3040 = vmul.f32 %v3034, %v3039
  %v3041 = vmul.f32 %v3035, %v3039
  %v3042 = vlaneseq
  %v3043 = vshrl.u32 %v3042, 7
  %v3044 = vsub.s32 0, %v3043
  %v3045 = vrot.slane %v3009, %v3044
  %v3046 = vadd.f32 %v3040, %v3045
  %v3047 = vadd.f32 %v3041, %v3045
  %v3048 = vpack.c.bf16 %v3047, %v3046
  %v3049 = vld [vmem:[%s6] sm:$0xf]
  %v3050 = vld [vmem:[%s6 + $0x4] sm:$0xf]
  %v3051 = vld [vmem:[%s6 + $0x8] sm:$0xf]
  %v3052 = vld [vmem:[%s6 + $0xc] sm:$0xf]
  %v3053 = vld [vmem:[%s1 + $0x3a] sm:$0x1]
  %v3054 = vlaneseq
  %v3055 = vshrl.u32 %v3054, 7
  %v3056 = vsub.s32 0, %v3055
  %v3057 = vrot.slane %v3053, %v3056
  %v3062 = vunpack.c.l.b16 %v3049
  %v3063 = vunpack.c.l.b16 %v3050
  %v3064 = vunpack.c.l.b16 %v3051
  %v3065 = vunpack.c.l.b16 %v3052
  %v3066 = vpack.c.b16 %v3063, %v3062
  %v3067 = vpack.c.b16 %v3065, %v3064
  %v3071 = vsel %vm245, %v3048, 0
  %3073 = vmatprep.subr.bf16.mxu0 0
  %3074 = vmatpush1.bf16.msra.mxu0 %v3066
  %3075 = vmatprep.subr.bf16.mxu0 0
  %3076 = vmatpush1.bf16.msra.mxu0 %v3067
  %3077 = vmatprep.subr.bf16.mxu0 0
  %3078 = vmatpush1.bf16.msra.mxu0 0
  %3079 = vmatprep.subr.bf16.mxu0 0
  %3080 = vmatpush1.bf16.msra.mxu0 0
  %3081 = vmatprep.subr.bf16.mxu0 0
  %3082 = vmatpush1.bf16.msra.mxu0 0
  %3083 = vmatprep.subr.bf16.mxu0 0
  %3084 = vmatpush1.bf16.msra.mxu0 0
  %3085 = vmatprep.subr.bf16.mxu0 0
  %3086 = vmatpush1.bf16.msra.mxu0 0
  %3087 = vmatprep.subr.bf16.mxu0 0
  %3088 = vmatpush1.bf16.msra.mxu0 0
  %3089 = vmatprep.subr.bf16.mxu0 0
  %3090 = vmatpush1.bf16.msra.mxu0 0
  %3091 = vmatprep.subr.bf16.mxu0 0
  %3092 = vmatpush1.bf16.msra.mxu0 0
  %3093 = vmatprep.subr.bf16.mxu0 0
  %3094 = vmatpush1.bf16.msra.mxu0 0
  %3095 = vmatprep.subr.bf16.mxu0 0
  %3096 = vmatpush1.bf16.msra.mxu0 0
  %3097 = vmatprep.subr.bf16.mxu0 0
  %3098 = vmatpush1.bf16.msra.mxu0 0
  %3099 = vmatprep.subr.bf16.mxu0 0
  %3100 = vmatpush1.bf16.msra.mxu0 0
  %3101 = vmatprep.subr.bf16.mxu0 0
  %3102 = vmatpush1.bf16.msra.mxu0 0
  %3103 = vmatprep.subr.bf16.mxu0 0
  %3104 = vmatpush1.bf16.msra.mxu0 0
  %3105 = vmatprep.mubr.bf16.mxu0 0
  %3106 = vmatmul.mubr.bf16.gmra.mrb[0].mxu0 %v3071
  %v3107 = vpop.f32.mrb[0].mxu0
  %v3108 = vadd.f32 %v3057, %v3107
  %v3109 = vpop.f32.mrb[0].mxu0
  %v3110 = vpop.f32.mrb[0].mxu0
  %v3111 = vadd.f32 %v3057, %v3110
  %v3112 = vpop.f32.mrb[0].mxu0
  %3113 = vdwg.mxu0
  %v3114 = vld [vmem:[%s1 + $0x3b] sm:$0x1]
  %v3115 = vld [vmem:[%s1 + $0x3c] sm:$0x1]
  %v3116 = vsel %vm245, %v3108, 0.0
  %3117 = vadd.xlane.f32.xlu0 %v3116
  %v3118 = vpop.xlane.xlu0 %3117
  %v3119 = vsel %vm249, %v3111, 0.0
  %3120 = vadd.xlane.f32.xlu0 %v3119
  %v3121 = vpop.xlane.xlu0 %3120
  %v3122 = vmul.f32 %v3118, %v253
  %v3123 = vmul.f32 %v3121, %v253
  %v3124 = vsub.f32 %v3108, %v3122
  %v3125 = vsub.f32 %v3111, %v3123
  %v3126 = vmul.f32 %v3124, %v3124
  %v3127 = vmul.f32 %v3125, %v3125
  %v3128 = vsel %vm245, %v3126, 0.0
  %3129 = vadd.xlane.f32.xlu0 %v3128
  %v3130 = vpop.xlane.xlu0 %3129
  %v3131 = vsel %vm249, %v3127, 0.0
  %3132 = vadd.xlane.f32.xlu0 %v3131
  %v3133 = vpop.xlane.xlu0 %3132
  %v3134 = vmul.f32 %v3130, %v253
  %v3135 = vmul.f32 %v3133, %v253
  %v3136 = vadd.f32 %v3134, 1e-05
  %v3137 = vadd.f32 %v3135, 1e-05
  %v3138 = vrsqrt.pop %v3136
  %v3139 = vrsqrt.pop %v3137
  %v3140 = vmul.f32 %v3124, %v3138
  %v3141 = vmul.f32 %v3125, %v3139
  %v3142 = vlaneseq
  %v3143 = vshrl.u32 %v3142, 7
  %v3144 = vsub.s32 0, %v3143
  %v3145 = vrot.slane %v3114, %v3144
  %v3146 = vmul.f32 %v3140, %v3145
  %v3147 = vmul.f32 %v3141, %v3145
  %v3148 = vlaneseq
  %v3149 = vshrl.u32 %v3148, 7
  %v3150 = vsub.s32 0, %v3149
  %v3151 = vrot.slane %v3115, %v3150
  %v3152 = vadd.f32 %v3146, %v3151
  %v3153 = vadd.f32 %v3147, %v3151
  %v3154 = vmax.f32 %v3152, 0.0
  %v3155 = vmax.f32 %v3153, 0.0
  %v3156 = vld [vmem:[%s1 + $0x43] sm:$0x1]
  %v3157 = vld [vmem:[%s1 + $0x3d] sm:$0x1]
  %v3158 = vlaneseq
  %v3159 = vshrl.u32 %v3158, 7
  %v3160 = vsub.s32 0, %v3159
  %v3161 = vrot.slane %v3157, %v3160
  %v3162 = vmul.f32 %v3154, %v3161
  %v3163 = vmul.f32 %v3155, %v3161
  %v3164 = vsel %vm245, %v3162, 0.0
  %3165 = vadd.xlane.f32.xlu0 %v3164
  %v3166 = vpop.xlane.xlu0 %3165
  %v3167 = vsel %vm249, %v3163, 0.0
  %3168 = vadd.xlane.f32.xlu0 %v3167
  %v3169 = vpop.xlane.xlu0 %3168
  %v3170 = vlaneseq
  %v3171 = vshrl.u32 %v3170, 7
  %v3172 = vsub.s32 0, %v3171
  %v3173 = vrot.slane %v3156, %v3172
  %v3174 = vadd.f32 %v3166, %v3173
  %v3175 = vadd.f32 %v3169, %v3173
  %v3176 = vlaneseq
  %v3177 = vshrl.u32 %v3176, 7
  %v3178 = vsub.s32 0, %v3177
  %v3179 = vrot.slane %v142, %v3178
  %vm3180 = vcmp.eq.s32.totalorder %v3179, 1
  %3182 = vrot.lane.b32.xlu0 %v3174, 2
  %v3183 = vpop.permute.xlu0 %3182
  %vm3186 = vcmask 1042432
  %v3187 = vrot.slane %v3174, 5
  %v3188 = vrot.slane %v3175, 5
  %v3189 = vsel %vm3186, %v3187, %v3188
  %3190 = vrot.lane.b32.xlu0 %v3189, 2
  %v3191 = vpop.permute.xlu0 %3190
  %v3193 = vsel %vm3180, %v3183, %v3191
  %vm3194 = vcmask 20496
  %v3195 = vsel %vm3194, %v3193, -inf
  %v3196 = vrot.slane %v3195, 4
  %v3197 = vmax.f32 %v3195, %v3196
  %v3198 = vrot.slane %v3197, 2
  %v3199 = vmax.f32 %v3197, %v3198
  %v3200 = vrot.slane %v3199, 1
  %v3201 = vmax.f32 %v3199, %v3200
  %v3202 = vsub.f32 %v3193, %v3201
  %v3203 = vmul.f32 %v3202, 1.442695
  %v3204 = vpow.pop %v3203
  %v3205 = vsel %vm3194, %v3204, 0.0
  %v3206 = vrot.slane %v3205, 4
  %v3207 = vadd.f32 %v3205, %v3206
  %v3208 = vrot.slane %v3207, 2
  %v3209 = vadd.f32 %v3207, %v3208
  %v3210 = vrot.slane %v3209, 1
  %v3211 = vadd.f32 %v3209, %v3210
  %v3212 = vrcp.pop %v3211
  %v3213 = vmul.f32 %v3204, %v3212
  %v3214 = vld [vmem:[%s1 + $0x3e] sm:$0x1]
  %v3215 = vlaneseq
  %v3216 = vshrl.u32 %v3215, 7
  %v3217 = vsub.s32 0, %v3216
  %v3218 = vrot.slane %v3214, %v3217
  %v3219 = vmul.f32 %v3046, %v3218
  %v3220 = vmul.f32 %v3047, %v3218
  %v3221 = vsel %vm245, %v3219, 0.0
  %3222 = vadd.xlane.f32.xlu0 %v3221
  %v3223 = vpop.xlane.xlu0 %3222
  %v3224 = vsel %vm249, %v3220, 0.0
  %3225 = vadd.xlane.f32.xlu0 %v3224
  %v3226 = vpop.xlane.xlu0 %3225
  %v3227 = vadd.f32 %v3223, %v3173
  %v3228 = vadd.f32 %v3226, %v3173
  %vm3229 = vcmask 15368
  %v3230 = vsel %vm3229, %v3227, -inf
  %vm3231 = vcmask 9224
  %v3232 = vsel %vm3231, %v3228, -inf
  %v3233 = vmax.f32 %v3230, %v3232
  %v3234 = vrot.slane %v3233, 4
  %v3235 = vmax.f32 %v3233, %v3234
  %v3236 = vrot.slane %v3235, 2
  %v3237 = vmax.f32 %v3235, %v3236
  %v3238 = vrot.slane %v3237, 1
  %v3239 = vmax.f32 %v3237, %v3238
  %v3240 = vsub.f32 %v3227, %v3239
  %v3241 = vsub.f32 %v3228, %v3239
  %v3242 = vmul.f32 %v3240, 1.442695
  %v3243 = vpow.pop %v3242
  %v3244 = vmul.f32 %v3241, 1.442695
  %v3245 = vpow.pop %v3244
  %v3246 = vsel %vm3229, %v3243, 0.0
  %v3247 = vsel %vm3231, %v3245, 0.0
  %v3248 = vadd.f32 %v3246, %v3247
  %v3249 = vrot.slane %v3248, 4
  %v3250 = vadd.f32 %v3248, %v3249
  %v3251 = vrot.slane %v3250, 2
  %v3252 = vadd.f32 %v3250, %v3251
  %v3253 = vrot.slane %v3252, 1
  %v3254 = vadd.f32 %v3252, %v3253
  %v3255 = vrcp.pop %v3254
  %v3256 = vmul.f32 %v3243, %v3255
  %v3257 = vmul.f32 %v3245, %v3255
  %3259 = vset.pattern.permute.xlu0 1
  %3260 = vperm.xlu0 %3259, %v3256
  %v3261 = vpop.permute.xlu0 %3260
  %3264 = vset.pattern.permute.xlu0 1
  %3265 = vperm.xlu0 %3264, %v3257
  %v3266 = vpop.permute.xlu0 %3265
  %v3268 = vmul.f32 %v3046, %v3261
  %v3269 = vmul.f32 %v3047, %v3266
  %v3270 = vsel %vm245, %v3268, 0.0
  %v3271 = vsel %vm249, %v3269, 0.0
  %v3272 = vadd.f32 %v3270, %v3271
  %v3273 = vrot.slane %v3272, 4
  %v3274 = vadd.f32 %v3272, %v3273
  %v3275 = vrot.slane %v3274, 2
  %v3276 = vadd.f32 %v3274, %v3275
  %v3277 = vrot.slane %v3276, 1
  %v3278 = vadd.f32 %v3276, %v3277
  %v3279 = vpack.c.bf16 %v3278, %v3278
  %s3280 = scalar_lea.vmem %s6, 16
  %v3281 = vld [vmem:[%s3280] sm:$0xf]
  %v3282 = vld [vmem:[%s3280 + $0x4] sm:$0xf]
  %v3283 = vld [vmem:[%s3280 + $0x8] sm:$0xf]
  %v3284 = vld [vmem:[%s3280 + $0xc] sm:$0xf]
  %v3285 = vld [vmem:[%s1 + $0x3f] sm:$0x1]
  %v3290 = vunpack.c.l.b16 %v3281
  %v3291 = vunpack.c.l.b16 %v3282
  %v3292 = vunpack.c.l.b16 %v3283
  %v3293 = vunpack.c.l.b16 %v3284
  %v3294 = vpack.c.b16 %v3291, %v3290
  %v3295 = vpack.c.b16 %v3293, %v3292
  %v3299 = vsel %vm245, %v3279, 0
  %3301 = vmatprep.subr.bf16.mxu0 0
  %3302 = vmatpush1.bf16.msra.mxu0 %v3294
  %3303 = vmatprep.subr.bf16.mxu0 0
  %3304 = vmatpush1.bf16.msra.mxu0 %v3295
  %3305 = vmatprep.subr.bf16.mxu0 0
  %3306 = vmatpush1.bf16.msra.mxu0 0
  %3307 = vmatprep.subr.bf16.mxu0 0
  %3308 = vmatpush1.bf16.msra.mxu0 0
  %3309 = vmatprep.subr.bf16.mxu0 0
  %3310 = vmatpush1.bf16.msra.mxu0 0
  %3311 = vmatprep.subr.bf16.mxu0 0
  %3312 = vmatpush1.bf16.msra.mxu0 0
  %3313 = vmatprep.subr.bf16.mxu0 0
  %3314 = vmatpush1.bf16.msra.mxu0 0
  %3315 = vmatprep.subr.bf16.mxu0 0
  %3316 = vmatpush1.bf16.msra.mxu0 0
  %3317 = vmatprep.subr.bf16.mxu0 0
  %3318 = vmatpush1.bf16.msra.mxu0 0
  %3319 = vmatprep.subr.bf16.mxu0 0
  %3320 = vmatpush1.bf16.msra.mxu0 0
  %3321 = vmatprep.subr.bf16.mxu0 0
  %3322 = vmatpush1.bf16.msra.mxu0 0
  %3323 = vmatprep.subr.bf16.mxu0 0
  %3324 = vmatpush1.bf16.msra.mxu0 0
  %3325 = vmatprep.subr.bf16.mxu0 0
  %3326 = vmatpush1.bf16.msra.mxu0 0
  %3327 = vmatprep.subr.bf16.mxu0 0
  %3328 = vmatpush1.bf16.msra.mxu0 0
  %3329 = vmatprep.subr.bf16.mxu0 0
  %3330 = vmatpush1.bf16.msra.mxu0 0
  %3331 = vmatprep.subr.bf16.mxu0 0
  %3332 = vmatpush1.bf16.msra.mxu0 0
  %3333 = vmatprep.mubr.bf16.mxu0 0
  %3334 = vmatmul.mubr.bf16.gmra.mrb[0].mxu0 %v3299
  %v3335 = vpop.f32.mrb[0].mxu0
  %v3336 = vadd.f32 %v3285, %v3335
  %v3337 = vpop.f32.mrb[0].mxu0
  %v3338 = vpop.f32.mrb[0].mxu0
  %v3339 = vpop.f32.mrb[0].mxu0
  %3340 = vdwg.mxu0
  %v3341 = vld [vmem:[%s1 + $0x40] sm:$0x1]
  %v3342 = vld [vmem:[%s1 + $0x41] sm:$0x1]
  %vm3343 = vcmask 253952
  %v3344 = vsel %vm3343, %v3336, 0.0
  %3345 = vadd.xlane.f32.xlu0 %v3344
  %v3346 = vpop.xlane.xlu0 %3345
  %v3347 = vmul.f32 %v3346, %v253
  %v3348 = vsub.f32 %v3336, %v3347
  %v3349 = vmul.f32 %v3348, %v3348
  %v3350 = vsel %vm3343, %v3349, 0.0
  %3351 = vadd.xlane.f32.xlu0 %v3350
  %v3352 = vpop.xlane.xlu0 %3351
  %v3353 = vmul.f32 %v3352, %v253
  %v3354 = vadd.f32 %v3353, 1e-05
  %v3355 = vrsqrt.pop %v3354
  %v3356 = vmul.f32 %v3348, %v3355
  %v3357 = vmul.f32 %v3356, %v3341
  %v3358 = vadd.f32 %v3357, %v3342
  %v3359 = vmax.f32 %v3358, 0.0
  %v3360 = vld [vmem:[%s1 + $0x42] sm:$0x1]
  %v3361 = vmul.f32 %v3359, %v3360
  %v3362 = vsel %vm3343, %v3361, 0.0
  %3363 = vadd.xlane.f32.xlu0 %v3362
  %v3364 = vpop.xlane.xlu0 %3363
  %v3365 = vadd.f32 %v3364, %v3156
  %v3366 = vtanh.pop %v3365
  %3367 = vst [vmem:[%s7] sm:$0xff] 0.0
  %3369 = vrot.lane.b32.xlu0 %v3213, 126
  %v3370 = vpop.permute.xlu0 %3369
  %vm3372 = vcmask 4096
  %3373 = vst.msk [vmem:[%s7] sm:$0x1f] %vm3372, %v3370
  %3375 = vrot.lane.b32.xlu0 %v3366, 126
  %v3376 = vpop.permute.xlu0 %3375
  %vm3378 = vcmask 0
  %3379 = vst.msk [vmem:[%s7 + $0x5] sm:$0x1] %vm3378, %v3376
  // Predicated region
  $region30: #{_forward_impl.1} parent=0 // pred_check
    _
  $region31: #{_forward_impl.1} parent=0 // pred_check_branch
    %3381 = sbr.rel (0) target = $region33
  $region32: #{_forward_impl.1} parent=0 // pred_region
    _
  $region33: #{_forward_impl.1} parent=0 // pred_fallthru
    _
  // Predicated region
  $region34: #{_forward_impl.1} parent=0 // pred_check
    _
  $region35: #{_forward_impl.1} parent=0 // pred_check_branch
    %3383 = sbr.rel (0) target = $region37
  $region36: #{_forward_impl.1} parent=0 // pred_region
    _
  $region37: #{_forward_impl.1} parent=0 // pred_fallthru
    _

</llo_original>
